<compile_context>
chip_gen: v5e
topology: v5e:2x2
jax: 0.10.0
libtpu: 0.0.40
codegen_flags: <defaults>
</compile_context>

<pallas_src>
import functools

import jax
import jax.numpy as jnp
from jax.experimental import pallas as pl
from jax.experimental.pallas import tpu as pltpu


# ----------------------------------------------------------------------------
# Config (small, consistent with GemmaForCausalLM shape relations)
# ----------------------------------------------------------------------------
CFG = dict(
    vocab_size=256,
    hidden_size=64,
    intermediate_size=128,
    num_attention_heads=4,
    num_key_value_heads=2,
    head_dim=16,                      # num_heads * head_dim == hidden_size
    num_hidden_layers=2,
    attention_type=("global", "local"),
    sliding_window_size=4,
    attn_logit_softcapping=50.0,
    final_logit_softcapping=30.0,
    rope_theta=10000.0,
    rms_norm_eps=1e-6,
    max_position_embeddings=32,
)

NEG_INF = -2.3819763e38


# ----------------------------------------------------------------------------
# Fused transformer-body kernel (all layers, single grid step, VMEM resident)
# ----------------------------------------------------------------------------
def fused_body_kernel(*refs, n_layers, attn_types, H, KVH, Dh, S, eps,
                      scaling, softcap, window):
    # refs layout: h, cos, sin, [ln, wqkvr, wo, wgu, wd] * n_layers, final_ln,
    #              out, attn_scratch
    nlw = 5
    h_ref, cos_ref, sin_ref = refs[0], refs[1], refs[2]
    layer_refs = refs[3:3 + nlw * n_layers]
    final_ln_ref = refs[3 + nlw * n_layers]
    o_ref = refs[4 + nlw * n_layers]
    attn_buf = refs[5 + nlw * n_layers]

    M = h_ref.shape[0]                 # B * S rows, processed together
    Nq = H * Dh
    Nk = KVH * Dh
    QKV_N = Nq + 2 * Nk
    qpg = H // KVH                     # queries per KV group
    neg_inf = jnp.float32(NEG_INF)
    zero = jnp.float32(0.0)

    def rmsnorm(x, w):                 # x: [M, D] f32, w: [1, D] f32, unit offset
        var = jnp.mean(x * x, axis=-1, keepdims=True)
        return x * jax.lax.rsqrt(var + eps) * (1.0 + w)

    # ---- in-kernel additive masks (causal + same-batch block [+ sliding]) ----
    # float-only math (mul/floor/compare) -> pure VPU, no vector int div/rem.
    row = jax.lax.broadcasted_iota(jnp.int32, (M, M), 0).astype(jnp.float32)
    col = jax.lax.broadcasted_iota(jnp.int32, (M, M), 1).astype(jnp.float32)
    br = jnp.floor(row * (1.0 / S))
    bc = jnp.floor(col * (1.0 / S))
    pr = row - br * S                  # within-sequence position of the query row
    pc = col - bc * S                  # within-sequence position of the key col
    ok_causal = (br == bc) & (pc <= pr)
    ok_local = ok_causal & ((pr - pc) <= (window - 1))
    mask_global = jnp.where(ok_causal, zero, neg_inf)
    mask_local = jnp.where(ok_local, zero, neg_inf)

    cos = cos_ref[...]                 # [M, QKV_N] f32 (v region: cos=1)
    sin = sin_ref[...]                 # [M, QKV_N] f32 (v region: sin=0)
    h = h_ref[...]                     # residual stream [M, D] f32

    for l in range(n_layers):          # static unroll over layers
        ln_ref, wqkvr_ref, wo_ref, wgu_ref, wd_ref = (
            layer_refs[nlw * l:nlw * (l + 1)])
        mask = mask_local if attn_types[l] == "local" else mask_global

        # ---------------- attention block ----------------
        x = rmsnorm(h, ln_ref[0:1, :]).astype(jnp.bfloat16)
        # one bf16 MXU matmul against [Wqkv | rotate_half(Wqkv)]  -> [M, 2*QKV_N]
        qkv2 = jnp.dot(x, wqkvr_ref[...], preferred_element_type=jnp.float32)
        # RoPE: x*cos + rotate_half(x)*sin; rotation was pre-folded into the
        # weights (lossless sign/permute in bf16); v region passes through.
        qkv = qkv2[:, :QKV_N] * cos + qkv2[:, QKV_N:] * sin

        for hh in range(H):            # static unroll; GQA head mapping in-kernel
            g = hh // qpg
            qh = qkv[:, hh * Dh:(hh + 1) * Dh].astype(jnp.bfloat16)
            kh = qkv[:, Nq + g * Dh:Nq + (g + 1) * Dh].astype(jnp.bfloat16)
            vh = qkv[:, Nq + Nk + g * Dh:
                        Nq + Nk + (g + 1) * Dh].astype(jnp.bfloat16)
            s = jax.lax.dot_general(qh, kh, (((1,), (1,)), ((), ())),
                                    preferred_element_type=jnp.float32) * scaling
            if softcap is not None:
                s = jnp.tanh(s / softcap) * softcap
            s = s + mask
            s = s - jnp.max(s, axis=-1, keepdims=True)
            p = jnp.exp(s)
            p = p / jnp.sum(p, axis=-1, keepdims=True)   # exact division
            # write head output straight into the [M, H*Dh] scratch (no concat)
            attn_buf[:, hh * Dh:(hh + 1) * Dh] = jnp.dot(
                p.astype(jnp.bfloat16), vh, preferred_element_type=jnp.float32)

        o = jnp.dot(attn_buf[...].astype(jnp.bfloat16), wo_ref[...],
                    preferred_element_type=jnp.float32)
        h = h + rmsnorm(o, ln_ref[1:2, :])

        # ---------------- MLP block ----------------
        x = rmsnorm(h, ln_ref[2:3, :]).astype(jnp.bfloat16)
        gu = jnp.dot(x, wgu_ref[...], preferred_element_type=jnp.float32)  # [M,2I]
        ff = gu.shape[1] // 2
        act = jax.nn.gelu(gu[:, :ff], approximate=True) * gu[:, ff:]
        y = jnp.dot(act.astype(jnp.bfloat16), wd_ref[...],
                    preferred_element_type=jnp.float32)
        h = h + rmsnorm(y, ln_ref[3:4, :])

    # final model.norm once; bf16 output feeds the lm-head kernel's MXU directly
    o_ref[...] = rmsnorm(h, final_ln_ref[...]).astype(jnp.bfloat16)


def fused_transformer_body(h, cos, sin, layer_params, final_ln, S, cfg):
    M, D = h.shape
    H = cfg["num_attention_heads"]
    KVH = cfg["num_key_value_heads"]
    Dh = cfg["head_dim"]
    flat = []
    for lp in layer_params:
        flat += [lp["ln"], lp["wqkvr"], lp["wo"], lp["wgu"], lp["wd"]]
    kernel = functools.partial(
        fused_body_kernel,
        n_layers=len(layer_params),
        attn_types=tuple(cfg["attention_type"][:len(layer_params)]),
        H=H, KVH=KVH, Dh=Dh, S=S,
        eps=cfg["rms_norm_eps"],
        scaling=Dh ** (-0.5),
        softcap=cfg["attn_logit_softcapping"],
        window=cfg["sliding_window_size"])
    return pl.pallas_call(
        kernel,
        out_shape=jax.ShapeDtypeStruct((M, D), jnp.bfloat16),
        scratch_shapes=[pltpu.VMEM((M, H * Dh), jnp.float32)],
    )(h, cos, sin, *flat, final_ln)


# ----------------------------------------------------------------------------
# LM-head kernel: tied-embedding logits + softcap, vocab-tiled (parallel grid)
# ----------------------------------------------------------------------------
def lm_head(xn_bf16, embed_bf16, cfg):
    M, D = xn_bf16.shape
    V = embed_bf16.shape[0]
    Vt = min(128, V)
    cap = cfg["final_logit_softcapping"]

    def kernel(x_ref, e_ref, o_ref):
        # contract D with embed's D (embed kept [V, D]; no transpose materialized)
        logits = jax.lax.dot_general(x_ref[...], e_ref[...],
                                     (((1,), (1,)), ((), ())),
                                     preferred_element_type=jnp.float32)
        if cap is not None:
            logits = jnp.tanh(logits / cap) * cap
        o_ref[...] = logits

    return pl.pallas_call(
        kernel,
        out_shape=jax.ShapeDtypeStruct((M, V), jnp.float32),
        grid=(V // Vt,),
        in_specs=[pl.BlockSpec((M, D), lambda j: (0, 0)),
                  pl.BlockSpec((Vt, D), lambda j: (j, 0))],
        out_specs=pl.BlockSpec((M, Vt), lambda j: (0, j)),
        compiler_params=pltpu.CompilerParams(dimension_semantics=("parallel",)),
    )(xn_bf16, embed_bf16)


# ----------------------------------------------------------------------------
# Glue (plain JAX): RoPE tables, pre-rotated weights, embedding, parameter init
# ----------------------------------------------------------------------------
def rope_tables(B, S, Dh, H, KVH, theta):
    """cos/sin laid out as [B*S, (H+2*KVH)*Dh]; v region gets cos=1, sin=0."""
    inv = 1.0 / (theta ** (jnp.arange(0, Dh, 2, dtype=jnp.float32) / Dh))
    freqs = jnp.outer(jnp.arange(S, dtype=jnp.float32), inv)        # [S, Dh/2]
    cos_h = jnp.concatenate([jnp.cos(freqs)] * 2, axis=-1)          # [S, Dh]
    sin_h = jnp.concatenate([jnp.sin(freqs)] * 2, axis=-1)
    Nk = KVH * Dh
    cos_all = jnp.concatenate([jnp.tile(cos_h, (1, H)), jnp.tile(cos_h, (1, KVH)),
                               jnp.ones((S, Nk), jnp.float32)], axis=-1)
    sin_all = jnp.concatenate([jnp.tile(sin_h, (1, H)), jnp.tile(sin_h, (1, KVH)),
                               jnp.zeros((S, Nk), jnp.float32)], axis=-1)
    # tile over batch; row ordering (b*S + s) matches h.reshape(B*S, D)
    return jnp.tile(cos_all, (B, 1)), jnp.tile(sin_all, (B, 1))


def _rotate_half_cols(w, Dh):
    """Pre-rotate weight columns so x @ out == rotate_half(x @ w) per head."""
    Din, N = w.shape
    d2 = Dh // 2
    w3 = w.reshape(Din, N // Dh, Dh)
    return jnp.concatenate([-w3[:, :, d2:], w3[:, :, :d2]], axis=-1).reshape(Din, N)


def init_params(key, cfg):
    D = cfg["hidden_size"]
    I = cfg["intermediate_size"]
    H = cfg["num_attention_heads"]
    KVH = cfg["num_key_value_heads"]
    Dh = cfg["head_dim"]
    V = cfg["vocab_size"]
    n_layers = cfg["num_hidden_layers"]

    def nrm(k, shape):
        return 0.02 * jax.random.normal(k, shape, dtype=jnp.float32)

    keys = jax.random.split(key, 1 + 7 * n_layers)
    embed = nrm(keys[0], (V, D))
    params = dict(
        embed=embed,                               # f32, token gather
        embed_lm=embed.astype(jnp.bfloat16),       # tied weights, bf16 for MXU
        final_ln=jnp.zeros((1, D), jnp.float32),
        layers=[],
    )
    ki = 1
    for _ in range(n_layers):
        wq = nrm(keys[ki + 0], (D, H * Dh))
        wk = nrm(keys[ki + 1], (D, KVH * Dh))
        wv = nrm(keys[ki + 2], (D, KVH * Dh))
        wqkv = jnp.concatenate([wq, wk, wv], axis=1)
        wqkv_rot = jnp.concatenate(
            [_rotate_half_cols(wq, Dh), _rotate_half_cols(wk, Dh),
             jnp.zeros((D, KVH * Dh), jnp.float32)], axis=1)
        lp = dict(
            # fused [Wqkv | rotate_half(Wqkv)]  -> [D, 2*QKV_N] bf16
            wqkvr=jnp.concatenate([wqkv, wqkv_rot], axis=1).astype(jnp.bfloat16),
            wo=nrm(keys[ki + 3], (H * Dh, D)).astype(jnp.bfloat16),
            # fused gate|up  -> [D, 2*I] bf16 (fills the 256-wide MXU)
            wgu=jnp.concatenate([nrm(keys[ki + 4], (D, I)),
                                 nrm(keys[ki + 5], (D, I))],
                                axis=1).astype(jnp.bfloat16),
            wd=nrm(keys[ki + 6], (I, D)).astype(jnp.bfloat16),
            # rows: input_ln, post_attn_ln, pre_ff_ln, post_ff_ln (zeros init)
            ln=jnp.zeros((4, D), jnp.float32),
        )
        params["layers"].append(lp)
        ki += 7
    return params


# ----------------------------------------------------------------------------
# Full forward pass (GemmaForCausalLM.forward with defaults -> logits)
# ----------------------------------------------------------------------------
def gemma_forward(params, input_ids, cfg):
    B, S = input_ids.shape
    D = cfg["hidden_size"]
    H = cfg["num_attention_heads"]
    KVH = cfg["num_key_value_heads"]
    Dh = cfg["head_dim"]
    V = cfg["vocab_size"]
    M = B * S

    cos, sin = rope_tables(B, S, Dh, H, KVH, cfg["rope_theta"])
    # embedding gather + sqrt(hidden) normalizer (plain JAX glue)
    h = (params["embed"][input_ids]
         * jnp.asarray(D ** 0.5, jnp.float32)).reshape(M, D)

    xn = fused_transformer_body(h, cos, sin, params["layers"],
                                params["final_ln"], S, cfg)      # [M, D] bf16
    logits = lm_head(xn, params["embed_lm"], cfg)                # [M, V] f32
    return logits.reshape(B, S, V)


# ----------------------------------------------------------------------------
if __name__ == "__main__":
    key = jax.random.PRNGKey(0)
    k_param, k_ids = jax.random.split(key)

    params = init_params(k_param, CFG)
    B, S = 2, 8
    input_ids = jax.random.randint(k_ids, (B, S), 0, CFG["vocab_size"],
                                   dtype=jnp.int32)

    fwd = jax.jit(lambda p, ids: gemma_forward(p, ids, CFG))
    logits = jax.block_until_ready(fwd(params, input_ids))

    assert logits.shape == (B, S, CFG["vocab_size"])
    assert bool(jnp.all(jnp.isfinite(logits)))
    # TODO(synk): loss path (linear_cross_entropy), sampling/generate loop,
    # train_attn HedgehogFeatureMap branch and gradient checkpointing are
    # training/inference utilities outside the forward hot path; not kernelized.
    print("KERNEL_OK")
</pallas_src>

<mosaic_0001>
module attributes {stable_mosaic.version = 11 : i64} {
  func.func @kernel(%arg0: i32, %arg1: memref<16x64xbf16, #tpu.memory_space<vmem>>, %arg2: memref<128x64xbf16, #tpu.memory_space<vmem>>, %arg3: memref<16x128xf32, #tpu.memory_space<vmem>>) attributes {dimension_semantics = [#tpu.dimension_semantics<parallel>], iteration_bounds = array<i64: 2>, scalar_prefetch = 0 : i64, scratch_operands = 0 : i64, tpu.core_type = #tpu.core_type<tc>, window_params = [{pipeline_mode = #tpu.pipeline_mode<synchronous>, transform_indices = @transform_0, window_bounds = array<i64: 16, 64>}, {transform_indices = @transform_1, window_bounds = array<i64: 128, 64>}, {transform_indices = @transform_2, window_bounds = array<i64: 16, 128>}]} {
    %c0 = arith.constant 0 : index
    %c0_0 = arith.constant 0 : index
    %0 = vector.load %arg1[%c0, %c0_0] : memref<16x64xbf16, #tpu.memory_space<vmem>>, vector<16x64xbf16>
    %c0_1 = arith.constant 0 : index
    %c0_2 = arith.constant 0 : index
    %1 = vector.load %arg2[%c0_1, %c0_2] : memref<128x64xbf16, #tpu.memory_space<vmem>>, vector<128x64xbf16>
    %cst = arith.constant dense<0.000000e+00> : vector<16x128xf32>
    %2 = tpu.matmul %0, %1, %cst {dimension_numbers = #tpu.dot_dimension_numbers<[1], [1], [0], [0], [0, 0, 1, 0], [], []>} : vector<16x64xbf16>, vector<128x64xbf16>, vector<16x128xf32> -> vector<16x128xf32>
    %cst_3 = arith.constant 3.000000e+01 : f32
    %3 = vector.broadcast %cst_3 : f32 to vector<16x128xf32>
    %4 = arith.divf %2, %3 : vector<16x128xf32>
    %5 = math.tanh %4 : vector<16x128xf32>
    %cst_4 = arith.constant 3.000000e+01 : f32
    %6 = vector.broadcast %cst_4 : f32 to vector<16x128xf32>
    %7 = arith.mulf %5, %6 : vector<16x128xf32>
    %c0_5 = arith.constant 0 : index
    %c0_6 = arith.constant 0 : index
    %8 = vector.load %arg3[%c0_5, %c0_6] : memref<16x128xf32, #tpu.memory_space<vmem>>, vector<16x128xf32>
    tpu.vector_store %arg3[%c0_5, %c0_6], %7 {strides = array<i32>} : memref<16x128xf32, #tpu.memory_space<vmem>>, vector<16x128xf32>,
    return
  }
  func.func @transform_0(%arg0: i32) -> (i32, i32) {
    %c0_i32 = arith.constant 0 : i32
    %c0_i32_0 = arith.constant 0 : i32
    %c0_i32_1 = arith.constant 0 : i32
    return %c0_i32, %c0_i32_0 : i32, i32
  }
  func.func @transform_1(%arg0: i32) -> (i32, i32) {
    %c0_i32 = arith.constant 0 : i32
    %c0_i32_0 = arith.constant 0 : i32
    return %arg0, %c0_i32 : i32, i32
  }
  func.func @transform_2(%arg0: i32) -> (i32, i32) {
    %c0_i32 = arith.constant 0 : i32
    %c0_i32_0 = arith.constant 0 : i32
    return %c0_i32, %arg0 : i32, i32
  }
}

module attributes {stable_mosaic.version = 11 : i64} {
  func.func @fused_body_kernel(%arg0: memref<16x64xf32, #tpu.memory_space<vmem>>, %arg1: memref<16x128xf32, #tpu.memory_space<vmem>>, %arg2: memref<16x128xf32, #tpu.memory_space<vmem>>, %arg3: memref<4x64xf32, #tpu.memory_space<vmem>>, %arg4: memref<64x256xbf16, #tpu.memory_space<vmem>>, %arg5: memref<64x64xbf16, #tpu.memory_space<vmem>>, %arg6: memref<64x256xbf16, #tpu.memory_space<vmem>>, %arg7: memref<128x64xbf16, #tpu.memory_space<vmem>>, %arg8: memref<4x64xf32, #tpu.memory_space<vmem>>, %arg9: memref<64x256xbf16, #tpu.memory_space<vmem>>, %arg10: memref<64x64xbf16, #tpu.memory_space<vmem>>, %arg11: memref<64x256xbf16, #tpu.memory_space<vmem>>, %arg12: memref<128x64xbf16, #tpu.memory_space<vmem>>, %arg13: memref<1x64xf32, #tpu.memory_space<vmem>>, %arg14: memref<16x64xbf16, #tpu.memory_space<vmem>>, %arg15: memref<16x64xf32, #tpu.memory_space<vmem>>) attributes {dimension_semantics = [], scalar_prefetch = 0 : i64, scratch_operands = 1 : i64, tpu.core_type = #tpu.core_type<tc>} {
    %0 = tpu.iota {dimensions = array<i32: 0>} : vector<16x16xi32>
    %1 = arith.sitofp %0 : vector<16x16xi32> to vector<16x16xf32>
    %2 = tpu.iota {dimensions = array<i32: 1>} : vector<16x16xi32>
    %3 = arith.sitofp %2 : vector<16x16xi32> to vector<16x16xf32>
    %cst = arith.constant 1.250000e-01 : f32
    %4 = vector.broadcast %cst : f32 to vector<16x16xf32>
    %5 = arith.mulf %1, %4 : vector<16x16xf32>
    %6 = math.floor %5 : vector<16x16xf32>
    %cst_0 = arith.constant 1.250000e-01 : f32
    %7 = vector.broadcast %cst_0 : f32 to vector<16x16xf32>
    %8 = arith.mulf %3, %7 : vector<16x16xf32>
    %9 = math.floor %8 : vector<16x16xf32>
    %cst_1 = arith.constant 8.000000e+00 : f32
    %10 = vector.broadcast %cst_1 : f32 to vector<16x16xf32>
    %11 = arith.mulf %6, %10 : vector<16x16xf32>
    %12 = arith.subf %1, %11 : vector<16x16xf32>
    %cst_2 = arith.constant 8.000000e+00 : f32
    %13 = vector.broadcast %cst_2 : f32 to vector<16x16xf32>
    %14 = arith.mulf %9, %13 : vector<16x16xf32>
    %15 = arith.subf %3, %14 : vector<16x16xf32>
    %16 = arith.cmpf oeq, %6, %9 : vector<16x16xf32>
    %17 = arith.cmpf ole, %15, %12 : vector<16x16xf32>
    %18 = arith.andi %16, %17 : vector<16x16xi1>
    %19 = arith.subf %12, %15 : vector<16x16xf32>
    %cst_3 = arith.constant 3.000000e+00 : f32
    %20 = vector.broadcast %cst_3 : f32 to vector<16x16xf32>
    %21 = arith.cmpf ole, %19, %20 : vector<16x16xf32>
    %22 = arith.andi %18, %21 : vector<16x16xi1>
    %cst_4 = arith.constant 0.000000e+00 : f32
    %cst_5 = arith.constant -2.38197633E+38 : f32
    %23 = vector.broadcast %cst_4 : f32 to vector<16x16xf32>
    %24 = vector.broadcast %cst_5 : f32 to vector<16x16xf32>
    %25 = arith.select %18, %23, %24 : vector<16x16xi1>, vector<16x16xf32>
    %cst_6 = arith.constant 0.000000e+00 : f32
    %cst_7 = arith.constant -2.38197633E+38 : f32
    %26 = vector.broadcast %cst_6 : f32 to vector<16x16xf32>
    %27 = vector.broadcast %cst_7 : f32 to vector<16x16xf32>
    %28 = arith.select %22, %26, %27 : vector<16x16xi1>, vector<16x16xf32>
    %c0 = arith.constant 0 : index
    %c0_8 = arith.constant 0 : index
    %29 = vector.load %arg1[%c0, %c0_8] : memref<16x128xf32, #tpu.memory_space<vmem>>, vector<16x128xf32>
    %c0_9 = arith.constant 0 : index
    %c0_10 = arith.constant 0 : index
    %30 = vector.load %arg2[%c0_9, %c0_10] : memref<16x128xf32, #tpu.memory_space<vmem>>, vector<16x128xf32>
    %c0_11 = arith.constant 0 : index
    %c0_12 = arith.constant 0 : index
    %31 = vector.load %arg0[%c0_11, %c0_12] : memref<16x64xf32, #tpu.memory_space<vmem>>, vector<16x64xf32>
    %c0_13 = arith.constant 0 : index
    %c0_14 = arith.constant 0 : index
    %32 = vector.load %arg3[%c0_13, %c0_14] : memref<4x64xf32, #tpu.memory_space<vmem>>, vector<1x64xf32>
    %33 = arith.mulf %31, %31 : vector<16x64xf32>
    %cst_15 = arith.constant dense<0.000000e+00> : vector<16xf32>
    %34 = vector.multi_reduction <add>, %33, %cst_15 [1] : vector<16x64xf32> to vector<16xf32>
    %35 = vector.shape_cast %34 : vector<16xf32> to vector<16x1xf32>
    %cst_16 = arith.constant 6.400000e+01 : f32
    %36 = vector.broadcast %cst_16 : f32 to vector<16x1xf32>
    %37 = arith.divf %35, %36 : vector<16x1xf32>
    %cst_17 = arith.constant 9.99999997E-7 : f32
    %38 = vector.broadcast %cst_17 : f32 to vector<16x1xf32>
    %39 = arith.addf %37, %38 : vector<16x1xf32>
    %40 = math.rsqrt %39 : vector<16x1xf32>
    %41 = vector.broadcast %40 : vector<16x1xf32> to vector<16x64xf32>
    %42 = arith.mulf %31, %41 : vector<16x64xf32>
    %cst_18 = arith.constant 1.000000e+00 : f32
    %43 = vector.broadcast %cst_18 : f32 to vector<1x64xf32>
    %44 = arith.addf %43, %32 : vector<1x64xf32>
    %45 = vector.broadcast %44 : vector<1x64xf32> to vector<16x64xf32>
    %46 = arith.mulf %42, %45 : vector<16x64xf32>
    %47 = arith.truncf %46 : vector<16x64xf32> to vector<16x64xbf16>
    %c0_19 = arith.constant 0 : index
    %c0_20 = arith.constant 0 : index
    %48 = vector.load %arg4[%c0_19, %c0_20] : memref<64x256xbf16, #tpu.memory_space<vmem>>, vector<64x256xbf16>
    %cst_21 = arith.constant dense<0.000000e+00> : vector<16x256xf32>
    %49 = tpu.matmul %47, %48, %cst_21 {dimension_numbers = #tpu.dot_dimension_numbers<[1], [0], [0], [1], [0, 0, 1, 1], [], []>} : vector<16x64xbf16>, vector<64x256xbf16>, vector<16x256xf32> -> vector<16x256xf32>
    %50 = vector.extract_strided_slice %49 {offsets = [0, 0], sizes = [16, 128], strides = [1, 1]} : vector<16x256xf32> to vector<16x128xf32>
    %51 = arith.mulf %50, %29 : vector<16x128xf32>
    %52 = vector.extract_strided_slice %49 {offsets = [0, 128], sizes = [16, 128], strides = [1, 1]} : vector<16x256xf32> to vector<16x128xf32>
    %53 = arith.mulf %52, %30 : vector<16x128xf32>
    %54 = arith.addf %51, %53 : vector<16x128xf32>
    %55 = vector.extract_strided_slice %54 {offsets = [0, 0], sizes = [16, 16], strides = [1, 1]} : vector<16x128xf32> to vector<16x16xf32>
    %56 = arith.truncf %55 : vector<16x16xf32> to vector<16x16xbf16>
    %57 = vector.extract_strided_slice %54 {offsets = [0, 64], sizes = [16, 16], strides = [1, 1]} : vector<16x128xf32> to vector<16x16xf32>
    %58 = arith.truncf %57 : vector<16x16xf32> to vector<16x16xbf16>
    %59 = vector.extract_strided_slice %54 {offsets = [0, 96], sizes = [16, 16], strides = [1, 1]} : vector<16x128xf32> to vector<16x16xf32>
    %60 = arith.truncf %59 : vector<16x16xf32> to vector<16x16xbf16>
    %cst_22 = arith.constant dense<0.000000e+00> : vector<16x16xf32>
    %61 = tpu.matmul %56, %58, %cst_22 {dimension_numbers = #tpu.dot_dimension_numbers<[1], [1], [0], [0], [0, 0, 1, 0], [], []>} : vector<16x16xbf16>, vector<16x16xbf16>, vector<16x16xf32> -> vector<16x16xf32>
    %cst_23 = arith.constant 2.500000e-01 : f32
    %62 = vector.broadcast %cst_23 : f32 to vector<16x16xf32>
    %63 = arith.mulf %61, %62 : vector<16x16xf32>
    %cst_24 = arith.constant 5.000000e+01 : f32
    %64 = vector.broadcast %cst_24 : f32 to vector<16x16xf32>
    %65 = arith.divf %63, %64 : vector<16x16xf32>
    %66 = math.tanh %65 : vector<16x16xf32>
    %cst_25 = arith.constant 5.000000e+01 : f32
    %67 = vector.broadcast %cst_25 : f32 to vector<16x16xf32>
    %68 = arith.mulf %66, %67 : vector<16x16xf32>
    %69 = arith.addf %68, %25 : vector<16x16xf32>
    %cst_26 = arith.constant dense<0xFF800000> : vector<16xf32>
    %70 = vector.multi_reduction <maximumf>, %69, %cst_26 [1] : vector<16x16xf32> to vector<16xf32>
    %71 = vector.shape_cast %70 : vector<16xf32> to vector<16x1xf32>
    %72 = vector.broadcast %71 : vector<16x1xf32> to vector<16x16xf32>
    %73 = arith.subf %69, %72 : vector<16x16xf32>
    %74 = math.exp %73 : vector<16x16xf32>
    %cst_27 = arith.constant dense<0.000000e+00> : vector<16xf32>
    %75 = vector.multi_reduction <add>, %74, %cst_27 [1] : vector<16x16xf32> to vector<16xf32>
    %76 = vector.shape_cast %75 : vector<16xf32> to vector<16x1xf32>
    %77 = vector.broadcast %76 : vector<16x1xf32> to vector<16x16xf32>
    %78 = arith.divf %74, %77 : vector<16x16xf32>
    %79 = arith.truncf %78 : vector<16x16xf32> to vector<16x16xbf16>
    %cst_28 = arith.constant dense<0.000000e+00> : vector<16x16xf32>
    %80 = tpu.matmul %79, %60, %cst_28 {dimension_numbers = #tpu.dot_dimension_numbers<[1], [0], [0], [1], [0, 0, 1, 1], [], []>} : vector<16x16xbf16>, vector<16x16xbf16>, vector<16x16xf32> -> vector<16x16xf32>
    %c0_29 = arith.constant 0 : index
    %c0_30 = arith.constant 0 : index
    %81 = vector.load %arg15[%c0_29, %c0_30] : memref<16x64xf32, #tpu.memory_space<vmem>>, vector<16x16xf32>
    tpu.vector_store %arg15[%c0_29, %c0_30], %80 {strides = array<i32>} : memref<16x64xf32, #tpu.memory_space<vmem>>, vector<16x16xf32>,
    %82 = vector.extract_strided_slice %54 {offsets = [0, 16], sizes = [16, 16], strides = [1, 1]} : vector<16x128xf32> to vector<16x16xf32>
    %83 = arith.truncf %82 : vector<16x16xf32> to vector<16x16xbf16>
    %84 = vector.extract_strided_slice %54 {offsets = [0, 64], sizes = [16, 16], strides = [1, 1]} : vector<16x128xf32> to vector<16x16xf32>
    %85 = arith.truncf %84 : vector<16x16xf32> to vector<16x16xbf16>
    %86 = vector.extract_strided_slice %54 {offsets = [0, 96], sizes = [16, 16], strides = [1, 1]} : vector<16x128xf32> to vector<16x16xf32>
    %87 = arith.truncf %86 : vector<16x16xf32> to vector<16x16xbf16>
    %cst_31 = arith.constant dense<0.000000e+00> : vector<16x16xf32>
    %88 = tpu.matmul %83, %85, %cst_31 {dimension_numbers = #tpu.dot_dimension_numbers<[1], [1], [0], [0], [0, 0, 1, 0], [], []>} : vector<16x16xbf16>, vector<16x16xbf16>, vector<16x16xf32> -> vector<16x16xf32>
    %cst_32 = arith.constant 2.500000e-01 : f32
    %89 = vector.broadcast %cst_32 : f32 to vector<16x16xf32>
    %90 = arith.mulf %88, %89 : vector<16x16xf32>
    %cst_33 = arith.constant 5.000000e+01 : f32
    %91 = vector.broadcast %cst_33 : f32 to vector<16x16xf32>
    %92 = arith.divf %90, %91 : vector<16x16xf32>
    %93 = math.tanh %92 : vector<16x16xf32>
    %cst_34 = arith.constant 5.000000e+01 : f32
    %94 = vector.broadcast %cst_34 : f32 to vector<16x16xf32>
    %95 = arith.mulf %93, %94 : vector<16x16xf32>
    %96 = arith.addf %95, %25 : vector<16x16xf32>
    %cst_35 = arith.constant dense<0xFF800000> : vector<16xf32>
    %97 = vector.multi_reduction <maximumf>, %96, %cst_35 [1] : vector<16x16xf32> to vector<16xf32>
    %98 = vector.shape_cast %97 : vector<16xf32> to vector<16x1xf32>
    %99 = vector.broadcast %98 : vector<16x1xf32> to vector<16x16xf32>
    %100 = arith.subf %96, %99 : vector<16x16xf32>
    %101 = math.exp %100 : vector<16x16xf32>
    %cst_36 = arith.constant dense<0.000000e+00> : vector<16xf32>
    %102 = vector.multi_reduction <add>, %101, %cst_36 [1] : vector<16x16xf32> to vector<16xf32>
    %103 = vector.shape_cast %102 : vector<16xf32> to vector<16x1xf32>
    %104 = vector.broadcast %103 : vector<16x1xf32> to vector<16x16xf32>
    %105 = arith.divf %101, %104 : vector<16x16xf32>
    %106 = arith.truncf %105 : vector<16x16xf32> to vector<16x16xbf16>
    %cst_37 = arith.constant dense<0.000000e+00> : vector<16x16xf32>
    %107 = tpu.matmul %106, %87, %cst_37 {dimension_numbers = #tpu.dot_dimension_numbers<[1], [0], [0], [1], [0, 0, 1, 1], [], []>} : vector<16x16xbf16>, vector<16x16xbf16>, vector<16x16xf32> -> vector<16x16xf32>
    %c0_38 = arith.constant 0 : index
    %c16 = arith.constant 16 : index
    %108 = vector.load %arg15[%c0_38, %c16] : memref<16x64xf32, #tpu.memory_space<vmem>>, vector<16x16xf32>
    tpu.vector_store %arg15[%c0_38, %c16], %107 {strides = array<i32>} : memref<16x64xf32, #tpu.memory_space<vmem>>, vector<16x16xf32>,
    %109 = vector.extract_strided_slice %54 {offsets = [0, 32], sizes = [16, 16], strides = [1, 1]} : vector<16x128xf32> to vector<16x16xf32>
    %110 = arith.truncf %109 : vector<16x16xf32> to vector<16x16xbf16>
    %111 = vector.extract_strided_slice %54 {offsets = [0, 80], sizes = [16, 16], strides = [1, 1]} : vector<16x128xf32> to vector<16x16xf32>
    %112 = arith.truncf %111 : vector<16x16xf32> to vector<16x16xbf16>
    %113 = vector.extract_strided_slice %54 {offsets = [0, 112], sizes = [16, 16], strides = [1, 1]} : vector<16x128xf32> to vector<16x16xf32>
    %114 = arith.truncf %113 : vector<16x16xf32> to vector<16x16xbf16>
    %cst_39 = arith.constant dense<0.000000e+00> : vector<16x16xf32>
    %115 = tpu.matmul %110, %112, %cst_39 {dimension_numbers = #tpu.dot_dimension_numbers<[1], [1], [0], [0], [0, 0, 1, 0], [], []>} : vector<16x16xbf16>, vector<16x16xbf16>, vector<16x16xf32> -> vector<16x16xf32>
    %cst_40 = arith.constant 2.500000e-01 : f32
    %116 = vector.broadcast %cst_40 : f32 to vector<16x16xf32>
    %117 = arith.mulf %115, %116 : vector<16x16xf32>
    %cst_41 = arith.constant 5.000000e+01 : f32
    %118 = vector.broadcast %cst_41 : f32 to vector<16x16xf32>
    %119 = arith.divf %117, %118 : vector<16x16xf32>
    %120 = math.tanh %119 : vector<16x16xf32>
    %cst_42 = arith.constant 5.000000e+01 : f32
    %121 = vector.broadcast %cst_42 : f32 to vector<16x16xf32>
    %122 = arith.mulf %120, %121 : vector<16x16xf32>
    %123 = arith.addf %122, %25 : vector<16x16xf32>
    %cst_43 = arith.constant dense<0xFF800000> : vector<16xf32>
    %124 = vector.multi_reduction <maximumf>, %123, %cst_43 [1] : vector<16x16xf32> to vector<16xf32>
    %125 = vector.shape_cast %124 : vector<16xf32> to vector<16x1xf32>
    %126 = vector.broadcast %125 : vector<16x1xf32> to vector<16x16xf32>
    %127 = arith.subf %123, %126 : vector<16x16xf32>
    %128 = math.exp %127 : vector<16x16xf32>
    %cst_44 = arith.constant dense<0.000000e+00> : vector<16xf32>
    %129 = vector.multi_reduction <add>, %128, %cst_44 [1] : vector<16x16xf32> to vector<16xf32>
    %130 = vector.shape_cast %129 : vector<16xf32> to vector<16x1xf32>
    %131 = vector.broadcast %130 : vector<16x1xf32> to vector<16x16xf32>
    %132 = arith.divf %128, %131 : vector<16x16xf32>
    %133 = arith.truncf %132 : vector<16x16xf32> to vector<16x16xbf16>
    %cst_45 = arith.constant dense<0.000000e+00> : vector<16x16xf32>
    %134 = tpu.matmul %133, %114, %cst_45 {dimension_numbers = #tpu.dot_dimension_numbers<[1], [0], [0], [1], [0, 0, 1, 1], [], []>} : vector<16x16xbf16>, vector<16x16xbf16>, vector<16x16xf32> -> vector<16x16xf32>
    %c0_46 = arith.constant 0 : index
    %c32 = arith.constant 32 : index
    %135 = vector.load %arg15[%c0_46, %c32] : memref<16x64xf32, #tpu.memory_space<vmem>>, vector<16x16xf32>
    tpu.vector_store %arg15[%c0_46, %c32], %134 {strides = array<i32>} : memref<16x64xf32, #tpu.memory_space<vmem>>, vector<16x16xf32>,
    %136 = vector.extract_strided_slice %54 {offsets = [0, 48], sizes = [16, 16], strides = [1, 1]} : vector<16x128xf32> to vector<16x16xf32>
    %137 = arith.truncf %136 : vector<16x16xf32> to vector<16x16xbf16>
    %138 = vector.extract_strided_slice %54 {offsets = [0, 80], sizes = [16, 16], strides = [1, 1]} : vector<16x128xf32> to vector<16x16xf32>
    %139 = arith.truncf %138 : vector<16x16xf32> to vector<16x16xbf16>
    %140 = vector.extract_strided_slice %54 {offsets = [0, 112], sizes = [16, 16], strides = [1, 1]} : vector<16x128xf32> to vector<16x16xf32>
    %141 = arith.truncf %140 : vector<16x16xf32> to vector<16x16xbf16>
    %cst_47 = arith.constant dense<0.000000e+00> : vector<16x16xf32>
    %142 = tpu.matmul %137, %139, %cst_47 {dimension_numbers = #tpu.dot_dimension_numbers<[1], [1], [0], [0], [0, 0, 1, 0], [], []>} : vector<16x16xbf16>, vector<16x16xbf16>, vector<16x16xf32> -> vector<16x16xf32>
    %cst_48 = arith.constant 2.500000e-01 : f32
    %143 = vector.broadcast %cst_48 : f32 to vector<16x16xf32>
    %144 = arith.mulf %142, %143 : vector<16x16xf32>
    %cst_49 = arith.constant 5.000000e+01 : f32
    %145 = vector.broadcast %cst_49 : f32 to vector<16x16xf32>
    %146 = arith.divf %144, %145 : vector<16x16xf32>
    %147 = math.tanh %146 : vector<16x16xf32>
    %cst_50 = arith.constant 5.000000e+01 : f32
    %148 = vector.broadcast %cst_50 : f32 to vector<16x16xf32>
    %149 = arith.mulf %147, %148 : vector<16x16xf32>
    %150 = arith.addf %149, %25 : vector<16x16xf32>
    %cst_51 = arith.constant dense<0xFF800000> : vector<16xf32>
    %151 = vector.multi_reduction <maximumf>, %150, %cst_51 [1] : vector<16x16xf32> to vector<16xf32>
    %152 = vector.shape_cast %151 : vector<16xf32> to vector<16x1xf32>
    %153 = vector.broadcast %152 : vector<16x1xf32> to vector<16x16xf32>
    %154 = arith.subf %150, %153 : vector<16x16xf32>
    %155 = math.exp %154 : vector<16x16xf32>
    %cst_52 = arith.constant dense<0.000000e+00> : vector<16xf32>
    %156 = vector.multi_reduction <add>, %155, %cst_52 [1] : vector<16x16xf32> to vector<16xf32>
    %157 = vector.shape_cast %156 : vector<16xf32> to vector<16x1xf32>
    %158 = vector.broadcast %157 : vector<16x1xf32> to vector<16x16xf32>
    %159 = arith.divf %155, %158 : vector<16x16xf32>
    %160 = arith.truncf %159 : vector<16x16xf32> to vector<16x16xbf16>
    %cst_53 = arith.constant dense<0.000000e+00> : vector<16x16xf32>
    %161 = tpu.matmul %160, %141, %cst_53 {dimension_numbers = #tpu.dot_dimension_numbers<[1], [0], [0], [1], [0, 0, 1, 1], [], []>} : vector<16x16xbf16>, vector<16x16xbf16>, vector<16x16xf32> -> vector<16x16xf32>
    %c0_54 = arith.constant 0 : index
    %c48 = arith.constant 48 : index
    %162 = vector.load %arg15[%c0_54, %c48] : memref<16x64xf32, #tpu.memory_space<vmem>>, vector<16x16xf32>
    tpu.vector_store %arg15[%c0_54, %c48], %161 {strides = array<i32>} : memref<16x64xf32, #tpu.memory_space<vmem>>, vector<16x16xf32>,
    %c0_55 = arith.constant 0 : index
    %c0_56 = arith.constant 0 : index
    %163 = vector.load %arg15[%c0_55, %c0_56] : memref<16x64xf32, #tpu.memory_space<vmem>>, vector<16x64xf32>
    %164 = arith.truncf %163 : vector<16x64xf32> to vector<16x64xbf16>
    %c0_57 = arith.constant 0 : index
    %c0_58 = arith.constant 0 : index
    %165 = vector.load %arg5[%c0_57, %c0_58] : memref<64x64xbf16, #tpu.memory_space<vmem>>, vector<64x64xbf16>
    %cst_59 = arith.constant dense<0.000000e+00> : vector<16x64xf32>
    %166 = tpu.matmul %164, %165, %cst_59 {dimension_numbers = #tpu.dot_dimension_numbers<[1], [0], [0], [1], [0, 0, 1, 1], [], []>} : vector<16x64xbf16>, vector<64x64xbf16>, vector<16x64xf32> -> vector<16x64xf32>
    %c1 = arith.constant 1 : index
    %c0_60 = arith.constant 0 : index
    %167 = vector.load %arg3[%c1, %c0_60] : memref<4x64xf32, #tpu.memory_space<vmem>>, vector<1x64xf32>
    %168 = arith.mulf %166, %166 : vector<16x64xf32>
    %cst_61 = arith.constant dense<0.000000e+00> : vector<16xf32>
    %169 = vector.multi_reduction <add>, %168, %cst_61 [1] : vector<16x64xf32> to vector<16xf32>
    %170 = vector.shape_cast %169 : vector<16xf32> to vector<16x1xf32>
    %cst_62 = arith.constant 6.400000e+01 : f32
    %171 = vector.broadcast %cst_62 : f32 to vector<16x1xf32>
    %172 = arith.divf %170, %171 : vector<16x1xf32>
    %cst_63 = arith.constant 9.99999997E-7 : f32
    %173 = vector.broadcast %cst_63 : f32 to vector<16x1xf32>
    %174 = arith.addf %172, %173 : vector<16x1xf32>
    %175 = math.rsqrt %174 : vector<16x1xf32>
    %176 = vector.broadcast %175 : vector<16x1xf32> to vector<16x64xf32>
    %177 = arith.mulf %166, %176 : vector<16x64xf32>
    %cst_64 = arith.constant 1.000000e+00 : f32
    %178 = vector.broadcast %cst_64 : f32 to vector<1x64xf32>
    %179 = arith.addf %178, %167 : vector<1x64xf32>
    %180 = vector.broadcast %179 : vector<1x64xf32> to vector<16x64xf32>
    %181 = arith.mulf %177, %180 : vector<16x64xf32>
    %182 = arith.addf %31, %181 : vector<16x64xf32>
    %c2 = arith.constant 2 : index
    %c0_65 = arith.constant 0 : index
    %183 = vector.load %arg3[%c2, %c0_65] : memref<4x64xf32, #tpu.memory_space<vmem>>, vector<1x64xf32>
    %184 = arith.mulf %182, %182 : vector<16x64xf32>
    %cst_66 = arith.constant dense<0.000000e+00> : vector<16xf32>
    %185 = vector.multi_reduction <add>, %184, %cst_66 [1] : vector<16x64xf32> to vector<16xf32>
    %186 = vector.shape_cast %185 : vector<16xf32> to vector<16x1xf32>
    %cst_67 = arith.constant 6.400000e+01 : f32
    %187 = vector.broadcast %cst_67 : f32 to vector<16x1xf32>
    %188 = arith.divf %186, %187 : vector<16x1xf32>
    %cst_68 = arith.constant 9.99999997E-7 : f32
    %189 = vector.broadcast %cst_68 : f32 to vector<16x1xf32>
    %190 = arith.addf %188, %189 : vector<16x1xf32>
    %191 = math.rsqrt %190 : vector<16x1xf32>
    %192 = vector.broadcast %191 : vector<16x1xf32> to vector<16x64xf32>
    %193 = arith.mulf %182, %192 : vector<16x64xf32>
    %cst_69 = arith.constant 1.000000e+00 : f32
    %194 = vector.broadcast %cst_69 : f32 to vector<1x64xf32>
    %195 = arith.addf %194, %183 : vector<1x64xf32>
    %196 = vector.broadcast %195 : vector<1x64xf32> to vector<16x64xf32>
    %197 = arith.mulf %193, %196 : vector<16x64xf32>
    %198 = arith.truncf %197 : vector<16x64xf32> to vector<16x64xbf16>
    %c0_70 = arith.constant 0 : index
    %c0_71 = arith.constant 0 : index
    %199 = vector.load %arg6[%c0_70, %c0_71] : memref<64x256xbf16, #tpu.memory_space<vmem>>, vector<64x256xbf16>
    %cst_72 = arith.constant dense<0.000000e+00> : vector<16x256xf32>
    %200 = tpu.matmul %198, %199, %cst_72 {dimension_numbers = #tpu.dot_dimension_numbers<[1], [0], [0], [1], [0, 0, 1, 1], [], []>} : vector<16x64xbf16>, vector<64x256xbf16>, vector<16x256xf32> -> vector<16x256xf32>
    %201 = vector.extract_strided_slice %200 {offsets = [0, 0], sizes = [16, 128], strides = [1, 1]} : vector<16x256xf32> to vector<16x128xf32>
    %202 = arith.mulf %201, %201 : vector<16x128xf32>
    %203 = arith.mulf %201, %202 : vector<16x128xf32>
    %cst_73 = arith.constant 4.471500e-02 : f32
    %204 = vector.broadcast %cst_73 : f32 to vector<16x128xf32>
    %205 = arith.mulf %204, %203 : vector<16x128xf32>
    %206 = arith.addf %201, %205 : vector<16x128xf32>
    %cst_74 = arith.constant 0.797884583 : f32
    %207 = vector.broadcast %cst_74 : f32 to vector<16x128xf32>
    %208 = arith.mulf %207, %206 : vector<16x128xf32>
    %209 = math.tanh %208 : vector<16x128xf32>
    %cst_75 = arith.constant 1.000000e+00 : f32
    %210 = vector.broadcast %cst_75 : f32 to vector<16x128xf32>
    %211 = arith.addf %210, %209 : vector<16x128xf32>
    %cst_76 = arith.constant 5.000000e-01 : f32
    %212 = vector.broadcast %cst_76 : f32 to vector<16x128xf32>
    %213 = arith.mulf %212, %211 : vector<16x128xf32>
    %214 = arith.mulf %201, %213 : vector<16x128xf32>
    %215 = vector.extract_strided_slice %200 {offsets = [0, 128], sizes = [16, 128], strides = [1, 1]} : vector<16x256xf32> to vector<16x128xf32>
    %216 = arith.mulf %214, %215 : vector<16x128xf32>
    %217 = arith.truncf %216 : vector<16x128xf32> to vector<16x128xbf16>
    %c0_77 = arith.constant 0 : index
    %c0_78 = arith.constant 0 : index
    %218 = vector.load %arg7[%c0_77, %c0_78] : memref<128x64xbf16, #tpu.memory_space<vmem>>, vector<128x64xbf16>
    %cst_79 = arith.constant dense<0.000000e+00> : vector<16x64xf32>
    %219 = tpu.matmul %217, %218, %cst_79 {dimension_numbers = #tpu.dot_dimension_numbers<[1], [0], [0], [1], [0, 0, 1, 1], [], []>} : vector<16x128xbf16>, vector<128x64xbf16>, vector<16x64xf32> -> vector<16x64xf32>
    %c3 = arith.constant 3 : index
    %c0_80 = arith.constant 0 : index
    %220 = vector.load %arg3[%c3, %c0_80] : memref<4x64xf32, #tpu.memory_space<vmem>>, vector<1x64xf32>
    %221 = arith.mulf %219, %219 : vector<16x64xf32>
    %cst_81 = arith.constant dense<0.000000e+00> : vector<16xf32>
    %222 = vector.multi_reduction <add>, %221, %cst_81 [1] : vector<16x64xf32> to vector<16xf32>
    %223 = vector.shape_cast %222 : vector<16xf32> to vector<16x1xf32>
    %cst_82 = arith.constant 6.400000e+01 : f32
    %224 = vector.broadcast %cst_82 : f32 to vector<16x1xf32>
    %225 = arith.divf %223, %224 : vector<16x1xf32>
    %cst_83 = arith.constant 9.99999997E-7 : f32
    %226 = vector.broadcast %cst_83 : f32 to vector<16x1xf32>
    %227 = arith.addf %225, %226 : vector<16x1xf32>
    %228 = math.rsqrt %227 : vector<16x1xf32>
    %229 = vector.broadcast %228 : vector<16x1xf32> to vector<16x64xf32>
    %230 = arith.mulf %219, %229 : vector<16x64xf32>
    %cst_84 = arith.constant 1.000000e+00 : f32
    %231 = vector.broadcast %cst_84 : f32 to vector<1x64xf32>
    %232 = arith.addf %231, %220 : vector<1x64xf32>
    %233 = vector.broadcast %232 : vector<1x64xf32> to vector<16x64xf32>
    %234 = arith.mulf %230, %233 : vector<16x64xf32>
    %235 = arith.addf %182, %234 : vector<16x64xf32>
    %c0_85 = arith.constant 0 : index
    %c0_86 = arith.constant 0 : index
    %236 = vector.load %arg8[%c0_85, %c0_86] : memref<4x64xf32, #tpu.memory_space<vmem>>, vector<1x64xf32>
    %237 = arith.mulf %235, %235 : vector<16x64xf32>
    %cst_87 = arith.constant dense<0.000000e+00> : vector<16xf32>
    %238 = vector.multi_reduction <add>, %237, %cst_87 [1] : vector<16x64xf32> to vector<16xf32>
    %239 = vector.shape_cast %238 : vector<16xf32> to vector<16x1xf32>
    %cst_88 = arith.constant 6.400000e+01 : f32
    %240 = vector.broadcast %cst_88 : f32 to vector<16x1xf32>
    %241 = arith.divf %239, %240 : vector<16x1xf32>
    %cst_89 = arith.constant 9.99999997E-7 : f32
    %242 = vector.broadcast %cst_89 : f32 to vector<16x1xf32>
    %243 = arith.addf %241, %242 : vector<16x1xf32>
    %244 = math.rsqrt %243 : vector<16x1xf32>
    %245 = vector.broadcast %244 : vector<16x1xf32> to vector<16x64xf32>
    %246 = arith.mulf %235, %245 : vector<16x64xf32>
    %cst_90 = arith.constant 1.000000e+00 : f32
    %247 = vector.broadcast %cst_90 : f32 to vector<1x64xf32>
    %248 = arith.addf %247, %236 : vector<1x64xf32>
    %249 = vector.broadcast %248 : vector<1x64xf32> to vector<16x64xf32>
    %250 = arith.mulf %246, %249 : vector<16x64xf32>
    %251 = arith.truncf %250 : vector<16x64xf32> to vector<16x64xbf16>
    %c0_91 = arith.constant 0 : index
    %c0_92 = arith.constant 0 : index
    %252 = vector.load %arg9[%c0_91, %c0_92] : memref<64x256xbf16, #tpu.memory_space<vmem>>, vector<64x256xbf16>
    %cst_93 = arith.constant dense<0.000000e+00> : vector<16x256xf32>
    %253 = tpu.matmul %251, %252, %cst_93 {dimension_numbers = #tpu.dot_dimension_numbers<[1], [0], [0], [1], [0, 0, 1, 1], [], []>} : vector<16x64xbf16>, vector<64x256xbf16>, vector<16x256xf32> -> vector<16x256xf32>
    %254 = vector.extract_strided_slice %253 {offsets = [0, 0], sizes = [16, 128], strides = [1, 1]} : vector<16x256xf32> to vector<16x128xf32>
    %255 = arith.mulf %254, %29 : vector<16x128xf32>
    %256 = vector.extract_strided_slice %253 {offsets = [0, 128], sizes = [16, 128], strides = [1, 1]} : vector<16x256xf32> to vector<16x128xf32>
    %257 = arith.mulf %256, %30 : vector<16x128xf32>
    %258 = arith.addf %255, %257 : vector<16x128xf32>
    %259 = vector.extract_strided_slice %258 {offsets = [0, 0], sizes = [16, 16], strides = [1, 1]} : vector<16x128xf32> to vector<16x16xf32>
    %260 = arith.truncf %259 : vector<16x16xf32> to vector<16x16xbf16>
    %261 = vector.extract_strided_slice %258 {offsets = [0, 64], sizes = [16, 16], strides = [1, 1]} : vector<16x128xf32> to vector<16x16xf32>
    %262 = arith.truncf %261 : vector<16x16xf32> to vector<16x16xbf16>
    %263 = vector.extract_strided_slice %258 {offsets = [0, 96], sizes = [16, 16], strides = [1, 1]} : vector<16x128xf32> to vector<16x16xf32>
    %264 = arith.truncf %263 : vector<16x16xf32> to vector<16x16xbf16>
    %cst_94 = arith.constant dense<0.000000e+00> : vector<16x16xf32>
    %265 = tpu.matmul %260, %262, %cst_94 {dimension_numbers = #tpu.dot_dimension_numbers<[1], [1], [0], [0], [0, 0, 1, 0], [], []>} : vector<16x16xbf16>, vector<16x16xbf16>, vector<16x16xf32> -> vector<16x16xf32>
    %cst_95 = arith.constant 2.500000e-01 : f32
    %266 = vector.broadcast %cst_95 : f32 to vector<16x16xf32>
    %267 = arith.mulf %265, %266 : vector<16x16xf32>
    %cst_96 = arith.constant 5.000000e+01 : f32
    %268 = vector.broadcast %cst_96 : f32 to vector<16x16xf32>
    %269 = arith.divf %267, %268 : vector<16x16xf32>
    %270 = math.tanh %269 : vector<16x16xf32>
    %cst_97 = arith.constant 5.000000e+01 : f32
    %271 = vector.broadcast %cst_97 : f32 to vector<16x16xf32>
    %272 = arith.mulf %270, %271 : vector<16x16xf32>
    %273 = arith.addf %272, %28 : vector<16x16xf32>
    %cst_98 = arith.constant dense<0xFF800000> : vector<16xf32>
    %274 = vector.multi_reduction <maximumf>, %273, %cst_98 [1] : vector<16x16xf32> to vector<16xf32>
    %275 = vector.shape_cast %274 : vector<16xf32> to vector<16x1xf32>
    %276 = vector.broadcast %275 : vector<16x1xf32> to vector<16x16xf32>
    %277 = arith.subf %273, %276 : vector<16x16xf32>
    %278 = math.exp %277 : vector<16x16xf32>
    %cst_99 = arith.constant dense<0.000000e+00> : vector<16xf32>
    %279 = vector.multi_reduction <add>, %278, %cst_99 [1] : vector<16x16xf32> to vector<16xf32>
    %280 = vector.shape_cast %279 : vector<16xf32> to vector<16x1xf32>
    %281 = vector.broadcast %280 : vector<16x1xf32> to vector<16x16xf32>
    %282 = arith.divf %278, %281 : vector<16x16xf32>
    %283 = arith.truncf %282 : vector<16x16xf32> to vector<16x16xbf16>
    %cst_100 = arith.constant dense<0.000000e+00> : vector<16x16xf32>
    %284 = tpu.matmul %283, %264, %cst_100 {dimension_numbers = #tpu.dot_dimension_numbers<[1], [0], [0], [1], [0, 0, 1, 1], [], []>} : vector<16x16xbf16>, vector<16x16xbf16>, vector<16x16xf32> -> vector<16x16xf32>
    %c0_101 = arith.constant 0 : index
    %c0_102 = arith.constant 0 : index
    %285 = vector.load %arg15[%c0_101, %c0_102] : memref<16x64xf32, #tpu.memory_space<vmem>>, vector<16x16xf32>
    tpu.vector_store %arg15[%c0_101, %c0_102], %284 {strides = array<i32>} : memref<16x64xf32, #tpu.memory_space<vmem>>, vector<16x16xf32>,
    %286 = vector.extract_strided_slice %258 {offsets = [0, 16], sizes = [16, 16], strides = [1, 1]} : vector<16x128xf32> to vector<16x16xf32>
    %287 = arith.truncf %286 : vector<16x16xf32> to vector<16x16xbf16>
    %288 = vector.extract_strided_slice %258 {offsets = [0, 64], sizes = [16, 16], strides = [1, 1]} : vector<16x128xf32> to vector<16x16xf32>
    %289 = arith.truncf %288 : vector<16x16xf32> to vector<16x16xbf16>
    %290 = vector.extract_strided_slice %258 {offsets = [0, 96], sizes = [16, 16], strides = [1, 1]} : vector<16x128xf32> to vector<16x16xf32>
    %291 = arith.truncf %290 : vector<16x16xf32> to vector<16x16xbf16>
    %cst_103 = arith.constant dense<0.000000e+00> : vector<16x16xf32>
    %292 = tpu.matmul %287, %289, %cst_103 {dimension_numbers = #tpu.dot_dimension_numbers<[1], [1], [0], [0], [0, 0, 1, 0], [], []>} : vector<16x16xbf16>, vector<16x16xbf16>, vector<16x16xf32> -> vector<16x16xf32>
    %cst_104 = arith.constant 2.500000e-01 : f32
    %293 = vector.broadcast %cst_104 : f32 to vector<16x16xf32>
    %294 = arith.mulf %292, %293 : vector<16x16xf32>
    %cst_105 = arith.constant 5.000000e+01 : f32
    %295 = vector.broadcast %cst_105 : f32 to vector<16x16xf32>
    %296 = arith.divf %294, %295 : vector<16x16xf32>
    %297 = math.tanh %296 : vector<16x16xf32>
    %cst_106 = arith.constant 5.000000e+01 : f32
    %298 = vector.broadcast %cst_106 : f32 to vector<16x16xf32>
    %299 = arith.mulf %297, %298 : vector<16x16xf32>
    %300 = arith.addf %299, %28 : vector<16x16xf32>
    %cst_107 = arith.constant dense<0xFF800000> : vector<16xf32>
    %301 = vector.multi_reduction <maximumf>, %300, %cst_107 [1] : vector<16x16xf32> to vector<16xf32>
    %302 = vector.shape_cast %301 : vector<16xf32> to vector<16x1xf32>
    %303 = vector.broadcast %302 : vector<16x1xf32> to vector<16x16xf32>
    %304 = arith.subf %300, %303 : vector<16x16xf32>
    %305 = math.exp %304 : vector<16x16xf32>
    %cst_108 = arith.constant dense<0.000000e+00> : vector<16xf32>
    %306 = vector.multi_reduction <add>, %305, %cst_108 [1] : vector<16x16xf32> to vector<16xf32>
    %307 = vector.shape_cast %306 : vector<16xf32> to vector<16x1xf32>
    %308 = vector.broadcast %307 : vector<16x1xf32> to vector<16x16xf32>
    %309 = arith.divf %305, %308 : vector<16x16xf32>
    %310 = arith.truncf %309 : vector<16x16xf32> to vector<16x16xbf16>
    %cst_109 = arith.constant dense<0.000000e+00> : vector<16x16xf32>
    %311 = tpu.matmul %310, %291, %cst_109 {dimension_numbers = #tpu.dot_dimension_numbers<[1], [0], [0], [1], [0, 0, 1, 1], [], []>} : vector<16x16xbf16>, vector<16x16xbf16>, vector<16x16xf32> -> vector<16x16xf32>
    %c0_110 = arith.constant 0 : index
    %c16_111 = arith.constant 16 : index
    %312 = vector.load %arg15[%c0_110, %c16_111] : memref<16x64xf32, #tpu.memory_space<vmem>>, vector<16x16xf32>
    tpu.vector_store %arg15[%c0_110, %c16_111], %311 {strides = array<i32>} : memref<16x64xf32, #tpu.memory_space<vmem>>, vector<16x16xf32>,
    %313 = vector.extract_strided_slice %258 {offsets = [0, 32], sizes = [16, 16], strides = [1, 1]} : vector<16x128xf32> to vector<16x16xf32>
    %314 = arith.truncf %313 : vector<16x16xf32> to vector<16x16xbf16>
    %315 = vector.extract_strided_slice %258 {offsets = [0, 80], sizes = [16, 16], strides = [1, 1]} : vector<16x128xf32> to vector<16x16xf32>
    %316 = arith.truncf %315 : vector<16x16xf32> to vector<16x16xbf16>
    %317 = vector.extract_strided_slice %258 {offsets = [0, 112], sizes = [16, 16], strides = [1, 1]} : vector<16x128xf32> to vector<16x16xf32>
    %318 = arith.truncf %317 : vector<16x16xf32> to vector<16x16xbf16>
    %cst_112 = arith.constant dense<0.000000e+00> : vector<16x16xf32>
    %319 = tpu.matmul %314, %316, %cst_112 {dimension_numbers = #tpu.dot_dimension_numbers<[1], [1], [0], [0], [0, 0, 1, 0], [], []>} : vector<16x16xbf16>, vector<16x16xbf16>, vector<16x16xf32> -> vector<16x16xf32>
    %cst_113 = arith.constant 2.500000e-01 : f32
    %320 = vector.broadcast %cst_113 : f32 to vector<16x16xf32>
    %321 = arith.mulf %319, %320 : vector<16x16xf32>
    %cst_114 = arith.constant 5.000000e+01 : f32
    %322 = vector.broadcast %cst_114 : f32 to vector<16x16xf32>
    %323 = arith.divf %321, %322 : vector<16x16xf32>
    %324 = math.tanh %323 : vector<16x16xf32>
    %cst_115 = arith.constant 5.000000e+01 : f32
    %325 = vector.broadcast %cst_115 : f32 to vector<16x16xf32>
    %326 = arith.mulf %324, %325 : vector<16x16xf32>
    %327 = arith.addf %326, %28 : vector<16x16xf32>
    %cst_116 = arith.constant dense<0xFF800000> : vector<16xf32>
    %328 = vector.multi_reduction <maximumf>, %327, %cst_116 [1] : vector<16x16xf32> to vector<16xf32>
    %329 = vector.shape_cast %328 : vector<16xf32> to vector<16x1xf32>
    %330 = vector.broadcast %329 : vector<16x1xf32> to vector<16x16xf32>
    %331 = arith.subf %327, %330 : vector<16x16xf32>
    %332 = math.exp %331 : vector<16x16xf32>
    %cst_117 = arith.constant dense<0.000000e+00> : vector<16xf32>
    %333 = vector.multi_reduction <add>, %332, %cst_117 [1] : vector<16x16xf32> to vector<16xf32>
    %334 = vector.shape_cast %333 : vector<16xf32> to vector<16x1xf32>
    %335 = vector.broadcast %334 : vector<16x1xf32> to vector<16x16xf32>
    %336 = arith.divf %332, %335 : vector<16x16xf32>
    %337 = arith.truncf %336 : vector<16x16xf32> to vector<16x16xbf16>
    %cst_118 = arith.constant dense<0.000000e+00> : vector<16x16xf32>
    %338 = tpu.matmul %337, %318, %cst_118 {dimension_numbers = #tpu.dot_dimension_numbers<[1], [0], [0], [1], [0, 0, 1, 1], [], []>} : vector<16x16xbf16>, vector<16x16xbf16>, vector<16x16xf32> -> vector<16x16xf32>
    %c0_119 = arith.constant 0 : index
    %c32_120 = arith.constant 32 : index
    %339 = vector.load %arg15[%c0_119, %c32_120] : memref<16x64xf32, #tpu.memory_space<vmem>>, vector<16x16xf32>
    tpu.vector_store %arg15[%c0_119, %c32_120], %338 {strides = array<i32>} : memref<16x64xf32, #tpu.memory_space<vmem>>, vector<16x16xf32>,
    %340 = vector.extract_strided_slice %258 {offsets = [0, 48], sizes = [16, 16], strides = [1, 1]} : vector<16x128xf32> to vector<16x16xf32>
    %341 = arith.truncf %340 : vector<16x16xf32> to vector<16x16xbf16>
    %342 = vector.extract_strided_slice %258 {offsets = [0, 80], sizes = [16, 16], strides = [1, 1]} : vector<16x128xf32> to vector<16x16xf32>
    %343 = arith.truncf %342 : vector<16x16xf32> to vector<16x16xbf16>
    %344 = vector.extract_strided_slice %258 {offsets = [0, 112], sizes = [16, 16], strides = [1, 1]} : vector<16x128xf32> to vector<16x16xf32>
    %345 = arith.truncf %344 : vector<16x16xf32> to vector<16x16xbf16>
    %cst_121 = arith.constant dense<0.000000e+00> : vector<16x16xf32>
    %346 = tpu.matmul %341, %343, %cst_121 {dimension_numbers = #tpu.dot_dimension_numbers<[1], [1], [0], [0], [0, 0, 1, 0], [], []>} : vector<16x16xbf16>, vector<16x16xbf16>, vector<16x16xf32> -> vector<16x16xf32>
    %cst_122 = arith.constant 2.500000e-01 : f32
    %347 = vector.broadcast %cst_122 : f32 to vector<16x16xf32>
    %348 = arith.mulf %346, %347 : vector<16x16xf32>
    %cst_123 = arith.constant 5.000000e+01 : f32
    %349 = vector.broadcast %cst_123 : f32 to vector<16x16xf32>
    %350 = arith.divf %348, %349 : vector<16x16xf32>
    %351 = math.tanh %350 : vector<16x16xf32>
    %cst_124 = arith.constant 5.000000e+01 : f32
    %352 = vector.broadcast %cst_124 : f32 to vector<16x16xf32>
    %353 = arith.mulf %351, %352 : vector<16x16xf32>
    %354 = arith.addf %353, %28 : vector<16x16xf32>
    %cst_125 = arith.constant dense<0xFF800000> : vector<16xf32>
    %355 = vector.multi_reduction <maximumf>, %354, %cst_125 [1] : vector<16x16xf32> to vector<16xf32>
    %356 = vector.shape_cast %355 : vector<16xf32> to vector<16x1xf32>
    %357 = vector.broadcast %356 : vector<16x1xf32> to vector<16x16xf32>
    %358 = arith.subf %354, %357 : vector<16x16xf32>
    %359 = math.exp %358 : vector<16x16xf32>
    %cst_126 = arith.constant dense<0.000000e+00> : vector<16xf32>
    %360 = vector.multi_reduction <add>, %359, %cst_126 [1] : vector<16x16xf32> to vector<16xf32>
    %361 = vector.shape_cast %360 : vector<16xf32> to vector<16x1xf32>
    %362 = vector.broadcast %361 : vector<16x1xf32> to vector<16x16xf32>
    %363 = arith.divf %359, %362 : vector<16x16xf32>
    %364 = arith.truncf %363 : vector<16x16xf32> to vector<16x16xbf16>
    %cst_127 = arith.constant dense<0.000000e+00> : vector<16x16xf32>
    %365 = tpu.matmul %364, %345, %cst_127 {dimension_numbers = #tpu.dot_dimension_numbers<[1], [0], [0], [1], [0, 0, 1, 1], [], []>} : vector<16x16xbf16>, vector<16x16xbf16>, vector<16x16xf32> -> vector<16x16xf32>
    %c0_128 = arith.constant 0 : index
    %c48_129 = arith.constant 48 : index
    %366 = vector.load %arg15[%c0_128, %c48_129] : memref<16x64xf32, #tpu.memory_space<vmem>>, vector<16x16xf32>
    tpu.vector_store %arg15[%c0_128, %c48_129], %365 {strides = array<i32>} : memref<16x64xf32, #tpu.memory_space<vmem>>, vector<16x16xf32>,
    %c0_130 = arith.constant 0 : index
    %c0_131 = arith.constant 0 : index
    %367 = vector.load %arg15[%c0_130, %c0_131] : memref<16x64xf32, #tpu.memory_space<vmem>>, vector<16x64xf32>
    %368 = arith.truncf %367 : vector<16x64xf32> to vector<16x64xbf16>
    %c0_132 = arith.constant 0 : index
    %c0_133 = arith.constant 0 : index
    %369 = vector.load %arg10[%c0_132, %c0_133] : memref<64x64xbf16, #tpu.memory_space<vmem>>, vector<64x64xbf16>
    %cst_134 = arith.constant dense<0.000000e+00> : vector<16x64xf32>
    %370 = tpu.matmul %368, %369, %cst_134 {dimension_numbers = #tpu.dot_dimension_numbers<[1], [0], [0], [1], [0, 0, 1, 1], [], []>} : vector<16x64xbf16>, vector<64x64xbf16>, vector<16x64xf32> -> vector<16x64xf32>
    %c1_135 = arith.constant 1 : index
    %c0_136 = arith.constant 0 : index
    %371 = vector.load %arg8[%c1_135, %c0_136] : memref<4x64xf32, #tpu.memory_space<vmem>>, vector<1x64xf32>
    %372 = arith.mulf %370, %370 : vector<16x64xf32>
    %cst_137 = arith.constant dense<0.000000e+00> : vector<16xf32>
    %373 = vector.multi_reduction <add>, %372, %cst_137 [1] : vector<16x64xf32> to vector<16xf32>
    %374 = vector.shape_cast %373 : vector<16xf32> to vector<16x1xf32>
    %cst_138 = arith.constant 6.400000e+01 : f32
    %375 = vector.broadcast %cst_138 : f32 to vector<16x1xf32>
    %376 = arith.divf %374, %375 : vector<16x1xf32>
    %cst_139 = arith.constant 9.99999997E-7 : f32
    %377 = vector.broadcast %cst_139 : f32 to vector<16x1xf32>
    %378 = arith.addf %376, %377 : vector<16x1xf32>
    %379 = math.rsqrt %378 : vector<16x1xf32>
    %380 = vector.broadcast %379 : vector<16x1xf32> to vector<16x64xf32>
    %381 = arith.mulf %370, %380 : vector<16x64xf32>
    %cst_140 = arith.constant 1.000000e+00 : f32
    %382 = vector.broadcast %cst_140 : f32 to vector<1x64xf32>
    %383 = arith.addf %382, %371 : vector<1x64xf32>
    %384 = vector.broadcast %383 : vector<1x64xf32> to vector<16x64xf32>
    %385 = arith.mulf %381, %384 : vector<16x64xf32>
    %386 = arith.addf %235, %385 : vector<16x64xf32>
    %c2_141 = arith.constant 2 : index
    %c0_142 = arith.constant 0 : index
    %387 = vector.load %arg8[%c2_141, %c0_142] : memref<4x64xf32, #tpu.memory_space<vmem>>, vector<1x64xf32>
    %388 = arith.mulf %386, %386 : vector<16x64xf32>
    %cst_143 = arith.constant dense<0.000000e+00> : vector<16xf32>
    %389 = vector.multi_reduction <add>, %388, %cst_143 [1] : vector<16x64xf32> to vector<16xf32>
    %390 = vector.shape_cast %389 : vector<16xf32> to vector<16x1xf32>
    %cst_144 = arith.constant 6.400000e+01 : f32
    %391 = vector.broadcast %cst_144 : f32 to vector<16x1xf32>
    %392 = arith.divf %390, %391 : vector<16x1xf32>
    %cst_145 = arith.constant 9.99999997E-7 : f32
    %393 = vector.broadcast %cst_145 : f32 to vector<16x1xf32>
    %394 = arith.addf %392, %393 : vector<16x1xf32>
    %395 = math.rsqrt %394 : vector<16x1xf32>
    %396 = vector.broadcast %395 : vector<16x1xf32> to vector<16x64xf32>
    %397 = arith.mulf %386, %396 : vector<16x64xf32>
    %cst_146 = arith.constant 1.000000e+00 : f32
    %398 = vector.broadcast %cst_146 : f32 to vector<1x64xf32>
    %399 = arith.addf %398, %387 : vector<1x64xf32>
    %400 = vector.broadcast %399 : vector<1x64xf32> to vector<16x64xf32>
    %401 = arith.mulf %397, %400 : vector<16x64xf32>
    %402 = arith.truncf %401 : vector<16x64xf32> to vector<16x64xbf16>
    %c0_147 = arith.constant 0 : index
    %c0_148 = arith.constant 0 : index
    %403 = vector.load %arg11[%c0_147, %c0_148] : memref<64x256xbf16, #tpu.memory_space<vmem>>, vector<64x256xbf16>
    %cst_149 = arith.constant dense<0.000000e+00> : vector<16x256xf32>
    %404 = tpu.matmul %402, %403, %cst_149 {dimension_numbers = #tpu.dot_dimension_numbers<[1], [0], [0], [1], [0, 0, 1, 1], [], []>} : vector<16x64xbf16>, vector<64x256xbf16>, vector<16x256xf32> -> vector<16x256xf32>
    %405 = vector.extract_strided_slice %404 {offsets = [0, 0], sizes = [16, 128], strides = [1, 1]} : vector<16x256xf32> to vector<16x128xf32>
    %406 = arith.mulf %405, %405 : vector<16x128xf32>
    %407 = arith.mulf %405, %406 : vector<16x128xf32>
    %cst_150 = arith.constant 4.471500e-02 : f32
    %408 = vector.broadcast %cst_150 : f32 to vector<16x128xf32>
    %409 = arith.mulf %408, %407 : vector<16x128xf32>
    %410 = arith.addf %405, %409 : vector<16x128xf32>
    %cst_151 = arith.constant 0.797884583 : f32
    %411 = vector.broadcast %cst_151 : f32 to vector<16x128xf32>
    %412 = arith.mulf %411, %410 : vector<16x128xf32>
    %413 = math.tanh %412 : vector<16x128xf32>
    %cst_152 = arith.constant 1.000000e+00 : f32
    %414 = vector.broadcast %cst_152 : f32 to vector<16x128xf32>
    %415 = arith.addf %414, %413 : vector<16x128xf32>
    %cst_153 = arith.constant 5.000000e-01 : f32
    %416 = vector.broadcast %cst_153 : f32 to vector<16x128xf32>
    %417 = arith.mulf %416, %415 : vector<16x128xf32>
    %418 = arith.mulf %405, %417 : vector<16x128xf32>
    %419 = vector.extract_strided_slice %404 {offsets = [0, 128], sizes = [16, 128], strides = [1, 1]} : vector<16x256xf32> to vector<16x128xf32>
    %420 = arith.mulf %418, %419 : vector<16x128xf32>
    %421 = arith.truncf %420 : vector<16x128xf32> to vector<16x128xbf16>
    %c0_154 = arith.constant 0 : index
    %c0_155 = arith.constant 0 : index
    %422 = vector.load %arg12[%c0_154, %c0_155] : memref<128x64xbf16, #tpu.memory_space<vmem>>, vector<128x64xbf16>
    %cst_156 = arith.constant dense<0.000000e+00> : vector<16x64xf32>
    %423 = tpu.matmul %421, %422, %cst_156 {dimension_numbers = #tpu.dot_dimension_numbers<[1], [0], [0], [1], [0, 0, 1, 1], [], []>} : vector<16x128xbf16>, vector<128x64xbf16>, vector<16x64xf32> -> vector<16x64xf32>
    %c3_157 = arith.constant 3 : index
    %c0_158 = arith.constant 0 : index
    %424 = vector.load %arg8[%c3_157, %c0_158] : memref<4x64xf32, #tpu.memory_space<vmem>>, vector<1x64xf32>
    %425 = arith.mulf %423, %423 : vector<16x64xf32>
    %cst_159 = arith.constant dense<0.000000e+00> : vector<16xf32>
    %426 = vector.multi_reduction <add>, %425, %cst_159 [1] : vector<16x64xf32> to vector<16xf32>
    %427 = vector.shape_cast %426 : vector<16xf32> to vector<16x1xf32>
    %cst_160 = arith.constant 6.400000e+01 : f32
    %428 = vector.broadcast %cst_160 : f32 to vector<16x1xf32>
    %429 = arith.divf %427, %428 : vector<16x1xf32>
    %cst_161 = arith.constant 9.99999997E-7 : f32
    %430 = vector.broadcast %cst_161 : f32 to vector<16x1xf32>
    %431 = arith.addf %429, %430 : vector<16x1xf32>
    %432 = math.rsqrt %431 : vector<16x1xf32>
    %433 = vector.broadcast %432 : vector<16x1xf32> to vector<16x64xf32>
    %434 = arith.mulf %423, %433 : vector<16x64xf32>
    %cst_162 = arith.constant 1.000000e+00 : f32
    %435 = vector.broadcast %cst_162 : f32 to vector<1x64xf32>
    %436 = arith.addf %435, %424 : vector<1x64xf32>
    %437 = vector.broadcast %436 : vector<1x64xf32> to vector<16x64xf32>
    %438 = arith.mulf %434, %437 : vector<16x64xf32>
    %439 = arith.addf %386, %438 : vector<16x64xf32>
    %c0_163 = arith.constant 0 : index
    %c0_164 = arith.constant 0 : index
    %440 = vector.load %arg13[%c0_163, %c0_164] : memref<1x64xf32, #tpu.memory_space<vmem>>, vector<1x64xf32>
    %441 = arith.mulf %439, %439 : vector<16x64xf32>
    %cst_165 = arith.constant dense<0.000000e+00> : vector<16xf32>
    %442 = vector.multi_reduction <add>, %441, %cst_165 [1] : vector<16x64xf32> to vector<16xf32>
    %443 = vector.shape_cast %442 : vector<16xf32> to vector<16x1xf32>
    %cst_166 = arith.constant 6.400000e+01 : f32
    %444 = vector.broadcast %cst_166 : f32 to vector<16x1xf32>
    %445 = arith.divf %443, %444 : vector<16x1xf32>
    %cst_167 = arith.constant 9.99999997E-7 : f32
    %446 = vector.broadcast %cst_167 : f32 to vector<16x1xf32>
    %447 = arith.addf %445, %446 : vector<16x1xf32>
    %448 = math.rsqrt %447 : vector<16x1xf32>
    %449 = vector.broadcast %448 : vector<16x1xf32> to vector<16x64xf32>
    %450 = arith.mulf %439, %449 : vector<16x64xf32>
    %cst_168 = arith.constant 1.000000e+00 : f32
    %451 = vector.broadcast %cst_168 : f32 to vector<1x64xf32>
    %452 = arith.addf %451, %440 : vector<1x64xf32>
    %453 = vector.broadcast %452 : vector<1x64xf32> to vector<16x64xf32>
    %454 = arith.mulf %450, %453 : vector<16x64xf32>
    %455 = arith.truncf %454 : vector<16x64xf32> to vector<16x64xbf16>
    %c0_169 = arith.constant 0 : index
    %c0_170 = arith.constant 0 : index
    %456 = vector.load %arg14[%c0_169, %c0_170] : memref<16x64xbf16, #tpu.memory_space<vmem>>, vector<16x64xbf16>
    tpu.vector_store %arg14[%c0_169, %c0_170], %455 {strides = array<i32>} : memref<16x64xbf16, #tpu.memory_space<vmem>>, vector<16x64xbf16>,
    return
  }
}

</mosaic_0001>

<llo_original>
// kernel: tile.39
$region0: #{tile.39}
  %s0 = inlined_call_operand.vmem [shape: f32[8,2,16], index: 0, kind: input, shape index: {}]
  %s1 = inlined_call_operand.vmem [shape: f32[8,32], index: 1, kind: output, shape index: {}]
  $region1: #{tile.39} parent=0
    #allocation0 [shape = 'u8[32768]{0}', space=vmem, size = 0x8000, scoped, tag = 'scoped mem for input reshape']
    %s3 = ssub.s32 4, 1
    %s4 = scalar_lea.vmem %s0, 14
    %v5 = vld [vmem:[%s4] sm:%s3]
    %s6 = scalar_lea.vmem [#allocation0], 56
    %7 = vst [vmem:[%s6] sm:%s3] %v5
    %s8 = scalar_lea.vmem %s0, 12
    %v9 = vld [vmem:[%s8] sm:%s3]
    %s10 = scalar_lea.vmem [#allocation0], 48
    %11 = vst [vmem:[%s10] sm:%s3] %v9
    %s12 = scalar_lea.vmem %s0, 10
    %v13 = vld [vmem:[%s12] sm:%s3]
    %s14 = scalar_lea.vmem [#allocation0], 40
    %15 = vst [vmem:[%s14] sm:%s3] %v13
    %s16 = scalar_lea.vmem %s0, 8
    %v17 = vld [vmem:[%s16] sm:%s3]
    %s18 = scalar_lea.vmem [#allocation0], 32
    %19 = vst [vmem:[%s18] sm:%s3] %v17
    %s20 = scalar_lea.vmem %s0, 6
    %v21 = vld [vmem:[%s20] sm:%s3]
    %s22 = scalar_lea.vmem [#allocation0], 24
    %23 = vst [vmem:[%s22] sm:%s3] %v21
    %s24 = scalar_lea.vmem %s0, 4
    %v25 = vld [vmem:[%s24] sm:%s3]
    %s26 = scalar_lea.vmem [#allocation0], 16
    %27 = vst [vmem:[%s26] sm:%s3] %v25
    %s28 = scalar_lea.vmem %s0, 2
    %v29 = vld [vmem:[%s28] sm:%s3]
    %s30 = scalar_lea.vmem [#allocation0], 8
    %31 = vst [vmem:[%s30] sm:%s3] %v29
    %v32 = vld [vmem:[%s0] sm:%s3]
    %33 = vst [vmem:[#allocation0] sm:%s3] %v32
    %v34 = vld [vmem:[#allocation0] ss:$8 sm:$0xf]
    %v35 = vld [vmem:[#allocation0] ss:$8 sm:$0xf0]
    %vm36 = vcmask 1047556
    %v37 = vsel %vm36, %v35, %v34
    %vm38 = vcmask 130048
    %39 = vst.msk [vmem:[%s1] sm:$0xff] %vm38, %v37
    %s40 = scalar_lea.vmem [#allocation0], 1
    %v41 = vld [vmem:[%s40] ss:$8 sm:$0xf]
    %s42 = scalar_lea.vmem [#allocation0], 1
    %v43 = vld [vmem:[%s42] ss:$8 sm:$0xf0]
    %vm44 = vcmask 1047556
    %v45 = vsel %vm44, %v43, %v41
    %46 = vrot.lane.b32.xlu0 %v45, 16
    %v47 = vpop.permute.xlu0 %46
    %vm48 = vcmask 261248
    %49 = vst.msk [vmem:[%s1] sm:$0xff] %vm48, %v47

// kernel: tile.34
$region0: #{tile.34}
  %s0 = inlined_call_operand.vmem [shape: f32[8,4,16], index: 0, kind: input, shape index: {}]
  %s1 = inlined_call_operand.vmem [shape: f32[8,64], index: 1, kind: output, shape index: {}]
  $region1: #{tile.34} parent=0
    #allocation0 [shape = 'u8[32768]{0}', space=vmem, size = 0x8000, scoped, tag = 'scoped mem for input reshape']
    %s3 = ssub.s32 16, 1
    %s4 = scalar_lea.vmem %s0, 28
    %v5 = vld [vmem:[%s4] sm:%s3]
    %s6 = scalar_lea.vmem [#allocation0], 56
    %7 = vst [vmem:[%s6] sm:%s3] %v5
    %s8 = scalar_lea.vmem %s0, 24
    %v9 = vld [vmem:[%s8] sm:%s3]
    %s10 = scalar_lea.vmem [#allocation0], 48
    %11 = vst [vmem:[%s10] sm:%s3] %v9
    %s12 = scalar_lea.vmem %s0, 20
    %v13 = vld [vmem:[%s12] sm:%s3]
    %s14 = scalar_lea.vmem [#allocation0], 40
    %15 = vst [vmem:[%s14] sm:%s3] %v13
    %s16 = scalar_lea.vmem %s0, 16
    %v17 = vld [vmem:[%s16] sm:%s3]
    %s18 = scalar_lea.vmem [#allocation0], 32
    %19 = vst [vmem:[%s18] sm:%s3] %v17
    %s20 = scalar_lea.vmem %s0, 12
    %v21 = vld [vmem:[%s20] sm:%s3]
    %s22 = scalar_lea.vmem [#allocation0], 24
    %23 = vst [vmem:[%s22] sm:%s3] %v21
    %s24 = scalar_lea.vmem %s0, 8
    %v25 = vld [vmem:[%s24] sm:%s3]
    %s26 = scalar_lea.vmem [#allocation0], 16
    %27 = vst [vmem:[%s26] sm:%s3] %v25
    %s28 = scalar_lea.vmem %s0, 4
    %v29 = vld [vmem:[%s28] sm:%s3]
    %s30 = scalar_lea.vmem [#allocation0], 8
    %31 = vst [vmem:[%s30] sm:%s3] %v29
    %v32 = vld [vmem:[%s0] sm:%s3]
    %33 = vst [vmem:[#allocation0] sm:%s3] %v32
    %v34 = vld [vmem:[#allocation0] ss:$8 sm:$0xf]
    %v35 = vld [vmem:[#allocation0] ss:$8 sm:$0xf0]
    %vm36 = vcmask 1047556
    %v37 = vsel %vm36, %v35, %v34
    %vm38 = vcmask 130048
    %39 = vst.msk [vmem:[%s1] sm:$0xff] %vm38, %v37
    %s40 = scalar_lea.vmem [#allocation0], 3
    %v41 = vld [vmem:[%s40] ss:$8 sm:$0xf]
    %s42 = scalar_lea.vmem [#allocation0], 3
    %v43 = vld [vmem:[%s42] ss:$8 sm:$0xf0]
    %vm44 = vcmask 1047556
    %v45 = vsel %vm44, %v43, %v41
    %46 = vrot.lane.b32.xlu0 %v45, 48
    %v47 = vpop.permute.xlu0 %46
    %vm48 = vcmask 523648
    %49 = vst.msk [vmem:[%s1] sm:$0xff] %vm48, %v47
    %s50 = scalar_lea.vmem [#allocation0], 2
    %v51 = vld [vmem:[%s50] ss:$8 sm:$0xf]
    %s52 = scalar_lea.vmem [#allocation0], 2
    %v53 = vld [vmem:[%s52] ss:$8 sm:$0xf0]
    %vm54 = vcmask 1047556
    %v55 = vsel %vm54, %v53, %v51
    %56 = vrot.lane.b32.xlu0 %v55, 32
    %v57 = vpop.permute.xlu0 %56
    %vm58 = vcmask 392448
    %59 = vst.msk [vmem:[%s1] sm:$0xff] %vm58, %v57
    %s60 = scalar_lea.vmem [#allocation0], 1
    %v61 = vld [vmem:[%s60] ss:$8 sm:$0xf]
    %s62 = scalar_lea.vmem [#allocation0], 1
    %v63 = vld [vmem:[%s62] ss:$8 sm:$0xf0]
    %vm64 = vcmask 1047556
    %v65 = vsel %vm64, %v63, %v61
    %66 = vrot.lane.b32.xlu0 %v65, 16
    %v67 = vpop.permute.xlu0 %66
    %vm68 = vcmask 261248
    %69 = vst.msk [vmem:[%s1] sm:$0xff] %vm68, %v67

// kernel: _lambda_.3
$region0: #{_lambda_.3}
  #allocation0 [shape = 'u32[]', space=smem, size = 0x4, offset = 0x4, fixed_abs, tag = 'smem constant byte address 0x4 - core index']
  #allocation1 [shape = 'u32[72,128]{1,0:T(1,128)}', space=vmem, size = 0x9000, scoped, tag = 'internal scratch']
  %s0 = inlined_call_operand.vmem [shape: bf16[16,64], index: 0, kind: input, shape index: {}]
  %s1 = inlined_call_operand.vmem [shape: bf16[256,64], index: 1, kind: input, shape index: {}]
  %s2 = inlined_call_operand.hbm [shape: f32[16,256], index: 2, kind: output, shape index: {}]
  %s3 = sld [smem:[#allocation0]]
  $region41: #{_lambda_.3} parent=0
    _
  %s5 = ssub.s32 1, %s3
  %s6 = scalar_select 0, %s5, %s3
  $region1: #{_lambda_.3} parent=0
    #allocation2 [shape = 'u8[16384]{0}', space=vmem, size = 0x4000, scoped, tag = 'output window, operand 0']
    #allocation3 [shape = 's32[2]{0}', space=sflag, size = 0x8, scoped, tag = 'scoped memory for _lambda_.3']
    %7 = vsyncpa [#allocation3], 0
    %s8 = scalar_lea.sflag [#allocation3], 1
    %9 = vsyncpa %s8, 0
    loop: start=0, step=1, limit=4
    $region2: #{_lambda_.3} parent=1 // loop_pre_header
      _
    $region3: #{_lambda_.3} parent=1 // loop_header
      %s11 = sphi 0, %s15
      %p12 = scmp.ge.s32.totalorder %s11, 4
      %s19 = sphi 0, %s19
      %s21 = sphi 0, %s19
      %s22 = sphi 0, %s21
      %s36 = sphi 0, %s22
      %s42 = sphi 0, %s44
      %s45 = sphi 0, %s42
      %s46 = sphi 0, %s45
      %s62 = sphi 0, %s46
      %s68 = sphi 0, %s70
      %s71 = sphi 0, %s68
      %s72 = sphi 0, %s71
      %s88 = sphi 0, %s72
    $region4: #{_lambda_.3} parent=1 // loop_header_branch
      %14 = sbr.rel (%p12) target = $region8
    $region5: #{_lambda_.3} parent=1 // loop_body
      %s16 = ssub.s32 %s11, 1
      %s17 = ssub.s32 %s11, 2
      %s18 = sadd.s32 %s11, 1
      %s20 = sadd.s32 %s19, 1
      %p23 = scmp.eq.s32.totalorder %s11, 1
      %p24 = scmp.ne.s32.totalorder %s19, %s21
      %p25 = scmp.eq.s32.totalorder %s11, 0
      %p26 = por %p24, %p25
      %p27 = scmp.ne.s32.totalorder %s19, %s21
      %p28 = scmp.eq.s32.totalorder %s16, 1
      %p29 = por %p27, %p28
      %p30 = scmp.ne.s32.totalorder %s21, %s22
      %p31 = scmp.eq.s32.totalorder %s16, 0
      %p32 = por %p30, %p31
      %p33 = scmp.ne.s32.totalorder %s21, %s22
      %p34 = scmp.eq.s32.totalorder %s17, 1
      %p35 = por %p33, %p34
      %p37 = scmp.ne.s32.totalorder %s22, %s36
      %p38 = scmp.eq.s32.totalorder %s17, 0
      %p39 = por %p37, %p38
      %s40 = ssub.s32 %s11, %s18
      %p41 = scmp.eq.s32.totalorder %s40, 0
      %s43 = sadd.s32 %s42, 1
      %s44 = scalar_select %p41, %s42, %s43
      %p47 = pneg %p41
      %p48 = scmp.eq.s32.totalorder %s11, 1
      %p49 = por %p47, %p48
      %p50 = scmp.ne.s32.totalorder %s42, %s45
      %p51 = scmp.eq.s32.totalorder %s11, 0
      %p52 = por %p50, %p51
      %p53 = scmp.ne.s32.totalorder %s42, %s45
      %p54 = scmp.eq.s32.totalorder %s16, 1
      %p55 = por %p53, %p54
      %p56 = scmp.ne.s32.totalorder %s45, %s46
      %p57 = scmp.eq.s32.totalorder %s16, 0
      %p58 = por %p56, %p57
      %p59 = scmp.ne.s32.totalorder %s45, %s46
      %p60 = scmp.eq.s32.totalorder %s17, 1
      %p61 = por %p59, %p60
      %p63 = scmp.ne.s32.totalorder %s46, %s62
      %p64 = scmp.eq.s32.totalorder %s17, 0
      %p65 = por %p63, %p64
      %s66 = ssub.s32 %s11, %s18
      %p67 = scmp.eq.s32.totalorder %s66, 0
      %s69 = sadd.s32 %s68, 1
      %s70 = scalar_select %p67, %s68, %s69
      %p73 = pneg %p67
      %p74 = scmp.eq.s32.totalorder %s11, 1
      %p75 = por %p73, %p74
      %p76 = scmp.ne.s32.totalorder %s68, %s71
      %p77 = scmp.eq.s32.totalorder %s11, 0
      %p78 = por %p76, %p77
      %p79 = scmp.ne.s32.totalorder %s68, %s71
      %p80 = scmp.eq.s32.totalorder %s16, 1
      %p81 = por %p79, %p80
      %p82 = scmp.ne.s32.totalorder %s71, %s72
      %p83 = scmp.eq.s32.totalorder %s16, 0
      %p84 = por %p82, %p83
      %p85 = scmp.ne.s32.totalorder %s71, %s72
      %p86 = scmp.eq.s32.totalorder %s17, 1
      %p87 = por %p85, %p86
      %p89 = scmp.ne.s32.totalorder %s72, %s88
      %p90 = scmp.eq.s32.totalorder %s17, 0
      %p91 = por %p89, %p90
      %p92 = scmp.le.s32.totalorder 1, %s11
      %p93 = scmp.lt.s32.totalorder %s11, 3
      %p94 = pnand %p92, %p93
      %p95 = pneg %p94
      // Predicated region
      $region9: #{_lambda_.3} parent=5 // pred_check
        _
      $region10: #{_lambda_.3} parent=5 // pred_check_branch
        %97 = sbr.rel (%p94) target = $region12
      $region11: #{_lambda_.3} parent=5 // pred_region
        %s98 = ssub.s32 %s11, 1
        // Predicated region
        $region13: #{_lambda_.3} parent=11 // pred_check
          %p99 = pneg %p32
        $region14: #{_lambda_.3} parent=11 // pred_check_branch
          %101 = sbr.rel (%p99) target = $region16
        $region15: #{_lambda_.3} parent=11 // pred_region
          _
        $region16: #{_lambda_.3} parent=11 // pred_fallthru
          _
      $region12: #{_lambda_.3} parent=5 // pred_fallthru
        _
      %p102 = scmp.lt.s32.totalorder %s11, 2
      // Predicated region
      $region17: #{_lambda_.3} parent=5 // pred_check
        %p103 = pneg %p102
      $region18: #{_lambda_.3} parent=5 // pred_check_branch
        %105 = sbr.rel (%p103) target = $region20
      $region19: #{_lambda_.3} parent=5 // pred_region
        // Predicated region
        $region21: #{_lambda_.3} parent=19 // pred_check
          %p106 = pneg %p52
        $region22: #{_lambda_.3} parent=19 // pred_check_branch
          %108 = sbr.rel (%p106) target = $region24
        $region23: #{_lambda_.3} parent=19 // pred_region
          %s109 = smul.u32 16, %s11
          %p110 = scmp.lt.s32.totalorder %s109, 31
          %s111 = scalar_select %p110, %s109, 31
          %s112 = smul.addr %s111, 4
          %s113 = scalar_lea.vmem %s1, %s112
          %s114 = smul.u32 16, %s11
        $region24: #{_lambda_.3} parent=19 // pred_fallthru
          _
      $region20: #{_lambda_.3} parent=5 // pred_fallthru
        _
      %p115 = scmp.le.s32.totalorder 1, %s11
      %p116 = scmp.lt.s32.totalorder %s11, 3
      %p117 = pnand %p115, %p116
      %p118 = pneg %p117
      // Predicated region
      $region25: #{_lambda_.3} parent=5 // pred_check
        _
      $region26: #{_lambda_.3} parent=5 // pred_check_branch
        %120 = sbr.rel (%p117) target = $region28
      $region27: #{_lambda_.3} parent=5 // pred_region
        %s121 = ssub.s32 %s11, 1
        %p122 = pneg %p32
        %p123 = pneg %p29
        %s124 = smul.u32 16, %s16
        %p125 = scmp.lt.s32.totalorder %s124, 31
        %s126 = scalar_select %p125, %s124, 31
        %s127 = smul.addr %s126, 4
        %s128 = scalar_lea.vmem %s1, %s127
        %p129 = pneg %p58
        %p130 = pneg %p55
        %p131 = pneg %p84
        %p132 = pneg %p81
        %s133 = sand.u32 %s71, 1
        %s134 = scalar_lea.sflag [#allocation3], %s133
        %s135 = sand.u32 %s71, 1
        %s136 = smul.addr %s135, 16
        %s137 = scalar_lea.vmem [#allocation2], %s136
        %s138 = smul.u32 16, %s16
        %p139 = scmp.lt.s32.totalorder %s138, 31
        %s140 = scalar_select %p139, %s138, 31
        %s141 = smul.addr %s140, 4
        %s142 = scalar_lea.vmem %s1, %s141
        %s143 = smul.u32 16, %s16
        %v144 = vld [vmem:[%s0] sm:$0xf]
        %v145 = vld [vmem:[%s0 + $0x4] sm:$0xf]
        %v146 = vld [vmem:[%s142] sm:$0xf]
        %v147 = vld [vmem:[%s142 + $0x4] sm:$0xf]
        %v148 = vld [vmem:[%s142 + $0x8] sm:$0xf]
        %v149 = vld [vmem:[%s142 + $0xc] sm:$0xf]
        %v150 = vld [vmem:[%s142 + $0x10] sm:$0xf]
        %v151 = vld [vmem:[%s142 + $0x14] sm:$0xf]
        %v152 = vld [vmem:[%s142 + $0x18] sm:$0xf]
        %v153 = vld [vmem:[%s142 + $0x1c] sm:$0xf]
        %v154 = vld [vmem:[%s142 + $0x20] sm:$0xf]
        %v155 = vld [vmem:[%s142 + $0x24] sm:$0xf]
        %v156 = vld [vmem:[%s142 + $0x28] sm:$0xf]
        %v157 = vld [vmem:[%s142 + $0x2c] sm:$0xf]
        %v158 = vld [vmem:[%s142 + $0x30] sm:$0xf]
        %v159 = vld [vmem:[%s142 + $0x34] sm:$0xf]
        %v160 = vld [vmem:[%s142 + $0x38] sm:$0xf]
        %v161 = vld [vmem:[%s142 + $0x3c] sm:$0xf]
        %v164 = vunpack.c.l.b16 %v144
        %v165 = vunpack.c.l.b16 %v145
        %v166 = vpack.c.b16 %v165, %v164
        %v183 = vunpack.c.l.b16 %v146
        %v184 = vunpack.c.l.b16 %v147
        %v185 = vunpack.c.l.b16 %v148
        %v186 = vunpack.c.l.b16 %v149
        %v187 = vunpack.c.l.b16 %v150
        %v188 = vunpack.c.l.b16 %v151
        %v189 = vunpack.c.l.b16 %v152
        %v190 = vunpack.c.l.b16 %v153
        %v191 = vunpack.c.l.b16 %v154
        %v192 = vunpack.c.l.b16 %v155
        %v193 = vunpack.c.l.b16 %v156
        %v194 = vunpack.c.l.b16 %v157
        %v195 = vunpack.c.l.b16 %v158
        %v196 = vunpack.c.l.b16 %v159
        %v197 = vunpack.c.l.b16 %v160
        %v198 = vunpack.c.l.b16 %v161
        %v199 = vpack.c.b16 %v184, %v183
        %v200 = vpack.c.b16 %v186, %v185
        %v201 = vpack.c.b16 %v188, %v187
        %v202 = vpack.c.b16 %v190, %v189
        %v203 = vpack.c.b16 %v192, %v191
        %v204 = vpack.c.b16 %v194, %v193
        %v205 = vpack.c.b16 %v196, %v195
        %v206 = vpack.c.b16 %v198, %v197
        %vm207 = vcmask 523264
        %v209 = vsel %vm207, %v166, 0
        %v212 = vsel %vm207, %v199, 0
        %v215 = vsel %vm207, %v200, 0
        %v218 = vsel %vm207, %v201, 0
        %v221 = vsel %vm207, %v202, 0
        %v224 = vsel %vm207, %v203, 0
        %v227 = vsel %vm207, %v204, 0
        %v230 = vsel %vm207, %v205, 0
        %v233 = vsel %vm207, %v206, 0
        %235 = vmatpush.bf16.xpose.msra.mxu0 %v233
        %236 = vmatpush.bf16.xpose.msra.mxu0 %v230
        %237 = vmatpush.bf16.xpose.msra.mxu0 %v227
        %238 = vmatpush.bf16.xpose.msra.mxu0 %v224
        %239 = vmatpush.bf16.xpose.msra.mxu0 %v221
        %240 = vmatpush.bf16.xpose.msra.mxu0 %v218
        %241 = vmatpush.bf16.xpose.msra.mxu0 %v215
        %242 = vmatpush.bf16.xpose.msra.mxu0 %v212
        %243 = vmatmul.bf16.gmra.mxu0 %v209
        %v244 = vpop.f32.mrf.mxu0
        %v245 = vadd.f32 0.0, %v244
        %v246 = vpop.f32.mrf.mxu0
        %v247 = vadd.f32 0.0, %v246
        %248 = vdwg.mxu0
        %v249 = vrcp.pop 30.0
        %v250 = vmul.f32 30.0, %v249
        %v251 = vsub.f32 1.0, %v250
        %v252 = vmul.f32 %v249, %v251
        %v253 = vadd.f32 %v249, %v252
        %vm254 = vweird.f32 %v249
        %v255 = vsel %vm254, %v249, %v253
        %v256 = vmul.f32 %v245, %v255
        %v257 = vmul.f32 %v247, %v255
        %v258 = vtanh.pop %v256
        %v259 = vtanh.pop %v257
        %v260 = vmul.f32 %v258, 30.0
        %v261 = vmul.f32 %v259, 30.0
        %262 = vst [vmem:[%s137] sm:$0xff] %v260
        %263 = vst [vmem:[%s137 + $0x8] sm:$0xff] %v261
        %s264 = sand.u32 %s71, 1
        %s265 = scalar_lea.sflag [#allocation3], %s264
        %s266 = sand.u32 %s71, 1
        %s267 = smul.addr %s266, 16
        %s268 = scalar_lea.vmem [#allocation2], %s267
        // Predicated region
        $region29: #{_lambda_.3} parent=27 // pred_check
          %p269 = pneg %p81
        $region30: #{_lambda_.3} parent=27 // pred_check_branch
          %271 = sbr.rel (%p269) target = $region32
        $region31: #{_lambda_.3} parent=27 // pred_region
          %273 = vsyncadd %s265, 0
          %s274 = smul.addr %s16, 8
          %s275 = scalar_lea.hbm %s2, %s274
          %s276 = sshll.u32 %s268, 4
          %s277 = int_to_ptr.vmem [resolvable:$true] %s276
          %s278 = sshll.u32 %s275, 4
          %s279 = int_to_ptr.hbm [resolvable:$true] %s278
          %284 = dma.vmem_to_hbm [thread:$0]  %s277, 256, %s279, %s265, 128, 256, 8
        $region32: #{_lambda_.3} parent=27 // pred_fallthru
          _
      $region28: #{_lambda_.3} parent=5 // pred_fallthru
        _
      %p285 = scmp.le.s32.totalorder 2, %s11
      // Predicated region
      $region33: #{_lambda_.3} parent=5 // pred_check
        %p286 = pneg %p285
      $region34: #{_lambda_.3} parent=5 // pred_check_branch
        %288 = sbr.rel (%p286) target = $region36
      $region35: #{_lambda_.3} parent=5 // pred_region
        %s289 = ssub.s32 %s11, 2
        // Predicated region
        $region37: #{_lambda_.3} parent=35 // pred_check
          %p290 = pneg %p87
        $region38: #{_lambda_.3} parent=35 // pred_check_branch
          %292 = sbr.rel (%p290) target = $region40
        $region39: #{_lambda_.3} parent=35 // pred_region
          %s293 = sand.u32 %s72, 1
          %s294 = scalar_lea.sflag [#allocation3], %s293
          %s295 = sand.u32 %s72, 1
          %s296 = smul.addr %s295, 16
          %s297 = scalar_lea.vmem [#allocation2], %s296
          %299 = dma.done %s294, 256
        $region40: #{_lambda_.3} parent=35 // pred_fallthru
          _
      $region36: #{_lambda_.3} parent=5 // pred_fallthru
        _
    $region6: #{_lambda_.3} parent=1 // loop_footer
      %s15 = sadd.s32 1, %s11
    $region7: #{_lambda_.3} parent=1 // loop_footer_branch
      %10 = sbr.rel target = $region3
    $region8: #{_lambda_.3} parent=1 // loop_exit
      _
    %300 = vsyncpa [#allocation3], 1
    %s301 = scalar_lea.sflag [#allocation3], 1
    %302 = vsyncpa %s301, 1

// kernel: _lambda_.2
$region0: #{_lambda_.2}
  #allocation0 [shape = 'u32[]', space=smem, size = 0x4, offset = 0x4, fixed_abs, tag = 'smem constant byte address 0x4 - core index']
  #allocation1 [shape = 'u32[72,128]{1,0:T(1,128)}', space=vmem, size = 0x9000, scoped, tag = 'internal scratch']
  #allocation2 [shape = 'f32[16,64]{1,0:T(8,128)}', space=vmem, size = 0x2000, scoped, tag = 'scratch operand']
  %s0 = inlined_call_operand.vmem [shape: f32[16,64], index: 0, kind: input, shape index: {}]
  %s1 = inlined_call_operand.vmem [shape: f32[16,128], index: 1, kind: input, shape index: {}]
  %s2 = inlined_call_operand.vmem [shape: f32[16,128], index: 2, kind: input, shape index: {}]
  %s3 = inlined_call_operand.vmem [shape: f32[4,64], index: 3, kind: input, shape index: {}]
  %s4 = inlined_call_operand.vmem [shape: bf16[64,256], index: 4, kind: input, shape index: {}]
  %s5 = inlined_call_operand.vmem [shape: bf16[64,64], index: 5, kind: input, shape index: {}]
  %s6 = inlined_call_operand.vmem [shape: bf16[64,256], index: 6, kind: input, shape index: {}]
  %s7 = inlined_call_operand.vmem [shape: bf16[128,64], index: 7, kind: input, shape index: {}]
  %s8 = inlined_call_operand.vmem [shape: f32[4,64], index: 8, kind: input, shape index: {}]
  %s9 = inlined_call_operand.vmem [shape: bf16[64,256], index: 9, kind: input, shape index: {}]
  %s10 = inlined_call_operand.vmem [shape: bf16[64,64], index: 10, kind: input, shape index: {}]
  %s11 = inlined_call_operand.vmem [shape: bf16[64,256], index: 11, kind: input, shape index: {}]
  %s12 = inlined_call_operand.vmem [shape: bf16[128,64], index: 12, kind: input, shape index: {}]
  %s13 = inlined_call_operand.vmem [shape: f32[1,64], index: 13, kind: input, shape index: {}]
  %s14 = inlined_call_operand.vmem [shape: bf16[16,64], index: 14, kind: output, shape index: {}]
  %s15 = sld [smem:[#allocation0]]
  $region66: #{_lambda_.2} parent=0
    _
  %s17 = ssub.s32 1, %s15
  %s18 = scalar_select 0, %s17, %s15
  // Predicated region
  $region2: #{_lambda_.2} parent=0 // pred_check
    _
  $region3: #{_lambda_.2} parent=0 // pred_check_branch
    %20 = sbr.rel (0) target = $region5
  $region4: #{_lambda_.2} parent=0 // pred_region
    _
  $region5: #{_lambda_.2} parent=0 // pred_fallthru
    _
  // Predicated region
  $region6: #{_lambda_.2} parent=0 // pred_check
    _
  $region7: #{_lambda_.2} parent=0 // pred_check_branch
    %22 = sbr.rel (0) target = $region9
  $region8: #{_lambda_.2} parent=0 // pred_region
    _
  $region9: #{_lambda_.2} parent=0 // pred_fallthru
    _
  // Predicated region
  $region10: #{_lambda_.2} parent=0 // pred_check
    _
  $region11: #{_lambda_.2} parent=0 // pred_check_branch
    %24 = sbr.rel (0) target = $region13
  $region12: #{_lambda_.2} parent=0 // pred_region
    _
  $region13: #{_lambda_.2} parent=0 // pred_fallthru
    _
  // Predicated region
  $region14: #{_lambda_.2} parent=0 // pred_check
    _
  $region15: #{_lambda_.2} parent=0 // pred_check_branch
    %26 = sbr.rel (0) target = $region17
  $region16: #{_lambda_.2} parent=0 // pred_region
    _
  $region17: #{_lambda_.2} parent=0 // pred_fallthru
    _
  // Predicated region
  $region18: #{_lambda_.2} parent=0 // pred_check
    _
  $region19: #{_lambda_.2} parent=0 // pred_check_branch
    %28 = sbr.rel (0) target = $region21
  $region20: #{_lambda_.2} parent=0 // pred_region
    _
  $region21: #{_lambda_.2} parent=0 // pred_fallthru
    _
  // Predicated region
  $region22: #{_lambda_.2} parent=0 // pred_check
    _
  $region23: #{_lambda_.2} parent=0 // pred_check_branch
    %30 = sbr.rel (0) target = $region25
  $region24: #{_lambda_.2} parent=0 // pred_region
    _
  $region25: #{_lambda_.2} parent=0 // pred_fallthru
    _
  // Predicated region
  $region26: #{_lambda_.2} parent=0 // pred_check
    _
  $region27: #{_lambda_.2} parent=0 // pred_check_branch
    %32 = sbr.rel (0) target = $region29
  $region28: #{_lambda_.2} parent=0 // pred_region
    _
  $region29: #{_lambda_.2} parent=0 // pred_fallthru
    _
  // Predicated region
  $region30: #{_lambda_.2} parent=0 // pred_check
    _
  $region31: #{_lambda_.2} parent=0 // pred_check_branch
    %34 = sbr.rel (0) target = $region33
  $region32: #{_lambda_.2} parent=0 // pred_region
    _
  $region33: #{_lambda_.2} parent=0 // pred_fallthru
    _
  // Predicated region
  $region34: #{_lambda_.2} parent=0 // pred_check
    _
  $region35: #{_lambda_.2} parent=0 // pred_check_branch
    %36 = sbr.rel (0) target = $region37
  $region36: #{_lambda_.2} parent=0 // pred_region
    _
  $region37: #{_lambda_.2} parent=0 // pred_fallthru
    _
  // Predicated region
  $region38: #{_lambda_.2} parent=0 // pred_check
    _
  $region39: #{_lambda_.2} parent=0 // pred_check_branch
    %38 = sbr.rel (0) target = $region41
  $region40: #{_lambda_.2} parent=0 // pred_region
    _
  $region41: #{_lambda_.2} parent=0 // pred_fallthru
    _
  // Predicated region
  $region42: #{_lambda_.2} parent=0 // pred_check
    _
  $region43: #{_lambda_.2} parent=0 // pred_check_branch
    %40 = sbr.rel (0) target = $region45
  $region44: #{_lambda_.2} parent=0 // pred_region
    _
  $region45: #{_lambda_.2} parent=0 // pred_fallthru
    _
  // Predicated region
  $region46: #{_lambda_.2} parent=0 // pred_check
    _
  $region47: #{_lambda_.2} parent=0 // pred_check_branch
    %42 = sbr.rel (0) target = $region49
  $region48: #{_lambda_.2} parent=0 // pred_region
    _
  $region49: #{_lambda_.2} parent=0 // pred_fallthru
    _
  // Predicated region
  $region50: #{_lambda_.2} parent=0 // pred_check
    _
  $region51: #{_lambda_.2} parent=0 // pred_check_branch
    %44 = sbr.rel (0) target = $region53
  $region52: #{_lambda_.2} parent=0 // pred_region
    _
  $region53: #{_lambda_.2} parent=0 // pred_fallthru
    _
  // Predicated region
  $region54: #{_lambda_.2} parent=0 // pred_check
    _
  $region55: #{_lambda_.2} parent=0 // pred_check_branch
    %46 = sbr.rel (0) target = $region57
  $region56: #{_lambda_.2} parent=0 // pred_region
    _
  $region57: #{_lambda_.2} parent=0 // pred_fallthru
    _
  %v48 = vlaneseq
  %v49 = vshrl.u32 %v48, 7
  %v50 = vadd.s32 %v49, 8
  %v51 = vcvt.s32.f32 %v49
  %v52 = vcvt.s32.f32 %v50
  %v53 = vlaneseq
  %v54 = vand.u32 %v53, 127
  %v55 = vcvt.s32.f32 %v54
  %v56 = vmul.f32 %v51, 0.125
  %v57 = vmul.f32 %v52, 0.125
  %v58 = vfloor.f32 %v56
  %v59 = vfloor.f32 %v57
  %v60 = vmul.f32 %v55, 0.125
  %v61 = vfloor.f32 %v60
  %v62 = vmul.f32 %v58, 8.0
  %v63 = vmul.f32 %v59, 8.0
  %v64 = vsub.f32 %v51, %v62
  %v65 = vsub.f32 %v52, %v63
  %v66 = vmul.f32 %v61, 8.0
  %v67 = vsub.f32 %v55, %v66
  %vm68 = vcmp.eq.f32.partialorder %v58, %v61
  %vm69 = vcmp.eq.f32.partialorder %v59, %v61
  %vm70 = vcmp.le.f32.partialorder %v67, %v64
  %vm71 = vcmp.le.f32.partialorder %v67, %v65
  %vm72 = vmand %vm68, %vm70
  %vm73 = vmand %vm69, %vm71
  %v74 = vsub.f32 %v64, %v67
  %v75 = vsub.f32 %v65, %v67
  %vm76 = vcmp.le.f32.partialorder %v74, 3.0
  %vm77 = vcmp.le.f32.partialorder %v75, 3.0
  %vm78 = vmand %vm72, %vm76
  %vm79 = vmand %vm73, %vm77
  %v80 = vsel %vm72, 0.0, -2.3819763e+38
  %v81 = vsel %vm73, 0.0, -2.3819763e+38
  %v82 = vsel %vm78, 0.0, -2.3819763e+38
  %v83 = vsel %vm79, 0.0, -2.3819763e+38
  %v84 = vld [vmem:[%s1] sm:$0xff]
  %v85 = vld [vmem:[%s1 + $0x8] sm:$0xff]
  %v86 = vld [vmem:[%s2] sm:$0xff]
  %v87 = vld [vmem:[%s2 + $0x8] sm:$0xff]
  %v88 = vld [vmem:[%s0] sm:$0xff]
  %v89 = vld [vmem:[%s0 + $0x8] sm:$0xff]
  %v90 = vld [vmem:[%s3] sm:$0x1]
  %v91 = vmul.f32 %v88, %v88
  %v92 = vmul.f32 %v89, %v89
  %vm93 = vcmask 523264
  %v94 = vsel %vm93, %v91, 0.0
  %95 = vadd.xlane.f32.xlu0 %v94
  %v96 = vpop.xlane.xlu0 %95
  %v97 = vsel %vm93, %v92, 0.0
  %98 = vadd.xlane.f32.xlu0 %v97
  %v99 = vpop.xlane.xlu0 %98
  %v100 = vrcp.pop 64.0
  %v101 = vmul.f32 64.0, %v100
  %v102 = vsub.f32 1.0, %v101
  %v103 = vmul.f32 %v100, %v102
  %v104 = vadd.f32 %v100, %v103
  %vm105 = vweird.f32 %v100
  %v106 = vsel %vm105, %v100, %v104
  %v107 = vmul.f32 %v96, %v106
  %v108 = vmul.f32 %v99, %v106
  %v109 = vadd.f32 %v107, 1e-06
  %v110 = vadd.f32 %v108, 1e-06
  %v111 = vrsqrt.pop %v109
  %v112 = vmul.f32 %v111, %v109
  %v113 = vmul.f32 %v112, %v111
  %v114 = vmul.f32 0.5, %v113
  %v115 = vsub.f32 1.5, %v114
  %v116 = vmul.f32 %v111, %v115
  %vm117 = vweird.f32 %v109
  %vm118 = vweird.f32 %v111
  %vm119 = vmor %vm117, %vm118
  %v120 = vsel %vm119, %v111, %v116
  %v121 = vrsqrt.pop %v110
  %v122 = vmul.f32 %v121, %v110
  %v123 = vmul.f32 %v122, %v121
  %v124 = vmul.f32 0.5, %v123
  %v125 = vsub.f32 1.5, %v124
  %v126 = vmul.f32 %v121, %v125
  %vm127 = vweird.f32 %v110
  %vm128 = vweird.f32 %v121
  %vm129 = vmor %vm127, %vm128
  %v130 = vsel %vm129, %v121, %v126
  %v131 = vmul.f32 %v88, %v120
  %v132 = vmul.f32 %v89, %v130
  %v133 = vadd.f32 %v90, 1.0
  %v134 = vperm.slane %v133, 0
  %v135 = vmul.f32 %v131, %v134
  %v136 = vmul.f32 %v132, %v134
  %v137 = vpack.c.bf16 %v136, %v135
  %v138 = vld [vmem:[%s4] sm:$0xff]
  %v139 = vld [vmem:[%s4 + $0x8] sm:$0xff]
  %v140 = vld [vmem:[%s4 + $0x10] sm:$0xff]
  %v141 = vld [vmem:[%s4 + $0x18] sm:$0xff]
  %v142 = vld [vmem:[%s4 + $0x20] sm:$0xff]
  %v143 = vld [vmem:[%s4 + $0x28] sm:$0xff]
  %v144 = vld [vmem:[%s4 + $0x30] sm:$0xff]
  %v145 = vld [vmem:[%s4 + $0x38] sm:$0xff]
  %v154 = vunpack.c.l.b16 %v138
  %v155 = vunpack.c.h.b16 %v138
  %v156 = vunpack.c.l.b16 %v139
  %v157 = vunpack.c.h.b16 %v139
  %v158 = vunpack.c.l.b16 %v140
  %v159 = vunpack.c.h.b16 %v140
  %v160 = vunpack.c.l.b16 %v141
  %v161 = vunpack.c.h.b16 %v141
  %v162 = vunpack.c.l.b16 %v142
  %v163 = vunpack.c.h.b16 %v142
  %v164 = vunpack.c.l.b16 %v143
  %v165 = vunpack.c.h.b16 %v143
  %v166 = vunpack.c.l.b16 %v144
  %v167 = vunpack.c.h.b16 %v144
  %v168 = vunpack.c.l.b16 %v145
  %v169 = vunpack.c.h.b16 %v145
  %v170 = vpack.c.b16 %v156, %v154
  %v171 = vpack.c.b16 %v157, %v155
  %v172 = vpack.c.b16 %v160, %v158
  %v173 = vpack.c.b16 %v161, %v159
  %v174 = vpack.c.b16 %v164, %v162
  %v175 = vpack.c.b16 %v165, %v163
  %v176 = vpack.c.b16 %v168, %v166
  %v177 = vpack.c.b16 %v169, %v167
  %v187 = vsel %vm93, %v137, 0
  %189 = vmatpush.bf16.msra.mxu0 0
  %190 = vmatpush.bf16.msra.mxu0 0
  %191 = vmatpush.bf16.msra.mxu0 0
  %192 = vmatpush.bf16.msra.mxu0 0
  %193 = vmatpush.bf16.msra.mxu0 %v176
  %194 = vmatpush.bf16.msra.mxu0 %v174
  %195 = vmatpush.bf16.msra.mxu0 %v172
  %196 = vmatpush.bf16.msra.mxu0 %v170
  %197 = vmatmul.bf16.gmra.mxu0 %v187
  %v198 = vpop.f32.mrf.mxu0
  %v199 = vadd.f32 0.0, %v198
  %v200 = vpop.f32.mrf.mxu0
  %v201 = vadd.f32 0.0, %v200
  %202 = vdwg.mxu0
  %203 = vmatpush.bf16.msra.mxu0 0
  %204 = vmatpush.bf16.msra.mxu0 0
  %205 = vmatpush.bf16.msra.mxu0 0
  %206 = vmatpush.bf16.msra.mxu0 0
  %207 = vmatpush.bf16.msra.mxu0 %v177
  %208 = vmatpush.bf16.msra.mxu0 %v175
  %209 = vmatpush.bf16.msra.mxu0 %v173
  %210 = vmatpush.bf16.msra.mxu0 %v171
  %211 = vmatmul.bf16.gmra.mxu0 %v187
  %v212 = vpop.f32.mrf.mxu0
  %v213 = vadd.f32 0.0, %v212
  %v214 = vpop.f32.mrf.mxu0
  %v215 = vadd.f32 0.0, %v214
  %216 = vdwg.mxu0
  %v217 = vmul.f32 %v199, %v84
  %v218 = vmul.f32 %v201, %v85
  %v219 = vmul.f32 %v213, %v86
  %v220 = vmul.f32 %v215, %v87
  %v221 = vadd.f32 %v217, %v219
  %v222 = vadd.f32 %v218, %v220
  %v223 = vpack.c.bf16 %v222, %v221
  %225 = vrot.lane.b32.xlu0 %v223, 64
  %v226 = vpop.permute.xlu0 %225
  %vm227 = vcmask 130048
  %v229 = vsel %vm227, %v223, 0
  %v232 = vsel %vm227, %v226, 0
  %234 = vmatpush.bf16.xpose.msra.mxu0 0
  %235 = vmatpush.bf16.xpose.msra.mxu0 0
  %236 = vmatpush.bf16.xpose.msra.mxu0 0
  %237 = vmatpush.bf16.xpose.msra.mxu0 0
  %238 = vmatpush.bf16.xpose.msra.mxu0 0
  %239 = vmatpush.bf16.xpose.msra.mxu0 0
  %240 = vmatpush.bf16.xpose.msra.mxu0 0
  %241 = vmatpush.bf16.xpose.msra.mxu0 %v232
  %242 = vmatmul.bf16.gmra.mxu0 %v229
  %v243 = vpop.f32.mrf.mxu0
  %v244 = vadd.f32 0.0, %v243
  %v245 = vpop.f32.mrf.mxu0
  %v246 = vadd.f32 0.0, %v245
  %247 = vdwg.mxu0
  %v248 = vmul.f32 %v244, 0.25
  %v249 = vmul.f32 %v246, 0.25
  %v250 = vrcp.pop 50.0
  %v251 = vmul.f32 50.0, %v250
  %v252 = vsub.f32 1.0, %v251
  %v253 = vmul.f32 %v250, %v252
  %v254 = vadd.f32 %v250, %v253
  %vm255 = vweird.f32 %v250
  %v256 = vsel %vm255, %v250, %v254
  %v257 = vmul.f32 %v248, %v256
  %v258 = vmul.f32 %v249, %v256
  %v259 = vtanh.pop %v257
  %v260 = vtanh.pop %v258
  %v261 = vmul.f32 %v259, 50.0
  %v262 = vmul.f32 %v260, 50.0
  %v263 = vadd.f32 %v261, %v80
  %v264 = vadd.f32 %v262, %v81
  %v265 = vsel %vm227, %v263, -inf
  %266 = vmax.xlane.f32.xlu0 %v265
  %v267 = vpop.xlane.xlu0 %266
  %v268 = vsel %vm227, %v264, -inf
  %269 = vmax.xlane.f32.xlu0 %v268
  %v270 = vpop.xlane.xlu0 %269
  %v271 = vsub.f32 %v263, %v267
  %v272 = vsub.f32 %v264, %v270
  %v273 = vmul.f32 %v271, 1.442695
  %v274 = vpow.pop %v273
  %v275 = vmul.f32 %v272, 1.442695
  %v276 = vpow.pop %v275
  %v277 = vsel %vm227, %v274, 0.0
  %278 = vadd.xlane.f32.xlu0 %v277
  %v279 = vpop.xlane.xlu0 %278
  %v280 = vsel %vm227, %v276, 0.0
  %281 = vadd.xlane.f32.xlu0 %v280
  %v282 = vpop.xlane.xlu0 %281
  %v283 = vrcp.pop %v279
  %v284 = vmul.f32 %v279, %v283
  %v285 = vsub.f32 1.0, %v284
  %v286 = vmul.f32 %v283, %v285
  %v287 = vadd.f32 %v283, %v286
  %vm288 = vweird.f32 %v279
  %vm289 = vweird.f32 %v283
  %vm290 = vmor %vm288, %vm289
  %v291 = vsel %vm290, %v283, %v287
  %v292 = vand.u32 2147483647, %v279
  %vm293 = vcmp.eq.f32.partialorder %v292, 8.507059e+37
  %v294 = vand.u32 %v279, 2147483648
  %v295 = vor.u32 1.1754944e-38, %v294
  %v296 = vsel %vm293, %v295, %v291
  %v297 = vmul.f32 %v274, %v296
  %v298 = vrcp.pop %v282
  %v299 = vmul.f32 %v282, %v298
  %v300 = vsub.f32 1.0, %v299
  %v301 = vmul.f32 %v298, %v300
  %v302 = vadd.f32 %v298, %v301
  %vm303 = vweird.f32 %v282
  %vm304 = vweird.f32 %v298
  %vm305 = vmor %vm303, %vm304
  %v306 = vsel %vm305, %v298, %v302
  %v307 = vand.u32 2147483647, %v282
  %vm308 = vcmp.eq.f32.partialorder %v307, 8.507059e+37
  %v309 = vand.u32 %v282, 2147483648
  %v310 = vor.u32 1.1754944e-38, %v309
  %v311 = vsel %vm308, %v310, %v306
  %v312 = vmul.f32 %v276, %v311
  %v313 = vpack.c.bf16 %v312, %v297
  %314 = vrot.lane.b32.xlu0 %v223, 32
  %v315 = vpop.permute.xlu0 %314
  %v318 = vsel %vm227, %v313, 0
  %320 = vmatpush.bf16.msra.mxu0 0
  %321 = vmatpush.bf16.msra.mxu0 0
  %322 = vmatpush.bf16.msra.mxu0 0
  %323 = vmatpush.bf16.msra.mxu0 0
  %324 = vmatpush.bf16.msra.mxu0 0
  %325 = vmatpush.bf16.msra.mxu0 0
  %326 = vmatpush.bf16.msra.mxu0 0
  %327 = vmatpush.bf16.msra.mxu0 %v315
  %328 = vmatmul.bf16.gmra.mxu0 %v318
  %v329 = vpop.f32.mrf.mxu0
  %v330 = vadd.f32 0.0, %v329
  %v331 = vpop.f32.mrf.mxu0
  %v332 = vadd.f32 0.0, %v331
  %333 = vdwg.mxu0
  %334 = vst.msk [vmem:[#allocation2] sm:$0xff] %vm227, %v330
  %335 = vst.msk [vmem:[#allocation2 + $0x8] sm:$0xff] %vm227, %v332
  %336 = vrot.lane.b32.xlu0 %v223, 112
  %v337 = vpop.permute.xlu0 %336
  %v339 = vsel %vm227, %v337, 0
  %341 = vmatpush.bf16.xpose.msra.mxu0 0
  %342 = vmatpush.bf16.xpose.msra.mxu0 0
  %343 = vmatpush.bf16.xpose.msra.mxu0 0
  %344 = vmatpush.bf16.xpose.msra.mxu0 0
  %345 = vmatpush.bf16.xpose.msra.mxu0 0
  %346 = vmatpush.bf16.xpose.msra.mxu0 0
  %347 = vmatpush.bf16.xpose.msra.mxu0 0
  %348 = vmatpush.bf16.xpose.msra.mxu0 %v232
  %349 = vmatmul.bf16.gmra.mxu0 %v339
  %v350 = vpop.f32.mrf.mxu0
  %v351 = vadd.f32 0.0, %v350
  %v352 = vpop.f32.mrf.mxu0
  %v353 = vadd.f32 0.0, %v352
  %354 = vdwg.mxu0
  %v355 = vmul.f32 %v351, 0.25
  %v356 = vmul.f32 %v353, 0.25
  %v357 = vmul.f32 %v355, %v256
  %v358 = vmul.f32 %v356, %v256
  %v359 = vtanh.pop %v357
  %v360 = vtanh.pop %v358
  %v361 = vmul.f32 %v359, 50.0
  %v362 = vmul.f32 %v360, 50.0
  %v363 = vadd.f32 %v361, %v80
  %v364 = vadd.f32 %v362, %v81
  %v365 = vsel %vm227, %v363, -inf
  %366 = vmax.xlane.f32.xlu0 %v365
  %v367 = vpop.xlane.xlu0 %366
  %v368 = vsel %vm227, %v364, -inf
  %369 = vmax.xlane.f32.xlu0 %v368
  %v370 = vpop.xlane.xlu0 %369
  %v371 = vsub.f32 %v363, %v367
  %v372 = vsub.f32 %v364, %v370
  %v373 = vmul.f32 %v371, 1.442695
  %v374 = vpow.pop %v373
  %v375 = vmul.f32 %v372, 1.442695
  %v376 = vpow.pop %v375
  %v377 = vsel %vm227, %v374, 0.0
  %378 = vadd.xlane.f32.xlu0 %v377
  %v379 = vpop.xlane.xlu0 %378
  %v380 = vsel %vm227, %v376, 0.0
  %381 = vadd.xlane.f32.xlu0 %v380
  %v382 = vpop.xlane.xlu0 %381
  %v383 = vrcp.pop %v379
  %v384 = vmul.f32 %v379, %v383
  %v385 = vsub.f32 1.0, %v384
  %v386 = vmul.f32 %v383, %v385
  %v387 = vadd.f32 %v383, %v386
  %vm388 = vweird.f32 %v379
  %vm389 = vweird.f32 %v383
  %vm390 = vmor %vm388, %vm389
  %v391 = vsel %vm390, %v383, %v387
  %v392 = vand.u32 2147483647, %v379
  %vm393 = vcmp.eq.f32.partialorder %v392, 8.507059e+37
  %v394 = vand.u32 %v379, 2147483648
  %v395 = vor.u32 1.1754944e-38, %v394
  %v396 = vsel %vm393, %v395, %v391
  %v397 = vmul.f32 %v374, %v396
  %v398 = vrcp.pop %v382
  %v399 = vmul.f32 %v382, %v398
  %v400 = vsub.f32 1.0, %v399
  %v401 = vmul.f32 %v398, %v400
  %v402 = vadd.f32 %v398, %v401
  %vm403 = vweird.f32 %v382
  %vm404 = vweird.f32 %v398
  %vm405 = vmor %vm403, %vm404
  %v406 = vsel %vm405, %v398, %v402
  %v407 = vand.u32 2147483647, %v382
  %vm408 = vcmp.eq.f32.partialorder %v407, 8.507059e+37
  %v409 = vand.u32 %v382, 2147483648
  %v410 = vor.u32 1.1754944e-38, %v409
  %v411 = vsel %vm408, %v410, %v406
  %v412 = vmul.f32 %v376, %v411
  %v413 = vpack.c.bf16 %v412, %v397
  %v415 = vsel %vm227, %v413, 0
  %417 = vmatpush.bf16.msra.mxu0 0
  %418 = vmatpush.bf16.msra.mxu0 0
  %419 = vmatpush.bf16.msra.mxu0 0
  %420 = vmatpush.bf16.msra.mxu0 0
  %421 = vmatpush.bf16.msra.mxu0 0
  %422 = vmatpush.bf16.msra.mxu0 0
  %423 = vmatpush.bf16.msra.mxu0 0
  %424 = vmatpush.bf16.msra.mxu0 %v315
  %425 = vmatmul.bf16.gmra.mxu0 %v415
  %v426 = vpop.f32.mrf.mxu0
  %v427 = vadd.f32 0.0, %v426
  %v428 = vpop.f32.mrf.mxu0
  %v429 = vadd.f32 0.0, %v428
  %430 = vdwg.mxu0
  %433 = vrot.lane.b32.xlu0 %v427, 16
  %v434 = vpop.permute.xlu0 %433
  %435 = vrot.lane.b32.xlu0 %v429, 16
  %v436 = vpop.permute.xlu0 %435
  %vm439 = vcmask 261248
  %440 = vst.msk [vmem:[#allocation2] sm:$0xff] %vm439, %v434
  %441 = vst.msk [vmem:[#allocation2 + $0x8] sm:$0xff] %vm439, %v436
  %442 = vrot.lane.b32.xlu0 %v223, 96
  %v443 = vpop.permute.xlu0 %442
  %444 = vrot.lane.b32.xlu0 %v223, 48
  %v445 = vpop.permute.xlu0 %444
  %v447 = vsel %vm227, %v443, 0
  %v450 = vsel %vm227, %v445, 0
  %452 = vmatpush.bf16.xpose.msra.mxu0 0
  %453 = vmatpush.bf16.xpose.msra.mxu0 0
  %454 = vmatpush.bf16.xpose.msra.mxu0 0
  %455 = vmatpush.bf16.xpose.msra.mxu0 0
  %456 = vmatpush.bf16.xpose.msra.mxu0 0
  %457 = vmatpush.bf16.xpose.msra.mxu0 0
  %458 = vmatpush.bf16.xpose.msra.mxu0 0
  %459 = vmatpush.bf16.xpose.msra.mxu0 %v450
  %460 = vmatmul.bf16.gmra.mxu0 %v447
  %v461 = vpop.f32.mrf.mxu0
  %v462 = vadd.f32 0.0, %v461
  %v463 = vpop.f32.mrf.mxu0
  %v464 = vadd.f32 0.0, %v463
  %465 = vdwg.mxu0
  %v466 = vmul.f32 %v462, 0.25
  %v467 = vmul.f32 %v464, 0.25
  %v468 = vmul.f32 %v466, %v256
  %v469 = vmul.f32 %v467, %v256
  %v470 = vtanh.pop %v468
  %v471 = vtanh.pop %v469
  %v472 = vmul.f32 %v470, 50.0
  %v473 = vmul.f32 %v471, 50.0
  %v474 = vadd.f32 %v472, %v80
  %v475 = vadd.f32 %v473, %v81
  %v476 = vsel %vm227, %v474, -inf
  %477 = vmax.xlane.f32.xlu0 %v476
  %v478 = vpop.xlane.xlu0 %477
  %v479 = vsel %vm227, %v475, -inf
  %480 = vmax.xlane.f32.xlu0 %v479
  %v481 = vpop.xlane.xlu0 %480
  %v482 = vsub.f32 %v474, %v478
  %v483 = vsub.f32 %v475, %v481
  %v484 = vmul.f32 %v482, 1.442695
  %v485 = vpow.pop %v484
  %v486 = vmul.f32 %v483, 1.442695
  %v487 = vpow.pop %v486
  %v488 = vsel %vm227, %v485, 0.0
  %489 = vadd.xlane.f32.xlu0 %v488
  %v490 = vpop.xlane.xlu0 %489
  %v491 = vsel %vm227, %v487, 0.0
  %492 = vadd.xlane.f32.xlu0 %v491
  %v493 = vpop.xlane.xlu0 %492
  %v494 = vrcp.pop %v490
  %v495 = vmul.f32 %v490, %v494
  %v496 = vsub.f32 1.0, %v495
  %v497 = vmul.f32 %v494, %v496
  %v498 = vadd.f32 %v494, %v497
  %vm499 = vweird.f32 %v490
  %vm500 = vweird.f32 %v494
  %vm501 = vmor %vm499, %vm500
  %v502 = vsel %vm501, %v494, %v498
  %v503 = vand.u32 2147483647, %v490
  %vm504 = vcmp.eq.f32.partialorder %v503, 8.507059e+37
  %v505 = vand.u32 %v490, 2147483648
  %v506 = vor.u32 1.1754944e-38, %v505
  %v507 = vsel %vm504, %v506, %v502
  %v508 = vmul.f32 %v485, %v507
  %v509 = vrcp.pop %v493
  %v510 = vmul.f32 %v493, %v509
  %v511 = vsub.f32 1.0, %v510
  %v512 = vmul.f32 %v509, %v511
  %v513 = vadd.f32 %v509, %v512
  %vm514 = vweird.f32 %v493
  %vm515 = vweird.f32 %v509
  %vm516 = vmor %vm514, %vm515
  %v517 = vsel %vm516, %v509, %v513
  %v518 = vand.u32 2147483647, %v493
  %vm519 = vcmp.eq.f32.partialorder %v518, 8.507059e+37
  %v520 = vand.u32 %v493, 2147483648
  %v521 = vor.u32 1.1754944e-38, %v520
  %v522 = vsel %vm519, %v521, %v517
  %v523 = vmul.f32 %v487, %v522
  %v524 = vpack.c.bf16 %v523, %v508
  %525 = vrot.lane.b32.xlu0 %v223, 16
  %v526 = vpop.permute.xlu0 %525
  %v529 = vsel %vm227, %v524, 0
  %531 = vmatpush.bf16.msra.mxu0 0
  %532 = vmatpush.bf16.msra.mxu0 0
  %533 = vmatpush.bf16.msra.mxu0 0
  %534 = vmatpush.bf16.msra.mxu0 0
  %535 = vmatpush.bf16.msra.mxu0 0
  %536 = vmatpush.bf16.msra.mxu0 0
  %537 = vmatpush.bf16.msra.mxu0 0
  %538 = vmatpush.bf16.msra.mxu0 %v526
  %539 = vmatmul.bf16.gmra.mxu0 %v529
  %v540 = vpop.f32.mrf.mxu0
  %v541 = vadd.f32 0.0, %v540
  %v542 = vpop.f32.mrf.mxu0
  %v543 = vadd.f32 0.0, %v542
  %544 = vdwg.mxu0
  %547 = vrot.lane.b32.xlu0 %v541, 32
  %v548 = vpop.permute.xlu0 %547
  %549 = vrot.lane.b32.xlu0 %v543, 32
  %v550 = vpop.permute.xlu0 %549
  %vm553 = vcmask 392448
  %554 = vst.msk [vmem:[#allocation2] sm:$0xff] %vm553, %v548
  %555 = vst.msk [vmem:[#allocation2 + $0x8] sm:$0xff] %vm553, %v550
  %556 = vrot.lane.b32.xlu0 %v223, 80
  %v557 = vpop.permute.xlu0 %556
  %v559 = vsel %vm227, %v557, 0
  %561 = vmatpush.bf16.xpose.msra.mxu0 0
  %562 = vmatpush.bf16.xpose.msra.mxu0 0
  %563 = vmatpush.bf16.xpose.msra.mxu0 0
  %564 = vmatpush.bf16.xpose.msra.mxu0 0
  %565 = vmatpush.bf16.xpose.msra.mxu0 0
  %566 = vmatpush.bf16.xpose.msra.mxu0 0
  %567 = vmatpush.bf16.xpose.msra.mxu0 0
  %568 = vmatpush.bf16.xpose.msra.mxu0 %v450
  %569 = vmatmul.bf16.gmra.mxu0 %v559
  %v570 = vpop.f32.mrf.mxu0
  %v571 = vadd.f32 0.0, %v570
  %v572 = vpop.f32.mrf.mxu0
  %v573 = vadd.f32 0.0, %v572
  %574 = vdwg.mxu0
  %v575 = vmul.f32 %v571, 0.25
  %v576 = vmul.f32 %v573, 0.25
  %v577 = vmul.f32 %v575, %v256
  %v578 = vmul.f32 %v576, %v256
  %v579 = vtanh.pop %v577
  %v580 = vtanh.pop %v578
  %v581 = vmul.f32 %v579, 50.0
  %v582 = vmul.f32 %v580, 50.0
  %v583 = vadd.f32 %v581, %v80
  %v584 = vadd.f32 %v582, %v81
  %v585 = vsel %vm227, %v583, -inf
  %586 = vmax.xlane.f32.xlu0 %v585
  %v587 = vpop.xlane.xlu0 %586
  %v588 = vsel %vm227, %v584, -inf
  %589 = vmax.xlane.f32.xlu0 %v588
  %v590 = vpop.xlane.xlu0 %589
  %v591 = vsub.f32 %v583, %v587
  %v592 = vsub.f32 %v584, %v590
  %v593 = vmul.f32 %v591, 1.442695
  %v594 = vpow.pop %v593
  %v595 = vmul.f32 %v592, 1.442695
  %v596 = vpow.pop %v595
  %v597 = vsel %vm227, %v594, 0.0
  %598 = vadd.xlane.f32.xlu0 %v597
  %v599 = vpop.xlane.xlu0 %598
  %v600 = vsel %vm227, %v596, 0.0
  %601 = vadd.xlane.f32.xlu0 %v600
  %v602 = vpop.xlane.xlu0 %601
  %v603 = vrcp.pop %v599
  %v604 = vmul.f32 %v599, %v603
  %v605 = vsub.f32 1.0, %v604
  %v606 = vmul.f32 %v603, %v605
  %v607 = vadd.f32 %v603, %v606
  %vm608 = vweird.f32 %v599
  %vm609 = vweird.f32 %v603
  %vm610 = vmor %vm608, %vm609
  %v611 = vsel %vm610, %v603, %v607
  %v612 = vand.u32 2147483647, %v599
  %vm613 = vcmp.eq.f32.partialorder %v612, 8.507059e+37
  %v614 = vand.u32 %v599, 2147483648
  %v615 = vor.u32 1.1754944e-38, %v614
  %v616 = vsel %vm613, %v615, %v611
  %v617 = vmul.f32 %v594, %v616
  %v618 = vrcp.pop %v602
  %v619 = vmul.f32 %v602, %v618
  %v620 = vsub.f32 1.0, %v619
  %v621 = vmul.f32 %v618, %v620
  %v622 = vadd.f32 %v618, %v621
  %vm623 = vweird.f32 %v602
  %vm624 = vweird.f32 %v618
  %vm625 = vmor %vm623, %vm624
  %v626 = vsel %vm625, %v618, %v622
  %v627 = vand.u32 2147483647, %v602
  %vm628 = vcmp.eq.f32.partialorder %v627, 8.507059e+37
  %v629 = vand.u32 %v602, 2147483648
  %v630 = vor.u32 1.1754944e-38, %v629
  %v631 = vsel %vm628, %v630, %v626
  %v632 = vmul.f32 %v596, %v631
  %v633 = vpack.c.bf16 %v632, %v617
  %v635 = vsel %vm227, %v633, 0
  %637 = vmatpush.bf16.msra.mxu0 0
  %638 = vmatpush.bf16.msra.mxu0 0
  %639 = vmatpush.bf16.msra.mxu0 0
  %640 = vmatpush.bf16.msra.mxu0 0
  %641 = vmatpush.bf16.msra.mxu0 0
  %642 = vmatpush.bf16.msra.mxu0 0
  %643 = vmatpush.bf16.msra.mxu0 0
  %644 = vmatpush.bf16.msra.mxu0 %v526
  %645 = vmatmul.bf16.gmra.mxu0 %v635
  %v646 = vpop.f32.mrf.mxu0
  %v647 = vadd.f32 0.0, %v646
  %v648 = vpop.f32.mrf.mxu0
  %v649 = vadd.f32 0.0, %v648
  %650 = vdwg.mxu0
  %653 = vrot.lane.b32.xlu0 %v647, 48
  %v654 = vpop.permute.xlu0 %653
  %655 = vrot.lane.b32.xlu0 %v649, 48
  %v656 = vpop.permute.xlu0 %655
  %vm659 = vcmask 523648
  %660 = vst.msk [vmem:[#allocation2] sm:$0xff] %vm659, %v654
  %661 = vst.msk [vmem:[#allocation2 + $0x8] sm:$0xff] %vm659, %v656
  %v662 = vld [vmem:[#allocation2] sm:$0xff]
  %v663 = vld [vmem:[#allocation2 + $0x8] sm:$0xff]
  %v664 = vpack.c.bf16 %v663, %v662
  %v665 = vld [vmem:[%s5] sm:$0xf]
  %v666 = vld [vmem:[%s5 + $0x4] sm:$0xf]
  %v667 = vld [vmem:[%s5 + $0x8] sm:$0xf]
  %v668 = vld [vmem:[%s5 + $0xc] sm:$0xf]
  %v669 = vld [vmem:[%s5 + $0x10] sm:$0xf]
  %v670 = vld [vmem:[%s5 + $0x14] sm:$0xf]
  %v671 = vld [vmem:[%s5 + $0x18] sm:$0xf]
  %v672 = vld [vmem:[%s5 + $0x1c] sm:$0xf]
  %v681 = vunpack.c.l.b16 %v665
  %v682 = vunpack.c.l.b16 %v666
  %v683 = vunpack.c.l.b16 %v667
  %v684 = vunpack.c.l.b16 %v668
  %v685 = vunpack.c.l.b16 %v669
  %v686 = vunpack.c.l.b16 %v670
  %v687 = vunpack.c.l.b16 %v671
  %v688 = vunpack.c.l.b16 %v672
  %v689 = vpack.c.b16 %v682, %v681
  %v690 = vpack.c.b16 %v684, %v683
  %v691 = vpack.c.b16 %v686, %v685
  %v692 = vpack.c.b16 %v688, %v687
  %v698 = vsel %vm93, %v664, 0
  %700 = vmatpush.bf16.msra.mxu0 0
  %701 = vmatpush.bf16.msra.mxu0 0
  %702 = vmatpush.bf16.msra.mxu0 0
  %703 = vmatpush.bf16.msra.mxu0 0
  %704 = vmatpush.bf16.msra.mxu0 %v692
  %705 = vmatpush.bf16.msra.mxu0 %v691
  %706 = vmatpush.bf16.msra.mxu0 %v690
  %707 = vmatpush.bf16.msra.mxu0 %v689
  %708 = vmatmul.bf16.gmra.mxu0 %v698
  %v709 = vpop.f32.mrf.mxu0
  %v710 = vadd.f32 0.0, %v709
  %v711 = vpop.f32.mrf.mxu0
  %v712 = vadd.f32 0.0, %v711
  %713 = vdwg.mxu0
  %v714 = vld [vmem:[%s3 + $0x1] sm:$0x1]
  %v715 = vmul.f32 %v710, %v710
  %v716 = vmul.f32 %v712, %v712
  %v717 = vsel %vm93, %v715, 0.0
  %718 = vadd.xlane.f32.xlu0 %v717
  %v719 = vpop.xlane.xlu0 %718
  %v720 = vsel %vm93, %v716, 0.0
  %721 = vadd.xlane.f32.xlu0 %v720
  %v722 = vpop.xlane.xlu0 %721
  %v723 = vmul.f32 %v719, %v106
  %v724 = vmul.f32 %v722, %v106
  %v725 = vadd.f32 %v723, 1e-06
  %v726 = vadd.f32 %v724, 1e-06
  %v727 = vrsqrt.pop %v725
  %v728 = vmul.f32 %v727, %v725
  %v729 = vmul.f32 %v728, %v727
  %v730 = vmul.f32 0.5, %v729
  %v731 = vsub.f32 1.5, %v730
  %v732 = vmul.f32 %v727, %v731
  %vm733 = vweird.f32 %v725
  %vm734 = vweird.f32 %v727
  %vm735 = vmor %vm733, %vm734
  %v736 = vsel %vm735, %v727, %v732
  %v737 = vrsqrt.pop %v726
  %v738 = vmul.f32 %v737, %v726
  %v739 = vmul.f32 %v738, %v737
  %v740 = vmul.f32 0.5, %v739
  %v741 = vsub.f32 1.5, %v740
  %v742 = vmul.f32 %v737, %v741
  %vm743 = vweird.f32 %v726
  %vm744 = vweird.f32 %v737
  %vm745 = vmor %vm743, %vm744
  %v746 = vsel %vm745, %v737, %v742
  %v747 = vmul.f32 %v710, %v736
  %v748 = vmul.f32 %v712, %v746
  %v749 = vadd.f32 %v714, 1.0
  %v750 = vperm.slane %v749, 0
  %v751 = vmul.f32 %v747, %v750
  %v752 = vmul.f32 %v748, %v750
  %v753 = vadd.f32 %v88, %v751
  %v754 = vadd.f32 %v89, %v752
  %v755 = vld [vmem:[%s3 + $0x2] sm:$0x1]
  %v756 = vmul.f32 %v753, %v753
  %v757 = vmul.f32 %v754, %v754
  %v758 = vsel %vm93, %v756, 0.0
  %759 = vadd.xlane.f32.xlu0 %v758
  %v760 = vpop.xlane.xlu0 %759
  %v761 = vsel %vm93, %v757, 0.0
  %762 = vadd.xlane.f32.xlu0 %v761
  %v763 = vpop.xlane.xlu0 %762
  %v764 = vmul.f32 %v760, %v106
  %v765 = vmul.f32 %v763, %v106
  %v766 = vadd.f32 %v764, 1e-06
  %v767 = vadd.f32 %v765, 1e-06
  %v768 = vrsqrt.pop %v766
  %v769 = vmul.f32 %v768, %v766
  %v770 = vmul.f32 %v769, %v768
  %v771 = vmul.f32 0.5, %v770
  %v772 = vsub.f32 1.5, %v771
  %v773 = vmul.f32 %v768, %v772
  %vm774 = vweird.f32 %v766
  %vm775 = vweird.f32 %v768
  %vm776 = vmor %vm774, %vm775
  %v777 = vsel %vm776, %v768, %v773
  %v778 = vrsqrt.pop %v767
  %v779 = vmul.f32 %v778, %v767
  %v780 = vmul.f32 %v779, %v778
  %v781 = vmul.f32 0.5, %v780
  %v782 = vsub.f32 1.5, %v781
  %v783 = vmul.f32 %v778, %v782
  %vm784 = vweird.f32 %v767
  %vm785 = vweird.f32 %v778
  %vm786 = vmor %vm784, %vm785
  %v787 = vsel %vm786, %v778, %v783
  %v788 = vmul.f32 %v753, %v777
  %v789 = vmul.f32 %v754, %v787
  %v790 = vadd.f32 %v755, 1.0
  %v791 = vperm.slane %v790, 0
  %v792 = vmul.f32 %v788, %v791
  %v793 = vmul.f32 %v789, %v791
  %v794 = vpack.c.bf16 %v793, %v792
  %v795 = vld [vmem:[%s6] sm:$0xff]
  %v796 = vld [vmem:[%s6 + $0x8] sm:$0xff]
  %v797 = vld [vmem:[%s6 + $0x10] sm:$0xff]
  %v798 = vld [vmem:[%s6 + $0x18] sm:$0xff]
  %v799 = vld [vmem:[%s6 + $0x20] sm:$0xff]
  %v800 = vld [vmem:[%s6 + $0x28] sm:$0xff]
  %v801 = vld [vmem:[%s6 + $0x30] sm:$0xff]
  %v802 = vld [vmem:[%s6 + $0x38] sm:$0xff]
  %v811 = vunpack.c.l.b16 %v795
  %v812 = vunpack.c.h.b16 %v795
  %v813 = vunpack.c.l.b16 %v796
  %v814 = vunpack.c.h.b16 %v796
  %v815 = vunpack.c.l.b16 %v797
  %v816 = vunpack.c.h.b16 %v797
  %v817 = vunpack.c.l.b16 %v798
  %v818 = vunpack.c.h.b16 %v798
  %v819 = vunpack.c.l.b16 %v799
  %v820 = vunpack.c.h.b16 %v799
  %v821 = vunpack.c.l.b16 %v800
  %v822 = vunpack.c.h.b16 %v800
  %v823 = vunpack.c.l.b16 %v801
  %v824 = vunpack.c.h.b16 %v801
  %v825 = vunpack.c.l.b16 %v802
  %v826 = vunpack.c.h.b16 %v802
  %v827 = vpack.c.b16 %v813, %v811
  %v828 = vpack.c.b16 %v814, %v812
  %v829 = vpack.c.b16 %v817, %v815
  %v830 = vpack.c.b16 %v818, %v816
  %v831 = vpack.c.b16 %v821, %v819
  %v832 = vpack.c.b16 %v822, %v820
  %v833 = vpack.c.b16 %v825, %v823
  %v834 = vpack.c.b16 %v826, %v824
  %v844 = vsel %vm93, %v794, 0
  %846 = vmatpush.bf16.msra.mxu0 0
  %847 = vmatpush.bf16.msra.mxu0 0
  %848 = vmatpush.bf16.msra.mxu0 0
  %849 = vmatpush.bf16.msra.mxu0 0
  %850 = vmatpush.bf16.msra.mxu0 %v833
  %851 = vmatpush.bf16.msra.mxu0 %v831
  %852 = vmatpush.bf16.msra.mxu0 %v829
  %853 = vmatpush.bf16.msra.mxu0 %v827
  %854 = vmatmul.bf16.gmra.mxu0 %v844
  %v855 = vpop.f32.mrf.mxu0
  %v856 = vadd.f32 0.0, %v855
  %v857 = vpop.f32.mrf.mxu0
  %v858 = vadd.f32 0.0, %v857
  %859 = vdwg.mxu0
  %860 = vmatpush.bf16.msra.mxu0 0
  %861 = vmatpush.bf16.msra.mxu0 0
  %862 = vmatpush.bf16.msra.mxu0 0
  %863 = vmatpush.bf16.msra.mxu0 0
  %864 = vmatpush.bf16.msra.mxu0 %v834
  %865 = vmatpush.bf16.msra.mxu0 %v832
  %866 = vmatpush.bf16.msra.mxu0 %v830
  %867 = vmatpush.bf16.msra.mxu0 %v828
  %868 = vmatmul.bf16.gmra.mxu0 %v844
  %v869 = vpop.f32.mrf.mxu0
  %v870 = vadd.f32 0.0, %v869
  %v871 = vpop.f32.mrf.mxu0
  %v872 = vadd.f32 0.0, %v871
  %873 = vdwg.mxu0
  %v874 = vmul.f32 %v856, %v856
  %v875 = vmul.f32 %v858, %v858
  %v876 = vmul.f32 %v856, %v874
  %v877 = vmul.f32 %v858, %v875
  %v878 = vmul.f32 %v876, 0.044715
  %v879 = vmul.f32 %v877, 0.044715
  %v880 = vadd.f32 %v856, %v878
  %v881 = vadd.f32 %v858, %v879
  %v882 = vmul.f32 %v880, 0.7978846
  %v883 = vmul.f32 %v881, 0.7978846
  %v884 = vtanh.pop %v882
  %v885 = vtanh.pop %v883
  %v886 = vadd.f32 %v884, 1.0
  %v887 = vadd.f32 %v885, 1.0
  %v888 = vmul.f32 %v886, 0.5
  %v889 = vmul.f32 %v887, 0.5
  %v890 = vmul.f32 %v856, %v888
  %v891 = vmul.f32 %v858, %v889
  %v892 = vmul.f32 %v890, %v870
  %v893 = vmul.f32 %v891, %v872
  %v894 = vpack.c.bf16 %v893, %v892
  %v895 = vld [vmem:[%s7] sm:$0xf]
  %v896 = vld [vmem:[%s7 + $0x4] sm:$0xf]
  %v897 = vld [vmem:[%s7 + $0x8] sm:$0xf]
  %v898 = vld [vmem:[%s7 + $0xc] sm:$0xf]
  %v899 = vld [vmem:[%s7 + $0x10] sm:$0xf]
  %v900 = vld [vmem:[%s7 + $0x14] sm:$0xf]
  %v901 = vld [vmem:[%s7 + $0x18] sm:$0xf]
  %v902 = vld [vmem:[%s7 + $0x1c] sm:$0xf]
  %v903 = vld [vmem:[%s7 + $0x20] sm:$0xf]
  %v904 = vld [vmem:[%s7 + $0x24] sm:$0xf]
  %v905 = vld [vmem:[%s7 + $0x28] sm:$0xf]
  %v906 = vld [vmem:[%s7 + $0x2c] sm:$0xf]
  %v907 = vld [vmem:[%s7 + $0x30] sm:$0xf]
  %v908 = vld [vmem:[%s7 + $0x34] sm:$0xf]
  %v909 = vld [vmem:[%s7 + $0x38] sm:$0xf]
  %v910 = vld [vmem:[%s7 + $0x3c] sm:$0xf]
  %v927 = vunpack.c.l.b16 %v895
  %v928 = vunpack.c.l.b16 %v896
  %v929 = vunpack.c.l.b16 %v897
  %v930 = vunpack.c.l.b16 %v898
  %v931 = vunpack.c.l.b16 %v899
  %v932 = vunpack.c.l.b16 %v900
  %v933 = vunpack.c.l.b16 %v901
  %v934 = vunpack.c.l.b16 %v902
  %v935 = vunpack.c.l.b16 %v903
  %v936 = vunpack.c.l.b16 %v904
  %v937 = vunpack.c.l.b16 %v905
  %v938 = vunpack.c.l.b16 %v906
  %v939 = vunpack.c.l.b16 %v907
  %v940 = vunpack.c.l.b16 %v908
  %v941 = vunpack.c.l.b16 %v909
  %v942 = vunpack.c.l.b16 %v910
  %v943 = vpack.c.b16 %v928, %v927
  %v944 = vpack.c.b16 %v930, %v929
  %v945 = vpack.c.b16 %v932, %v931
  %v946 = vpack.c.b16 %v934, %v933
  %v947 = vpack.c.b16 %v936, %v935
  %v948 = vpack.c.b16 %v938, %v937
  %v949 = vpack.c.b16 %v940, %v939
  %v950 = vpack.c.b16 %v942, %v941
  %959 = vmatpush.bf16.msra.mxu0 %v950
  %960 = vmatpush.bf16.msra.mxu0 %v949
  %961 = vmatpush.bf16.msra.mxu0 %v948
  %962 = vmatpush.bf16.msra.mxu0 %v947
  %963 = vmatpush.bf16.msra.mxu0 %v946
  %964 = vmatpush.bf16.msra.mxu0 %v945
  %965 = vmatpush.bf16.msra.mxu0 %v944
  %966 = vmatpush.bf16.msra.mxu0 %v943
  %967 = vmatmul.bf16.gmra.mxu0 %v894
  %v968 = vpop.f32.mrf.mxu0
  %v969 = vadd.f32 0.0, %v968
  %v970 = vpop.f32.mrf.mxu0
  %v971 = vadd.f32 0.0, %v970
  %972 = vdwg.mxu0
  %v973 = vld [vmem:[%s3 + $0x3] sm:$0x1]
  %v974 = vmul.f32 %v969, %v969
  %v975 = vmul.f32 %v971, %v971
  %v976 = vsel %vm93, %v974, 0.0
  %977 = vadd.xlane.f32.xlu0 %v976
  %v978 = vpop.xlane.xlu0 %977
  %v979 = vsel %vm93, %v975, 0.0
  %980 = vadd.xlane.f32.xlu0 %v979
  %v981 = vpop.xlane.xlu0 %980
  %v982 = vmul.f32 %v978, %v106
  %v983 = vmul.f32 %v981, %v106
  %v984 = vadd.f32 %v982, 1e-06
  %v985 = vadd.f32 %v983, 1e-06
  %v986 = vrsqrt.pop %v984
  %v987 = vmul.f32 %v986, %v984
  %v988 = vmul.f32 %v987, %v986
  %v989 = vmul.f32 0.5, %v988
  %v990 = vsub.f32 1.5, %v989
  %v991 = vmul.f32 %v986, %v990
  %vm992 = vweird.f32 %v984
  %vm993 = vweird.f32 %v986
  %vm994 = vmor %vm992, %vm993
  %v995 = vsel %vm994, %v986, %v991
  %v996 = vrsqrt.pop %v985
  %v997 = vmul.f32 %v996, %v985
  %v998 = vmul.f32 %v997, %v996
  %v999 = vmul.f32 0.5, %v998
  %v1000 = vsub.f32 1.5, %v999
  %v1001 = vmul.f32 %v996, %v1000
  %vm1002 = vweird.f32 %v985
  %vm1003 = vweird.f32 %v996
  %vm1004 = vmor %vm1002, %vm1003
  %v1005 = vsel %vm1004, %v996, %v1001
  %v1006 = vmul.f32 %v969, %v995
  %v1007 = vmul.f32 %v971, %v1005
  %v1008 = vadd.f32 %v973, 1.0
  %v1009 = vperm.slane %v1008, 0
  %v1010 = vmul.f32 %v1006, %v1009
  %v1011 = vmul.f32 %v1007, %v1009
  %v1012 = vadd.f32 %v753, %v1010
  %v1013 = vadd.f32 %v754, %v1011
  %v1014 = vld [vmem:[%s8] sm:$0x1]
  %v1015 = vmul.f32 %v1012, %v1012
  %v1016 = vmul.f32 %v1013, %v1013
  %v1017 = vsel %vm93, %v1015, 0.0
  %1018 = vadd.xlane.f32.xlu0 %v1017
  %v1019 = vpop.xlane.xlu0 %1018
  %v1020 = vsel %vm93, %v1016, 0.0
  %1021 = vadd.xlane.f32.xlu0 %v1020
  %v1022 = vpop.xlane.xlu0 %1021
  %v1023 = vmul.f32 %v1019, %v106
  %v1024 = vmul.f32 %v1022, %v106
  %v1025 = vadd.f32 %v1023, 1e-06
  %v1026 = vadd.f32 %v1024, 1e-06
  %v1027 = vrsqrt.pop %v1025
  %v1028 = vmul.f32 %v1027, %v1025
  %v1029 = vmul.f32 %v1028, %v1027
  %v1030 = vmul.f32 0.5, %v1029
  %v1031 = vsub.f32 1.5, %v1030
  %v1032 = vmul.f32 %v1027, %v1031
  %vm1033 = vweird.f32 %v1025
  %vm1034 = vweird.f32 %v1027
  %vm1035 = vmor %vm1033, %vm1034
  %v1036 = vsel %vm1035, %v1027, %v1032
  %v1037 = vrsqrt.pop %v1026
  %v1038 = vmul.f32 %v1037, %v1026
  %v1039 = vmul.f32 %v1038, %v1037
  %v1040 = vmul.f32 0.5, %v1039
  %v1041 = vsub.f32 1.5, %v1040
  %v1042 = vmul.f32 %v1037, %v1041
  %vm1043 = vweird.f32 %v1026
  %vm1044 = vweird.f32 %v1037
  %vm1045 = vmor %vm1043, %vm1044
  %v1046 = vsel %vm1045, %v1037, %v1042
  %v1047 = vmul.f32 %v1012, %v1036
  %v1048 = vmul.f32 %v1013, %v1046
  %v1049 = vadd.f32 %v1014, 1.0
  %v1050 = vperm.slane %v1049, 0
  %v1051 = vmul.f32 %v1047, %v1050
  %v1052 = vmul.f32 %v1048, %v1050
  %v1053 = vpack.c.bf16 %v1052, %v1051
  %v1054 = vld [vmem:[%s9] sm:$0xff]
  %v1055 = vld [vmem:[%s9 + $0x8] sm:$0xff]
  %v1056 = vld [vmem:[%s9 + $0x10] sm:$0xff]
  %v1057 = vld [vmem:[%s9 + $0x18] sm:$0xff]
  %v1058 = vld [vmem:[%s9 + $0x20] sm:$0xff]
  %v1059 = vld [vmem:[%s9 + $0x28] sm:$0xff]
  %v1060 = vld [vmem:[%s9 + $0x30] sm:$0xff]
  %v1061 = vld [vmem:[%s9 + $0x38] sm:$0xff]
  %v1070 = vunpack.c.l.b16 %v1054
  %v1071 = vunpack.c.h.b16 %v1054
  %v1072 = vunpack.c.l.b16 %v1055
  %v1073 = vunpack.c.h.b16 %v1055
  %v1074 = vunpack.c.l.b16 %v1056
  %v1075 = vunpack.c.h.b16 %v1056
  %v1076 = vunpack.c.l.b16 %v1057
  %v1077 = vunpack.c.h.b16 %v1057
  %v1078 = vunpack.c.l.b16 %v1058
  %v1079 = vunpack.c.h.b16 %v1058
  %v1080 = vunpack.c.l.b16 %v1059
  %v1081 = vunpack.c.h.b16 %v1059
  %v1082 = vunpack.c.l.b16 %v1060
  %v1083 = vunpack.c.h.b16 %v1060
  %v1084 = vunpack.c.l.b16 %v1061
  %v1085 = vunpack.c.h.b16 %v1061
  %v1086 = vpack.c.b16 %v1072, %v1070
  %v1087 = vpack.c.b16 %v1073, %v1071
  %v1088 = vpack.c.b16 %v1076, %v1074
  %v1089 = vpack.c.b16 %v1077, %v1075
  %v1090 = vpack.c.b16 %v1080, %v1078
  %v1091 = vpack.c.b16 %v1081, %v1079
  %v1092 = vpack.c.b16 %v1084, %v1082
  %v1093 = vpack.c.b16 %v1085, %v1083
  %v1103 = vsel %vm93, %v1053, 0
  %1105 = vmatpush.bf16.msra.mxu0 0
  %1106 = vmatpush.bf16.msra.mxu0 0
  %1107 = vmatpush.bf16.msra.mxu0 0
  %1108 = vmatpush.bf16.msra.mxu0 0
  %1109 = vmatpush.bf16.msra.mxu0 %v1092
  %1110 = vmatpush.bf16.msra.mxu0 %v1090
  %1111 = vmatpush.bf16.msra.mxu0 %v1088
  %1112 = vmatpush.bf16.msra.mxu0 %v1086
  %1113 = vmatmul.bf16.gmra.mxu0 %v1103
  %v1114 = vpop.f32.mrf.mxu0
  %v1115 = vadd.f32 0.0, %v1114
  %v1116 = vpop.f32.mrf.mxu0
  %v1117 = vadd.f32 0.0, %v1116
  %1118 = vdwg.mxu0
  %1119 = vmatpush.bf16.msra.mxu0 0
  %1120 = vmatpush.bf16.msra.mxu0 0
  %1121 = vmatpush.bf16.msra.mxu0 0
  %1122 = vmatpush.bf16.msra.mxu0 0
  %1123 = vmatpush.bf16.msra.mxu0 %v1093
  %1124 = vmatpush.bf16.msra.mxu0 %v1091
  %1125 = vmatpush.bf16.msra.mxu0 %v1089
  %1126 = vmatpush.bf16.msra.mxu0 %v1087
  %1127 = vmatmul.bf16.gmra.mxu0 %v1103
  %v1128 = vpop.f32.mrf.mxu0
  %v1129 = vadd.f32 0.0, %v1128
  %v1130 = vpop.f32.mrf.mxu0
  %v1131 = vadd.f32 0.0, %v1130
  %1132 = vdwg.mxu0
  %v1133 = vmul.f32 %v1115, %v84
  %v1134 = vmul.f32 %v1117, %v85
  %v1135 = vmul.f32 %v1129, %v86
  %v1136 = vmul.f32 %v1131, %v87
  %v1137 = vadd.f32 %v1133, %v1135
  %v1138 = vadd.f32 %v1134, %v1136
  %v1139 = vpack.c.bf16 %v1138, %v1137
  %1141 = vrot.lane.b32.xlu0 %v1139, 64
  %v1142 = vpop.permute.xlu0 %1141
  %v1144 = vsel %vm227, %v1139, 0
  %v1147 = vsel %vm227, %v1142, 0
  %1149 = vmatpush.bf16.xpose.msra.mxu0 0
  %1150 = vmatpush.bf16.xpose.msra.mxu0 0
  %1151 = vmatpush.bf16.xpose.msra.mxu0 0
  %1152 = vmatpush.bf16.xpose.msra.mxu0 0
  %1153 = vmatpush.bf16.xpose.msra.mxu0 0
  %1154 = vmatpush.bf16.xpose.msra.mxu0 0
  %1155 = vmatpush.bf16.xpose.msra.mxu0 0
  %1156 = vmatpush.bf16.xpose.msra.mxu0 %v1147
  %1157 = vmatmul.bf16.gmra.mxu0 %v1144
  %v1158 = vpop.f32.mrf.mxu0
  %v1159 = vadd.f32 0.0, %v1158
  %v1160 = vpop.f32.mrf.mxu0
  %v1161 = vadd.f32 0.0, %v1160
  %1162 = vdwg.mxu0
  %v1163 = vmul.f32 %v1159, 0.25
  %v1164 = vmul.f32 %v1161, 0.25
  %v1165 = vmul.f32 %v1163, %v256
  %v1166 = vmul.f32 %v1164, %v256
  %v1167 = vtanh.pop %v1165
  %v1168 = vtanh.pop %v1166
  %v1169 = vmul.f32 %v1167, 50.0
  %v1170 = vmul.f32 %v1168, 50.0
  %v1171 = vadd.f32 %v1169, %v82
  %v1172 = vadd.f32 %v1170, %v83
  %v1173 = vsel %vm227, %v1171, -inf
  %1174 = vmax.xlane.f32.xlu0 %v1173
  %v1175 = vpop.xlane.xlu0 %1174
  %v1176 = vsel %vm227, %v1172, -inf
  %1177 = vmax.xlane.f32.xlu0 %v1176
  %v1178 = vpop.xlane.xlu0 %1177
  %v1179 = vsub.f32 %v1171, %v1175
  %v1180 = vsub.f32 %v1172, %v1178
  %v1181 = vmul.f32 %v1179, 1.442695
  %v1182 = vpow.pop %v1181
  %v1183 = vmul.f32 %v1180, 1.442695
  %v1184 = vpow.pop %v1183
  %v1185 = vsel %vm227, %v1182, 0.0
  %1186 = vadd.xlane.f32.xlu0 %v1185
  %v1187 = vpop.xlane.xlu0 %1186
  %v1188 = vsel %vm227, %v1184, 0.0
  %1189 = vadd.xlane.f32.xlu0 %v1188
  %v1190 = vpop.xlane.xlu0 %1189
  %v1191 = vrcp.pop %v1187
  %v1192 = vmul.f32 %v1187, %v1191
  %v1193 = vsub.f32 1.0, %v1192
  %v1194 = vmul.f32 %v1191, %v1193
  %v1195 = vadd.f32 %v1191, %v1194
  %vm1196 = vweird.f32 %v1187
  %vm1197 = vweird.f32 %v1191
  %vm1198 = vmor %vm1196, %vm1197
  %v1199 = vsel %vm1198, %v1191, %v1195
  %v1200 = vand.u32 2147483647, %v1187
  %vm1201 = vcmp.eq.f32.partialorder %v1200, 8.507059e+37
  %v1202 = vand.u32 %v1187, 2147483648
  %v1203 = vor.u32 1.1754944e-38, %v1202
  %v1204 = vsel %vm1201, %v1203, %v1199
  %v1205 = vmul.f32 %v1182, %v1204
  %v1206 = vrcp.pop %v1190
  %v1207 = vmul.f32 %v1190, %v1206
  %v1208 = vsub.f32 1.0, %v1207
  %v1209 = vmul.f32 %v1206, %v1208
  %v1210 = vadd.f32 %v1206, %v1209
  %vm1211 = vweird.f32 %v1190
  %vm1212 = vweird.f32 %v1206
  %vm1213 = vmor %vm1211, %vm1212
  %v1214 = vsel %vm1213, %v1206, %v1210
  %v1215 = vand.u32 2147483647, %v1190
  %vm1216 = vcmp.eq.f32.partialorder %v1215, 8.507059e+37
  %v1217 = vand.u32 %v1190, 2147483648
  %v1218 = vor.u32 1.1754944e-38, %v1217
  %v1219 = vsel %vm1216, %v1218, %v1214
  %v1220 = vmul.f32 %v1184, %v1219
  %v1221 = vpack.c.bf16 %v1220, %v1205
  %1222 = vrot.lane.b32.xlu0 %v1139, 32
  %v1223 = vpop.permute.xlu0 %1222
  %v1226 = vsel %vm227, %v1221, 0
  %1228 = vmatpush.bf16.msra.mxu0 0
  %1229 = vmatpush.bf16.msra.mxu0 0
  %1230 = vmatpush.bf16.msra.mxu0 0
  %1231 = vmatpush.bf16.msra.mxu0 0
  %1232 = vmatpush.bf16.msra.mxu0 0
  %1233 = vmatpush.bf16.msra.mxu0 0
  %1234 = vmatpush.bf16.msra.mxu0 0
  %1235 = vmatpush.bf16.msra.mxu0 %v1223
  %1236 = vmatmul.bf16.gmra.mxu0 %v1226
  %v1237 = vpop.f32.mrf.mxu0
  %v1238 = vadd.f32 0.0, %v1237
  %v1239 = vpop.f32.mrf.mxu0
  %v1240 = vadd.f32 0.0, %v1239
  %1241 = vdwg.mxu0
  %1242 = vst.msk [vmem:[#allocation2] sm:$0xff] %vm227, %v1238
  %1243 = vst.msk [vmem:[#allocation2 + $0x8] sm:$0xff] %vm227, %v1240
  %1244 = vrot.lane.b32.xlu0 %v1139, 112
  %v1245 = vpop.permute.xlu0 %1244
  %v1247 = vsel %vm227, %v1245, 0
  %1249 = vmatpush.bf16.xpose.msra.mxu0 0
  %1250 = vmatpush.bf16.xpose.msra.mxu0 0
  %1251 = vmatpush.bf16.xpose.msra.mxu0 0
  %1252 = vmatpush.bf16.xpose.msra.mxu0 0
  %1253 = vmatpush.bf16.xpose.msra.mxu0 0
  %1254 = vmatpush.bf16.xpose.msra.mxu0 0
  %1255 = vmatpush.bf16.xpose.msra.mxu0 0
  %1256 = vmatpush.bf16.xpose.msra.mxu0 %v1147
  %1257 = vmatmul.bf16.gmra.mxu0 %v1247
  %v1258 = vpop.f32.mrf.mxu0
  %v1259 = vadd.f32 0.0, %v1258
  %v1260 = vpop.f32.mrf.mxu0
  %v1261 = vadd.f32 0.0, %v1260
  %1262 = vdwg.mxu0
  %v1263 = vmul.f32 %v1259, 0.25
  %v1264 = vmul.f32 %v1261, 0.25
  %v1265 = vmul.f32 %v1263, %v256
  %v1266 = vmul.f32 %v1264, %v256
  %v1267 = vtanh.pop %v1265
  %v1268 = vtanh.pop %v1266
  %v1269 = vmul.f32 %v1267, 50.0
  %v1270 = vmul.f32 %v1268, 50.0
  %v1271 = vadd.f32 %v1269, %v82
  %v1272 = vadd.f32 %v1270, %v83
  %v1273 = vsel %vm227, %v1271, -inf
  %1274 = vmax.xlane.f32.xlu0 %v1273
  %v1275 = vpop.xlane.xlu0 %1274
  %v1276 = vsel %vm227, %v1272, -inf
  %1277 = vmax.xlane.f32.xlu0 %v1276
  %v1278 = vpop.xlane.xlu0 %1277
  %v1279 = vsub.f32 %v1271, %v1275
  %v1280 = vsub.f32 %v1272, %v1278
  %v1281 = vmul.f32 %v1279, 1.442695
  %v1282 = vpow.pop %v1281
  %v1283 = vmul.f32 %v1280, 1.442695
  %v1284 = vpow.pop %v1283
  %v1285 = vsel %vm227, %v1282, 0.0
  %1286 = vadd.xlane.f32.xlu0 %v1285
  %v1287 = vpop.xlane.xlu0 %1286
  %v1288 = vsel %vm227, %v1284, 0.0
  %1289 = vadd.xlane.f32.xlu0 %v1288
  %v1290 = vpop.xlane.xlu0 %1289
  %v1291 = vrcp.pop %v1287
  %v1292 = vmul.f32 %v1287, %v1291
  %v1293 = vsub.f32 1.0, %v1292
  %v1294 = vmul.f32 %v1291, %v1293
  %v1295 = vadd.f32 %v1291, %v1294
  %vm1296 = vweird.f32 %v1287
  %vm1297 = vweird.f32 %v1291
  %vm1298 = vmor %vm1296, %vm1297
  %v1299 = vsel %vm1298, %v1291, %v1295
  %v1300 = vand.u32 2147483647, %v1287
  %vm1301 = vcmp.eq.f32.partialorder %v1300, 8.507059e+37
  %v1302 = vand.u32 %v1287, 2147483648
  %v1303 = vor.u32 1.1754944e-38, %v1302
  %v1304 = vsel %vm1301, %v1303, %v1299
  %v1305 = vmul.f32 %v1282, %v1304
  %v1306 = vrcp.pop %v1290
  %v1307 = vmul.f32 %v1290, %v1306
  %v1308 = vsub.f32 1.0, %v1307
  %v1309 = vmul.f32 %v1306, %v1308
  %v1310 = vadd.f32 %v1306, %v1309
  %vm1311 = vweird.f32 %v1290
  %vm1312 = vweird.f32 %v1306
  %vm1313 = vmor %vm1311, %vm1312
  %v1314 = vsel %vm1313, %v1306, %v1310
  %v1315 = vand.u32 2147483647, %v1290
  %vm1316 = vcmp.eq.f32.partialorder %v1315, 8.507059e+37
  %v1317 = vand.u32 %v1290, 2147483648
  %v1318 = vor.u32 1.1754944e-38, %v1317
  %v1319 = vsel %vm1316, %v1318, %v1314
  %v1320 = vmul.f32 %v1284, %v1319
  %v1321 = vpack.c.bf16 %v1320, %v1305
  %v1323 = vsel %vm227, %v1321, 0
  %1325 = vmatpush.bf16.msra.mxu0 0
  %1326 = vmatpush.bf16.msra.mxu0 0
  %1327 = vmatpush.bf16.msra.mxu0 0
  %1328 = vmatpush.bf16.msra.mxu0 0
  %1329 = vmatpush.bf16.msra.mxu0 0
  %1330 = vmatpush.bf16.msra.mxu0 0
  %1331 = vmatpush.bf16.msra.mxu0 0
  %1332 = vmatpush.bf16.msra.mxu0 %v1223
  %1333 = vmatmul.bf16.gmra.mxu0 %v1323
  %v1334 = vpop.f32.mrf.mxu0
  %v1335 = vadd.f32 0.0, %v1334
  %v1336 = vpop.f32.mrf.mxu0
  %v1337 = vadd.f32 0.0, %v1336
  %1338 = vdwg.mxu0
  %1341 = vrot.lane.b32.xlu0 %v1335, 16
  %v1342 = vpop.permute.xlu0 %1341
  %1343 = vrot.lane.b32.xlu0 %v1337, 16
  %v1344 = vpop.permute.xlu0 %1343
  %1347 = vst.msk [vmem:[#allocation2] sm:$0xff] %vm439, %v1342
  %1348 = vst.msk [vmem:[#allocation2 + $0x8] sm:$0xff] %vm439, %v1344
  %1349 = vrot.lane.b32.xlu0 %v1139, 96
  %v1350 = vpop.permute.xlu0 %1349
  %1351 = vrot.lane.b32.xlu0 %v1139, 48
  %v1352 = vpop.permute.xlu0 %1351
  %v1354 = vsel %vm227, %v1350, 0
  %v1357 = vsel %vm227, %v1352, 0
  %1359 = vmatpush.bf16.xpose.msra.mxu0 0
  %1360 = vmatpush.bf16.xpose.msra.mxu0 0
  %1361 = vmatpush.bf16.xpose.msra.mxu0 0
  %1362 = vmatpush.bf16.xpose.msra.mxu0 0
  %1363 = vmatpush.bf16.xpose.msra.mxu0 0
  %1364 = vmatpush.bf16.xpose.msra.mxu0 0
  %1365 = vmatpush.bf16.xpose.msra.mxu0 0
  %1366 = vmatpush.bf16.xpose.msra.mxu0 %v1357
  %1367 = vmatmul.bf16.gmra.mxu0 %v1354
  %v1368 = vpop.f32.mrf.mxu0
  %v1369 = vadd.f32 0.0, %v1368
  %v1370 = vpop.f32.mrf.mxu0
  %v1371 = vadd.f32 0.0, %v1370
  %1372 = vdwg.mxu0
  %v1373 = vmul.f32 %v1369, 0.25
  %v1374 = vmul.f32 %v1371, 0.25
  %v1375 = vmul.f32 %v1373, %v256
  %v1376 = vmul.f32 %v1374, %v256
  %v1377 = vtanh.pop %v1375
  %v1378 = vtanh.pop %v1376
  %v1379 = vmul.f32 %v1377, 50.0
  %v1380 = vmul.f32 %v1378, 50.0
  %v1381 = vadd.f32 %v1379, %v82
  %v1382 = vadd.f32 %v1380, %v83
  %v1383 = vsel %vm227, %v1381, -inf
  %1384 = vmax.xlane.f32.xlu0 %v1383
  %v1385 = vpop.xlane.xlu0 %1384
  %v1386 = vsel %vm227, %v1382, -inf
  %1387 = vmax.xlane.f32.xlu0 %v1386
  %v1388 = vpop.xlane.xlu0 %1387
  %v1389 = vsub.f32 %v1381, %v1385
  %v1390 = vsub.f32 %v1382, %v1388
  %v1391 = vmul.f32 %v1389, 1.442695
  %v1392 = vpow.pop %v1391
  %v1393 = vmul.f32 %v1390, 1.442695
  %v1394 = vpow.pop %v1393
  %v1395 = vsel %vm227, %v1392, 0.0
  %1396 = vadd.xlane.f32.xlu0 %v1395
  %v1397 = vpop.xlane.xlu0 %1396
  %v1398 = vsel %vm227, %v1394, 0.0
  %1399 = vadd.xlane.f32.xlu0 %v1398
  %v1400 = vpop.xlane.xlu0 %1399
  %v1401 = vrcp.pop %v1397
  %v1402 = vmul.f32 %v1397, %v1401
  %v1403 = vsub.f32 1.0, %v1402
  %v1404 = vmul.f32 %v1401, %v1403
  %v1405 = vadd.f32 %v1401, %v1404
  %vm1406 = vweird.f32 %v1397
  %vm1407 = vweird.f32 %v1401
  %vm1408 = vmor %vm1406, %vm1407
  %v1409 = vsel %vm1408, %v1401, %v1405
  %v1410 = vand.u32 2147483647, %v1397
  %vm1411 = vcmp.eq.f32.partialorder %v1410, 8.507059e+37
  %v1412 = vand.u32 %v1397, 2147483648
  %v1413 = vor.u32 1.1754944e-38, %v1412
  %v1414 = vsel %vm1411, %v1413, %v1409
  %v1415 = vmul.f32 %v1392, %v1414
  %v1416 = vrcp.pop %v1400
  %v1417 = vmul.f32 %v1400, %v1416
  %v1418 = vsub.f32 1.0, %v1417
  %v1419 = vmul.f32 %v1416, %v1418
  %v1420 = vadd.f32 %v1416, %v1419
  %vm1421 = vweird.f32 %v1400
  %vm1422 = vweird.f32 %v1416
  %vm1423 = vmor %vm1421, %vm1422
  %v1424 = vsel %vm1423, %v1416, %v1420
  %v1425 = vand.u32 2147483647, %v1400
  %vm1426 = vcmp.eq.f32.partialorder %v1425, 8.507059e+37
  %v1427 = vand.u32 %v1400, 2147483648
  %v1428 = vor.u32 1.1754944e-38, %v1427
  %v1429 = vsel %vm1426, %v1428, %v1424
  %v1430 = vmul.f32 %v1394, %v1429
  %v1431 = vpack.c.bf16 %v1430, %v1415
  %1432 = vrot.lane.b32.xlu0 %v1139, 16
  %v1433 = vpop.permute.xlu0 %1432
  %v1436 = vsel %vm227, %v1431, 0
  %1438 = vmatpush.bf16.msra.mxu0 0
  %1439 = vmatpush.bf16.msra.mxu0 0
  %1440 = vmatpush.bf16.msra.mxu0 0
  %1441 = vmatpush.bf16.msra.mxu0 0
  %1442 = vmatpush.bf16.msra.mxu0 0
  %1443 = vmatpush.bf16.msra.mxu0 0
  %1444 = vmatpush.bf16.msra.mxu0 0
  %1445 = vmatpush.bf16.msra.mxu0 %v1433
  %1446 = vmatmul.bf16.gmra.mxu0 %v1436
  %v1447 = vpop.f32.mrf.mxu0
  %v1448 = vadd.f32 0.0, %v1447
  %v1449 = vpop.f32.mrf.mxu0
  %v1450 = vadd.f32 0.0, %v1449
  %1451 = vdwg.mxu0
  %1454 = vrot.lane.b32.xlu0 %v1448, 32
  %v1455 = vpop.permute.xlu0 %1454
  %1456 = vrot.lane.b32.xlu0 %v1450, 32
  %v1457 = vpop.permute.xlu0 %1456
  %1460 = vst.msk [vmem:[#allocation2] sm:$0xff] %vm553, %v1455
  %1461 = vst.msk [vmem:[#allocation2 + $0x8] sm:$0xff] %vm553, %v1457
  %1462 = vrot.lane.b32.xlu0 %v1139, 80
  %v1463 = vpop.permute.xlu0 %1462
  %v1465 = vsel %vm227, %v1463, 0
  %1467 = vmatpush.bf16.xpose.msra.mxu0 0
  %1468 = vmatpush.bf16.xpose.msra.mxu0 0
  %1469 = vmatpush.bf16.xpose.msra.mxu0 0
  %1470 = vmatpush.bf16.xpose.msra.mxu0 0
  %1471 = vmatpush.bf16.xpose.msra.mxu0 0
  %1472 = vmatpush.bf16.xpose.msra.mxu0 0
  %1473 = vmatpush.bf16.xpose.msra.mxu0 0
  %1474 = vmatpush.bf16.xpose.msra.mxu0 %v1357
  %1475 = vmatmul.bf16.gmra.mxu0 %v1465
  %v1476 = vpop.f32.mrf.mxu0
  %v1477 = vadd.f32 0.0, %v1476
  %v1478 = vpop.f32.mrf.mxu0
  %v1479 = vadd.f32 0.0, %v1478
  %1480 = vdwg.mxu0
  %v1481 = vmul.f32 %v1477, 0.25
  %v1482 = vmul.f32 %v1479, 0.25
  %v1483 = vmul.f32 %v1481, %v256
  %v1484 = vmul.f32 %v1482, %v256
  %v1485 = vtanh.pop %v1483
  %v1486 = vtanh.pop %v1484
  %v1487 = vmul.f32 %v1485, 50.0
  %v1488 = vmul.f32 %v1486, 50.0
  %v1489 = vadd.f32 %v1487, %v82
  %v1490 = vadd.f32 %v1488, %v83
  %v1491 = vsel %vm227, %v1489, -inf
  %1492 = vmax.xlane.f32.xlu0 %v1491
  %v1493 = vpop.xlane.xlu0 %1492
  %v1494 = vsel %vm227, %v1490, -inf
  %1495 = vmax.xlane.f32.xlu0 %v1494
  %v1496 = vpop.xlane.xlu0 %1495
  %v1497 = vsub.f32 %v1489, %v1493
  %v1498 = vsub.f32 %v1490, %v1496
  %v1499 = vmul.f32 %v1497, 1.442695
  %v1500 = vpow.pop %v1499
  %v1501 = vmul.f32 %v1498, 1.442695
  %v1502 = vpow.pop %v1501
  %v1503 = vsel %vm227, %v1500, 0.0
  %1504 = vadd.xlane.f32.xlu0 %v1503
  %v1505 = vpop.xlane.xlu0 %1504
  %v1506 = vsel %vm227, %v1502, 0.0
  %1507 = vadd.xlane.f32.xlu0 %v1506
  %v1508 = vpop.xlane.xlu0 %1507
  %v1509 = vrcp.pop %v1505
  %v1510 = vmul.f32 %v1505, %v1509
  %v1511 = vsub.f32 1.0, %v1510
  %v1512 = vmul.f32 %v1509, %v1511
  %v1513 = vadd.f32 %v1509, %v1512
  %vm1514 = vweird.f32 %v1505
  %vm1515 = vweird.f32 %v1509
  %vm1516 = vmor %vm1514, %vm1515
  %v1517 = vsel %vm1516, %v1509, %v1513
  %v1518 = vand.u32 2147483647, %v1505
  %vm1519 = vcmp.eq.f32.partialorder %v1518, 8.507059e+37
  %v1520 = vand.u32 %v1505, 2147483648
  %v1521 = vor.u32 1.1754944e-38, %v1520
  %v1522 = vsel %vm1519, %v1521, %v1517
  %v1523 = vmul.f32 %v1500, %v1522
  %v1524 = vrcp.pop %v1508
  %v1525 = vmul.f32 %v1508, %v1524
  %v1526 = vsub.f32 1.0, %v1525
  %v1527 = vmul.f32 %v1524, %v1526
  %v1528 = vadd.f32 %v1524, %v1527
  %vm1529 = vweird.f32 %v1508
  %vm1530 = vweird.f32 %v1524
  %vm1531 = vmor %vm1529, %vm1530
  %v1532 = vsel %vm1531, %v1524, %v1528
  %v1533 = vand.u32 2147483647, %v1508
  %vm1534 = vcmp.eq.f32.partialorder %v1533, 8.507059e+37
  %v1535 = vand.u32 %v1508, 2147483648
  %v1536 = vor.u32 1.1754944e-38, %v1535
  %v1537 = vsel %vm1534, %v1536, %v1532
  %v1538 = vmul.f32 %v1502, %v1537
  %v1539 = vpack.c.bf16 %v1538, %v1523
  %v1541 = vsel %vm227, %v1539, 0
  %1543 = vmatpush.bf16.msra.mxu0 0
  %1544 = vmatpush.bf16.msra.mxu0 0
  %1545 = vmatpush.bf16.msra.mxu0 0
  %1546 = vmatpush.bf16.msra.mxu0 0
  %1547 = vmatpush.bf16.msra.mxu0 0
  %1548 = vmatpush.bf16.msra.mxu0 0
  %1549 = vmatpush.bf16.msra.mxu0 0
  %1550 = vmatpush.bf16.msra.mxu0 %v1433
  %1551 = vmatmul.bf16.gmra.mxu0 %v1541
  %v1552 = vpop.f32.mrf.mxu0
  %v1553 = vadd.f32 0.0, %v1552
  %v1554 = vpop.f32.mrf.mxu0
  %v1555 = vadd.f32 0.0, %v1554
  %1556 = vdwg.mxu0
  %1559 = vrot.lane.b32.xlu0 %v1553, 48
  %v1560 = vpop.permute.xlu0 %1559
  %1561 = vrot.lane.b32.xlu0 %v1555, 48
  %v1562 = vpop.permute.xlu0 %1561
  %1565 = vst.msk [vmem:[#allocation2] sm:$0xff] %vm659, %v1560
  %1566 = vst.msk [vmem:[#allocation2 + $0x8] sm:$0xff] %vm659, %v1562
  %v1567 = vld [vmem:[#allocation2] sm:$0xff]
  %v1568 = vld [vmem:[#allocation2 + $0x8] sm:$0xff]
  %v1569 = vpack.c.bf16 %v1568, %v1567
  %v1570 = vld [vmem:[%s10] sm:$0xf]
  %v1571 = vld [vmem:[%s10 + $0x4] sm:$0xf]
  %v1572 = vld [vmem:[%s10 + $0x8] sm:$0xf]
  %v1573 = vld [vmem:[%s10 + $0xc] sm:$0xf]
  %v1574 = vld [vmem:[%s10 + $0x10] sm:$0xf]
  %v1575 = vld [vmem:[%s10 + $0x14] sm:$0xf]
  %v1576 = vld [vmem:[%s10 + $0x18] sm:$0xf]
  %v1577 = vld [vmem:[%s10 + $0x1c] sm:$0xf]
  %v1586 = vunpack.c.l.b16 %v1570
  %v1587 = vunpack.c.l.b16 %v1571
  %v1588 = vunpack.c.l.b16 %v1572
  %v1589 = vunpack.c.l.b16 %v1573
  %v1590 = vunpack.c.l.b16 %v1574
  %v1591 = vunpack.c.l.b16 %v1575
  %v1592 = vunpack.c.l.b16 %v1576
  %v1593 = vunpack.c.l.b16 %v1577
  %v1594 = vpack.c.b16 %v1587, %v1586
  %v1595 = vpack.c.b16 %v1589, %v1588
  %v1596 = vpack.c.b16 %v1591, %v1590
  %v1597 = vpack.c.b16 %v1593, %v1592
  %v1603 = vsel %vm93, %v1569, 0
  %1605 = vmatpush.bf16.msra.mxu0 0
  %1606 = vmatpush.bf16.msra.mxu0 0
  %1607 = vmatpush.bf16.msra.mxu0 0
  %1608 = vmatpush.bf16.msra.mxu0 0
  %1609 = vmatpush.bf16.msra.mxu0 %v1597
  %1610 = vmatpush.bf16.msra.mxu0 %v1596
  %1611 = vmatpush.bf16.msra.mxu0 %v1595
  %1612 = vmatpush.bf16.msra.mxu0 %v1594
  %1613 = vmatmul.bf16.gmra.mxu0 %v1603
  %v1614 = vpop.f32.mrf.mxu0
  %v1615 = vadd.f32 0.0, %v1614
  %v1616 = vpop.f32.mrf.mxu0
  %v1617 = vadd.f32 0.0, %v1616
  %1618 = vdwg.mxu0
  %v1619 = vld [vmem:[%s8 + $0x1] sm:$0x1]
  %v1620 = vmul.f32 %v1615, %v1615
  %v1621 = vmul.f32 %v1617, %v1617
  %v1622 = vsel %vm93, %v1620, 0.0
  %1623 = vadd.xlane.f32.xlu0 %v1622
  %v1624 = vpop.xlane.xlu0 %1623
  %v1625 = vsel %vm93, %v1621, 0.0
  %1626 = vadd.xlane.f32.xlu0 %v1625
  %v1627 = vpop.xlane.xlu0 %1626
  %v1628 = vmul.f32 %v1624, %v106
  %v1629 = vmul.f32 %v1627, %v106
  %v1630 = vadd.f32 %v1628, 1e-06
  %v1631 = vadd.f32 %v1629, 1e-06
  %v1632 = vrsqrt.pop %v1630
  %v1633 = vmul.f32 %v1632, %v1630
  %v1634 = vmul.f32 %v1633, %v1632
  %v1635 = vmul.f32 0.5, %v1634
  %v1636 = vsub.f32 1.5, %v1635
  %v1637 = vmul.f32 %v1632, %v1636
  %vm1638 = vweird.f32 %v1630
  %vm1639 = vweird.f32 %v1632
  %vm1640 = vmor %vm1638, %vm1639
  %v1641 = vsel %vm1640, %v1632, %v1637
  %v1642 = vrsqrt.pop %v1631
  %v1643 = vmul.f32 %v1642, %v1631
  %v1644 = vmul.f32 %v1643, %v1642
  %v1645 = vmul.f32 0.5, %v1644
  %v1646 = vsub.f32 1.5, %v1645
  %v1647 = vmul.f32 %v1642, %v1646
  %vm1648 = vweird.f32 %v1631
  %vm1649 = vweird.f32 %v1642
  %vm1650 = vmor %vm1648, %vm1649
  %v1651 = vsel %vm1650, %v1642, %v1647
  %v1652 = vmul.f32 %v1615, %v1641
  %v1653 = vmul.f32 %v1617, %v1651
  %v1654 = vadd.f32 %v1619, 1.0
  %v1655 = vperm.slane %v1654, 0
  %v1656 = vmul.f32 %v1652, %v1655
  %v1657 = vmul.f32 %v1653, %v1655
  %v1658 = vadd.f32 %v1012, %v1656
  %v1659 = vadd.f32 %v1013, %v1657
  %v1660 = vld [vmem:[%s8 + $0x2] sm:$0x1]
  %v1661 = vmul.f32 %v1658, %v1658
  %v1662 = vmul.f32 %v1659, %v1659
  %v1663 = vsel %vm93, %v1661, 0.0
  %1664 = vadd.xlane.f32.xlu0 %v1663
  %v1665 = vpop.xlane.xlu0 %1664
  %v1666 = vsel %vm93, %v1662, 0.0
  %1667 = vadd.xlane.f32.xlu0 %v1666
  %v1668 = vpop.xlane.xlu0 %1667
  %v1669 = vmul.f32 %v1665, %v106
  %v1670 = vmul.f32 %v1668, %v106
  %v1671 = vadd.f32 %v1669, 1e-06
  %v1672 = vadd.f32 %v1670, 1e-06
  %v1673 = vrsqrt.pop %v1671
  %v1674 = vmul.f32 %v1673, %v1671
  %v1675 = vmul.f32 %v1674, %v1673
  %v1676 = vmul.f32 0.5, %v1675
  %v1677 = vsub.f32 1.5, %v1676
  %v1678 = vmul.f32 %v1673, %v1677
  %vm1679 = vweird.f32 %v1671
  %vm1680 = vweird.f32 %v1673
  %vm1681 = vmor %vm1679, %vm1680
  %v1682 = vsel %vm1681, %v1673, %v1678
  %v1683 = vrsqrt.pop %v1672
  %v1684 = vmul.f32 %v1683, %v1672
  %v1685 = vmul.f32 %v1684, %v1683
  %v1686 = vmul.f32 0.5, %v1685
  %v1687 = vsub.f32 1.5, %v1686
  %v1688 = vmul.f32 %v1683, %v1687
  %vm1689 = vweird.f32 %v1672
  %vm1690 = vweird.f32 %v1683
  %vm1691 = vmor %vm1689, %vm1690
  %v1692 = vsel %vm1691, %v1683, %v1688
  %v1693 = vmul.f32 %v1658, %v1682
  %v1694 = vmul.f32 %v1659, %v1692
  %v1695 = vadd.f32 %v1660, 1.0
  %v1696 = vperm.slane %v1695, 0
  %v1697 = vmul.f32 %v1693, %v1696
  %v1698 = vmul.f32 %v1694, %v1696
  %v1699 = vpack.c.bf16 %v1698, %v1697
  %v1700 = vld [vmem:[%s11] sm:$0xff]
  %v1701 = vld [vmem:[%s11 + $0x8] sm:$0xff]
  %v1702 = vld [vmem:[%s11 + $0x10] sm:$0xff]
  %v1703 = vld [vmem:[%s11 + $0x18] sm:$0xff]
  %v1704 = vld [vmem:[%s11 + $0x20] sm:$0xff]
  %v1705 = vld [vmem:[%s11 + $0x28] sm:$0xff]
  %v1706 = vld [vmem:[%s11 + $0x30] sm:$0xff]
  %v1707 = vld [vmem:[%s11 + $0x38] sm:$0xff]
  %v1716 = vunpack.c.l.b16 %v1700
  %v1717 = vunpack.c.h.b16 %v1700
  %v1718 = vunpack.c.l.b16 %v1701
  %v1719 = vunpack.c.h.b16 %v1701
  %v1720 = vunpack.c.l.b16 %v1702
  %v1721 = vunpack.c.h.b16 %v1702
  %v1722 = vunpack.c.l.b16 %v1703
  %v1723 = vunpack.c.h.b16 %v1703
  %v1724 = vunpack.c.l.b16 %v1704
  %v1725 = vunpack.c.h.b16 %v1704
  %v1726 = vunpack.c.l.b16 %v1705
  %v1727 = vunpack.c.h.b16 %v1705
  %v1728 = vunpack.c.l.b16 %v1706
  %v1729 = vunpack.c.h.b16 %v1706
  %v1730 = vunpack.c.l.b16 %v1707
  %v1731 = vunpack.c.h.b16 %v1707
  %v1732 = vpack.c.b16 %v1718, %v1716
  %v1733 = vpack.c.b16 %v1719, %v1717
  %v1734 = vpack.c.b16 %v1722, %v1720
  %v1735 = vpack.c.b16 %v1723, %v1721
  %v1736 = vpack.c.b16 %v1726, %v1724
  %v1737 = vpack.c.b16 %v1727, %v1725
  %v1738 = vpack.c.b16 %v1730, %v1728
  %v1739 = vpack.c.b16 %v1731, %v1729
  %v1749 = vsel %vm93, %v1699, 0
  %1751 = vmatpush.bf16.msra.mxu0 0
  %1752 = vmatpush.bf16.msra.mxu0 0
  %1753 = vmatpush.bf16.msra.mxu0 0
  %1754 = vmatpush.bf16.msra.mxu0 0
  %1755 = vmatpush.bf16.msra.mxu0 %v1738
  %1756 = vmatpush.bf16.msra.mxu0 %v1736
  %1757 = vmatpush.bf16.msra.mxu0 %v1734
  %1758 = vmatpush.bf16.msra.mxu0 %v1732
  %1759 = vmatmul.bf16.gmra.mxu0 %v1749
  %v1760 = vpop.f32.mrf.mxu0
  %v1761 = vadd.f32 0.0, %v1760
  %v1762 = vpop.f32.mrf.mxu0
  %v1763 = vadd.f32 0.0, %v1762
  %1764 = vdwg.mxu0
  %1765 = vmatpush.bf16.msra.mxu0 0
  %1766 = vmatpush.bf16.msra.mxu0 0
  %1767 = vmatpush.bf16.msra.mxu0 0
  %1768 = vmatpush.bf16.msra.mxu0 0
  %1769 = vmatpush.bf16.msra.mxu0 %v1739
  %1770 = vmatpush.bf16.msra.mxu0 %v1737
  %1771 = vmatpush.bf16.msra.mxu0 %v1735
  %1772 = vmatpush.bf16.msra.mxu0 %v1733
  %1773 = vmatmul.bf16.gmra.mxu0 %v1749
  %v1774 = vpop.f32.mrf.mxu0
  %v1775 = vadd.f32 0.0, %v1774
  %v1776 = vpop.f32.mrf.mxu0
  %v1777 = vadd.f32 0.0, %v1776
  %1778 = vdwg.mxu0
  %v1779 = vmul.f32 %v1761, %v1761
  %v1780 = vmul.f32 %v1763, %v1763
  %v1781 = vmul.f32 %v1761, %v1779
  %v1782 = vmul.f32 %v1763, %v1780
  %v1783 = vmul.f32 %v1781, 0.044715
  %v1784 = vmul.f32 %v1782, 0.044715
  %v1785 = vadd.f32 %v1761, %v1783
  %v1786 = vadd.f32 %v1763, %v1784
  %v1787 = vmul.f32 %v1785, 0.7978846
  %v1788 = vmul.f32 %v1786, 0.7978846
  %v1789 = vtanh.pop %v1787
  %v1790 = vtanh.pop %v1788
  %v1791 = vadd.f32 %v1789, 1.0
  %v1792 = vadd.f32 %v1790, 1.0
  %v1793 = vmul.f32 %v1791, 0.5
  %v1794 = vmul.f32 %v1792, 0.5
  %v1795 = vmul.f32 %v1761, %v1793
  %v1796 = vmul.f32 %v1763, %v1794
  %v1797 = vmul.f32 %v1795, %v1775
  %v1798 = vmul.f32 %v1796, %v1777
  %v1799 = vpack.c.bf16 %v1798, %v1797
  %v1800 = vld [vmem:[%s12] sm:$0xf]
  %v1801 = vld [vmem:[%s12 + $0x4] sm:$0xf]
  %v1802 = vld [vmem:[%s12 + $0x8] sm:$0xf]
  %v1803 = vld [vmem:[%s12 + $0xc] sm:$0xf]
  %v1804 = vld [vmem:[%s12 + $0x10] sm:$0xf]
  %v1805 = vld [vmem:[%s12 + $0x14] sm:$0xf]
  %v1806 = vld [vmem:[%s12 + $0x18] sm:$0xf]
  %v1807 = vld [vmem:[%s12 + $0x1c] sm:$0xf]
  %v1808 = vld [vmem:[%s12 + $0x20] sm:$0xf]
  %v1809 = vld [vmem:[%s12 + $0x24] sm:$0xf]
  %v1810 = vld [vmem:[%s12 + $0x28] sm:$0xf]
  %v1811 = vld [vmem:[%s12 + $0x2c] sm:$0xf]
  %v1812 = vld [vmem:[%s12 + $0x30] sm:$0xf]
  %v1813 = vld [vmem:[%s12 + $0x34] sm:$0xf]
  %v1814 = vld [vmem:[%s12 + $0x38] sm:$0xf]
  %v1815 = vld [vmem:[%s12 + $0x3c] sm:$0xf]
  %v1832 = vunpack.c.l.b16 %v1800
  %v1833 = vunpack.c.l.b16 %v1801
  %v1834 = vunpack.c.l.b16 %v1802
  %v1835 = vunpack.c.l.b16 %v1803
  %v1836 = vunpack.c.l.b16 %v1804
  %v1837 = vunpack.c.l.b16 %v1805
  %v1838 = vunpack.c.l.b16 %v1806
  %v1839 = vunpack.c.l.b16 %v1807
  %v1840 = vunpack.c.l.b16 %v1808
  %v1841 = vunpack.c.l.b16 %v1809
  %v1842 = vunpack.c.l.b16 %v1810
  %v1843 = vunpack.c.l.b16 %v1811
  %v1844 = vunpack.c.l.b16 %v1812
  %v1845 = vunpack.c.l.b16 %v1813
  %v1846 = vunpack.c.l.b16 %v1814
  %v1847 = vunpack.c.l.b16 %v1815
  %v1848 = vpack.c.b16 %v1833, %v1832
  %v1849 = vpack.c.b16 %v1835, %v1834
  %v1850 = vpack.c.b16 %v1837, %v1836
  %v1851 = vpack.c.b16 %v1839, %v1838
  %v1852 = vpack.c.b16 %v1841, %v1840
  %v1853 = vpack.c.b16 %v1843, %v1842
  %v1854 = vpack.c.b16 %v1845, %v1844
  %v1855 = vpack.c.b16 %v1847, %v1846
  %1864 = vmatpush.bf16.msra.mxu0 %v1855
  %1865 = vmatpush.bf16.msra.mxu0 %v1854
  %1866 = vmatpush.bf16.msra.mxu0 %v1853
  %1867 = vmatpush.bf16.msra.mxu0 %v1852
  %1868 = vmatpush.bf16.msra.mxu0 %v1851
  %1869 = vmatpush.bf16.msra.mxu0 %v1850
  %1870 = vmatpush.bf16.msra.mxu0 %v1849
  %1871 = vmatpush.bf16.msra.mxu0 %v1848
  %1872 = vmatmul.bf16.gmra.mxu0 %v1799
  %v1873 = vpop.f32.mrf.mxu0
  %v1874 = vadd.f32 0.0, %v1873
  %v1875 = vpop.f32.mrf.mxu0
  %v1876 = vadd.f32 0.0, %v1875
  %1877 = vdwg.mxu0
  %v1878 = vld [vmem:[%s8 + $0x3] sm:$0x1]
  %v1879 = vmul.f32 %v1874, %v1874
  %v1880 = vmul.f32 %v1876, %v1876
  %v1881 = vsel %vm93, %v1879, 0.0
  %1882 = vadd.xlane.f32.xlu0 %v1881
  %v1883 = vpop.xlane.xlu0 %1882
  %v1884 = vsel %vm93, %v1880, 0.0
  %1885 = vadd.xlane.f32.xlu0 %v1884
  %v1886 = vpop.xlane.xlu0 %1885
  %v1887 = vmul.f32 %v1883, %v106
  %v1888 = vmul.f32 %v1886, %v106
  %v1889 = vadd.f32 %v1887, 1e-06
  %v1890 = vadd.f32 %v1888, 1e-06
  %v1891 = vrsqrt.pop %v1889
  %v1892 = vmul.f32 %v1891, %v1889
  %v1893 = vmul.f32 %v1892, %v1891
  %v1894 = vmul.f32 0.5, %v1893
  %v1895 = vsub.f32 1.5, %v1894
  %v1896 = vmul.f32 %v1891, %v1895
  %vm1897 = vweird.f32 %v1889
  %vm1898 = vweird.f32 %v1891
  %vm1899 = vmor %vm1897, %vm1898
  %v1900 = vsel %vm1899, %v1891, %v1896
  %v1901 = vrsqrt.pop %v1890
  %v1902 = vmul.f32 %v1901, %v1890
  %v1903 = vmul.f32 %v1902, %v1901
  %v1904 = vmul.f32 0.5, %v1903
  %v1905 = vsub.f32 1.5, %v1904
  %v1906 = vmul.f32 %v1901, %v1905
  %vm1907 = vweird.f32 %v1890
  %vm1908 = vweird.f32 %v1901
  %vm1909 = vmor %vm1907, %vm1908
  %v1910 = vsel %vm1909, %v1901, %v1906
  %v1911 = vmul.f32 %v1874, %v1900
  %v1912 = vmul.f32 %v1876, %v1910
  %v1913 = vadd.f32 %v1878, 1.0
  %v1914 = vperm.slane %v1913, 0
  %v1915 = vmul.f32 %v1911, %v1914
  %v1916 = vmul.f32 %v1912, %v1914
  %v1917 = vadd.f32 %v1658, %v1915
  %v1918 = vadd.f32 %v1659, %v1916
  %v1919 = vld [vmem:[%s13] sm:$0x1]
  %v1920 = vmul.f32 %v1917, %v1917
  %v1921 = vmul.f32 %v1918, %v1918
  %v1922 = vsel %vm93, %v1920, 0.0
  %1923 = vadd.xlane.f32.xlu0 %v1922
  %v1924 = vpop.xlane.xlu0 %1923
  %v1925 = vsel %vm93, %v1921, 0.0
  %1926 = vadd.xlane.f32.xlu0 %v1925
  %v1927 = vpop.xlane.xlu0 %1926
  %v1928 = vmul.f32 %v1924, %v106
  %v1929 = vmul.f32 %v1927, %v106
  %v1930 = vadd.f32 %v1928, 1e-06
  %v1931 = vadd.f32 %v1929, 1e-06
  %v1932 = vrsqrt.pop %v1930
  %v1933 = vmul.f32 %v1932, %v1930
  %v1934 = vmul.f32 %v1933, %v1932
  %v1935 = vmul.f32 0.5, %v1934
  %v1936 = vsub.f32 1.5, %v1935
  %v1937 = vmul.f32 %v1932, %v1936
  %vm1938 = vweird.f32 %v1930
  %vm1939 = vweird.f32 %v1932
  %vm1940 = vmor %vm1938, %vm1939
  %v1941 = vsel %vm1940, %v1932, %v1937
  %v1942 = vrsqrt.pop %v1931
  %v1943 = vmul.f32 %v1942, %v1931
  %v1944 = vmul.f32 %v1943, %v1942
  %v1945 = vmul.f32 0.5, %v1944
  %v1946 = vsub.f32 1.5, %v1945
  %v1947 = vmul.f32 %v1942, %v1946
  %vm1948 = vweird.f32 %v1931
  %vm1949 = vweird.f32 %v1942
  %vm1950 = vmor %vm1948, %vm1949
  %v1951 = vsel %vm1950, %v1942, %v1947
  %v1952 = vmul.f32 %v1917, %v1941
  %v1953 = vmul.f32 %v1918, %v1951
  %v1954 = vadd.f32 %v1919, 1.0
  %v1956 = vperm.slane %v1954, 0
  %v1958 = vmul.f32 %v1952, %v1956
  %v1959 = vmul.f32 %v1953, %v1956
  %v1960 = vpack.c.bf16 %v1958, %v1958
  %v1961 = vpack.c.bf16 %v1959, %v1959
  %vm1962 = vcmask 519168
  %1963 = vst.msk [vmem:[%s14] sm:$0xf] %vm1962, %v1960
  %1964 = vst.msk [vmem:[%s14 + $0x4] sm:$0xf] %vm1962, %v1961
  // Predicated region
  $region58: #{_lambda_.2} parent=0 // pred_check
    _
  $region59: #{_lambda_.2} parent=0 // pred_check_branch
    %1966 = sbr.rel (0) target = $region61
  $region60: #{_lambda_.2} parent=0 // pred_region
    _
  $region61: #{_lambda_.2} parent=0 // pred_fallthru
    _
  // Predicated region
  $region62: #{_lambda_.2} parent=0 // pred_check
    _
  $region63: #{_lambda_.2} parent=0 // pred_check_branch
    %1968 = sbr.rel (0) target = $region65
  $region64: #{_lambda_.2} parent=0 // pred_region
    _
  $region65: #{_lambda_.2} parent=0 // pred_fallthru
    _

</llo_original>
